<compile_context>
chip_gen: v5e
topology: v5e:2x2
jax: 0.10.0
libtpu: 0.0.40
codegen_flags: <defaults>
</compile_context>

<pallas_src>
import functools

import jax
import jax.numpy as jnp
from jax import lax
from jax.experimental import pallas as pl
from jax.experimental.pallas import tpu as pltpu

BN_EPS = 1e-5
LANE = 128                      # channel padding multiple (lane-dense layout)
COMPUTE_DTYPE = jnp.bfloat16    # MXU feed dtype and intermediate storage dtype
M_TILE_ROWS = 512               # target rows per MXU dot (amortizes RHS push)


def _round_up(x, m):
    return (x + m - 1) // m * m


def _vmem_limit_bytes():
    """~3/4 of physical VMEM: ~48 MiB on v7x, ~96 MiB on v5e/v6e."""
    try:
        cap = int(pltpu.get_tpu_info().vmem_capacity_bytes)
    except Exception:
        cap = 64 * 1024 * 1024
    return max(32 * 1024 * 1024, min(cap * 3 // 4, 96 * 1024 * 1024))


# ----------------------------------------------------------------------------
# Pallas kernel: fused conv3x3 + folded-BN shift + ReLU [+ residual + ReLU]
# ----------------------------------------------------------------------------
def _make_conv_kernel(stride, TH, WO, res_mode):
    """out = relu(conv3x3(x) + shift) [; + residual ; relu] on one row tile."""
    KS = 3
    TM = TH * WO

    def kernel(x_ref, w_ref, shift_ref, *rest):
        o_ref = rest[-1]
        cin = x_ref.shape[-1]
        acc = None
        # 9 accumulating MXU dots; every tap is a contiguous static H-slice of
        # a pre-shifted (H-phase, kw) view -> no strided VMEM copies.
        for kh in range(KS):
            for kw in range(KS):
                a = (kh % stride) * KS + kw          # pre-shifted tap view
                ih = kh // stride                    # contiguous H offset
                tap = x_ref[a, ih:ih + TH, :, :].reshape(TM, cin)
                d = jnp.dot(tap, w_ref[kh * KS + kw],
                            preferred_element_type=jnp.float32)
                acc = d if acc is None else acc + d  # init from first dot
        acc = jnp.maximum(acc + shift_ref[...], 0.0)             # BN + ReLU
        if res_mode == "tensor":
            # identity shortcut + final ReLU of the resnet block (f32 add)
            acc = jnp.maximum(acc + rest[0][...].astype(jnp.float32), 0.0)
        elif res_mode == "matmul":
            # downsample 1x1/stride-2 projection shortcut, computed in-kernel
            r = jnp.dot(rest[0][...], rest[1][...],
                        preferred_element_type=jnp.float32)
            acc = jnp.maximum(acc + r, 0.0)
        o_ref[...] = acc.astype(o_ref.dtype)

    return kernel


# ----------------------------------------------------------------------------
# Wrapper glue: pre-shifted (H-phase, kw) tap views + row-tiling with halos
# ----------------------------------------------------------------------------
def _make_tap_views(x, stride, HO, WO, mh):
    """(N,H,W,C) -> (N, 3*stride, HO+mh, WO, C).

    View index a = ph*3 + kw holds xp[:, hh*stride+ph, wo*stride+kw, :] so the
    in-kernel tap for (kh,kw) is the contiguous H-slice [kh//stride : +TH)."""
    N, H, W, C = x.shape
    hneed = stride * (HO + mh)
    wneed = stride * (WO - 1) + 3
    xp = jnp.pad(x, ((0, 0), (1, hneed - H - 1), (1, wneed - W - 1), (0, 0)))
    taps = []
    for ph in range(stride):
        for kw in range(3):
            taps.append(lax.slice(
                xp, (0, ph, kw, 0),
                (N, ph + stride * (HO + mh - 1) + 1,
                 kw + stride * (WO - 1) + 1, C),
                (1, stride, stride, 1)))
    return jnp.stack(taps, axis=1)


def _h_tile(xpw, TH, mh):
    """(N, TAPS, HO+mh, WO, C) -> (N*n_ht, TAPS, TH+mh, WO, C) with halo rows."""
    N, TAPS, Hh, WO, C = xpw.shape
    HO = Hh - mh
    n_ht = HO // TH
    if n_ht == 1:
        return xpw
    tiles = [lax.slice_in_dim(xpw, t * TH, t * TH + TH + mh, axis=2)
             for t in range(n_ht)]
    return jnp.stack(tiles, axis=1).reshape(N * n_ht, TAPS, TH + mh, WO, C)


def conv3x3_block(x, w_folded, shift, *, stride, residual=None, shortcut=None,
                  tco=None):
    """Fused 3x3 conv + folded-BN shift + ReLU (optionally fused residual).

    x:        (N, H, W, Cin_pad)  bf16, channel-padded NHWC activations.
    w_folded: (9, Cin_pad, Cout_pad) bf16 (BN scale folded in).
    shift:    (1, Cout_pad) f32.
    residual: optional (N, HO, WO, Cout_pad) bf16 identity shortcut.
    shortcut: optional (block_input_bf16, w_sc_bf16) for 1x1/stride-2 proj.
    returns   (N, HO, WO, Cout_pad) bf16.
    """
    assert residual is None or shortcut is None
    N, H, W, cin_pad = x.shape
    cout_pad = w_folded.shape[-1]
    if tco is None:
        # 256 matches the 2x256^2 MXU on v6e/v7x; 128 otherwise / on v5e it
        # still divides cleanly.  TODO(synk): prefer 128 on v5e.
        tco = 256 if cout_pad % 256 == 0 else 128
    n_co = cout_pad // tco

    HO = (H + 2 - 3) // stride + 1
    WO = (W + 2 - 3) // stride + 1
    mh = 2 // stride                       # halo rows per tap view
    TAPS = 3 * stride

    # Largest row tile that divides HO with TM = TH*WO <= M_TILE_ROWS.
    TH = 1
    for cand in range(1, HO + 1):
        if HO % cand == 0 and cand * WO <= M_TILE_ROWS:
            TH = cand
    TM = TH * WO
    TH_in = TH + mh
    n_ht = HO // TH
    n_b = N * n_ht

    xpw = _make_tap_views(x, stride, HO, WO, mh)     # (N, TAPS, HO+mh, WO, C)
    x_tiled = _h_tile(xpw, TH, mh)                   # (n_b, TAPS, TH_in, WO, C)

    # Grid-order heuristic: stream the bigger operand once.
    act_bytes = x_tiled.size * 2
    weight_bytes = w_folded.size * 2
    weight_major = weight_bytes * n_b > act_bytes * n_co
    if weight_major:
        grid = (n_co, n_b)
        def bsel(i, j): return j
        def csel(i, j): return i
        act_streams, w_streams = n_co, 1
    else:
        grid = (n_b, n_co)
        def bsel(i, j): return i
        def csel(i, j): return j
        act_streams, w_streams = 1, n_b

    args = [x_tiled, w_folded, shift]
    in_specs = [
        pl.BlockSpec((None, TAPS, TH_in, WO, cin_pad),
                     lambda i, j: (bsel(i, j), 0, 0, 0, 0)),
        pl.BlockSpec((9, cin_pad, tco), lambda i, j: (0, 0, csel(i, j))),
        pl.BlockSpec((1, tco), lambda i, j: (0, csel(i, j))),
    ]
    res_mode = "none"
    extra_flops = 0
    extra_bytes = 0

    if shortcut is not None:
        # Stride-2 sampling of the block input feeding the 1x1 projection dot.
        # TODO(synk): reuse the (ph=1,kw=1) tap view built for the block's
        #             stride-2 conv1 instead of re-slicing the block input.
        x_sc, w_sc = shortcut
        cin_sc = x_sc.shape[-1]
        x_ds = x_sc[:, ::2, ::2, :][:, :HO, :WO, :].astype(COMPUTE_DTYPE)
        x_ds = x_ds.reshape(n_b, TM, cin_sc)
        args += [x_ds, w_sc]
        in_specs += [
            pl.BlockSpec((None, TM, cin_sc), lambda i, j: (bsel(i, j), 0, 0)),
            pl.BlockSpec((cin_sc, tco), lambda i, j: (0, csel(i, j))),
        ]
        res_mode = "matmul"
        extra_flops = 2 * n_b * TM * cin_sc * cout_pad
        extra_bytes = x_ds.size * 2 * act_streams + w_sc.size * 2 * w_streams
    elif residual is not None:
        res = residual.astype(COMPUTE_DTYPE).reshape(n_b, TM, cout_pad)
        args.append(res)
        in_specs.append(pl.BlockSpec((None, TM, tco),
                                     lambda i, j: (bsel(i, j), 0, csel(i, j))))
        res_mode = "tensor"
        extra_bytes = res.size * 2

    kernel = _make_conv_kernel(stride, TH, WO, res_mode)

    flops = 2 * n_b * TM * 9 * cin_pad * cout_pad + extra_flops
    bytes_accessed = (act_bytes * act_streams + weight_bytes * w_streams
                      + shift.size * 4 + n_b * TM * cout_pad * 2 + extra_bytes)

    out = pl.pallas_call(
        kernel,
        grid=grid,
        in_specs=in_specs,
        out_specs=pl.BlockSpec((None, TM, tco),
                               lambda i, j: (bsel(i, j), 0, csel(i, j))),
        out_shape=jax.ShapeDtypeStruct((n_b, TM, cout_pad), COMPUTE_DTYPE),
        compiler_params=pltpu.CompilerParams(
            dimension_semantics=("parallel", "parallel"),
            vmem_limit_bytes=_vmem_limit_bytes()),
        cost_estimate=pl.CostEstimate(flops=flops, transcendentals=0,
                                      bytes_accessed=bytes_accessed),
    )(*args)
    return out.reshape(N, HO, WO, cout_pad)


# ----------------------------------------------------------------------------
# BN folding (eval mode) + weight layout conversion (PyTorch OIHW -> (9,I,O))
# ----------------------------------------------------------------------------
def _fold_convset(p, cin_pad, cout_pad):
    w = p["w"]                                   # (Cout, Cin, 3, 3) torch layout
    cout, cin = w.shape[0], w.shape[1]
    scale = p["gamma"] / jnp.sqrt(p["var"] + BN_EPS)
    shift = (p["bias"] - p["mean"]) * scale + p["beta"]
    w = jnp.transpose(w, (2, 3, 1, 0)).reshape(9, cin, cout) * scale[None, None, :]
    w = jnp.pad(w, ((0, 0), (0, cin_pad - cin), (0, cout_pad - cout)))
    shift = jnp.pad(shift, (0, cout_pad - cout)).reshape(1, cout_pad)
    return w.astype(COMPUTE_DTYPE), shift.astype(jnp.float32)


def block_forward(x, bp, downsample, cout_pad):
    cin_pad = x.shape[-1]
    w1, sh1 = _fold_convset(bp["conv1"], cin_pad, cout_pad)
    w2, sh2 = _fold_convset(bp["conv2"], cout_pad, cout_pad)
    if downsample:
        h1 = conv3x3_block(x, w1, sh1, stride=2)
        wsc = jnp.transpose(bp["w_sc"][:, :, 0, 0], (1, 0))        # (Cin, Cout)
        wsc = jnp.pad(wsc, ((0, cin_pad - wsc.shape[0]),
                            (0, cout_pad - wsc.shape[1]))).astype(COMPUTE_DTYPE)
        return conv3x3_block(h1, w2, sh2, stride=1, shortcut=(x, wsc))
    h1 = conv3x3_block(x, w1, sh1, stride=1)
    return conv3x3_block(h1, w2, sh2, stride=1, residual=x)


def resnet_layer_forward(x_nchw, params, downsample):
    in_channels = x_nchw.shape[1]
    out_channels = 2 * in_channels if downsample else in_channels
    cin_pad = _round_up(in_channels, LANE)
    cout_pad = _round_up(out_channels, LANE)

    x = jnp.transpose(x_nchw, (0, 2, 3, 1))                        # NCHW -> NHWC
    x = jnp.pad(x, ((0, 0), (0, 0), (0, 0), (0, cin_pad - in_channels)))
    x = x.astype(COMPUTE_DTYPE)                                    # bf16 chain
    for i, bp in enumerate(params["blocks"]):
        x = block_forward(x, bp, downsample and i == 0, cout_pad)
    out = jnp.transpose(x[..., :out_channels], (0, 3, 1, 2))       # NHWC -> NCHW
    return out.astype(jnp.float32)


# ----------------------------------------------------------------------------
# Deterministic parameter init (PyTorch-native layouts)
# ----------------------------------------------------------------------------
def init_convset(key, cin, cout, ksize):
    kw_, kb_, kg_, kbeta_, km_, kv_ = jax.random.split(key, 6)
    bound = 1.0 / jnp.sqrt(cin * ksize * ksize)
    return {
        "w": jax.random.uniform(kw_, (cout, cin, ksize, ksize),
                                jnp.float32, -bound, bound),       # OIHW
        "bias": jax.random.uniform(kb_, (cout,), jnp.float32, -bound, bound),
        "gamma": 1.0 + 0.1 * jax.random.normal(kg_, (cout,), jnp.float32),
        "beta": 0.1 * jax.random.normal(kbeta_, (cout,), jnp.float32),
        "mean": 0.1 * jax.random.normal(km_, (cout,), jnp.float32),
        "var": jax.random.uniform(kv_, (cout,), jnp.float32, 0.5, 1.5),
    }


def init_layer(key, in_channels, num_blocks, downsample):
    out_channels = 2 * in_channels if downsample else in_channels
    blocks = []
    for i in range(num_blocks):
        key, k1, k2, k3 = jax.random.split(key, 4)
        ds = downsample and i == 0
        cin = in_channels if i == 0 else out_channels
        bp = {"conv1": init_convset(k1, cin, out_channels, 3),
              "conv2": init_convset(k2, out_channels, out_channels, 3)}
        if ds:
            bound = 1.0 / jnp.sqrt(cin)
            bp["w_sc"] = jax.random.uniform(k3, (out_channels, cin, 1, 1),
                                            jnp.float32, -bound, bound)
        blocks.append(bp)
    return {"blocks": blocks}


# ----------------------------------------------------------------------------
# Pure-JAX reference (f32 lax.conv) for correctness check
# ----------------------------------------------------------------------------
def _ref_convset(x, p, stride):
    ksize = p["w"].shape[-1]
    w = jnp.transpose(p["w"], (2, 3, 1, 0))                        # HWIO
    pad = ksize // 2
    z = lax.conv_general_dilated(x, w, (stride, stride),
                                 ((pad, pad), (pad, pad)),
                                 dimension_numbers=("NHWC", "HWIO", "NHWC"))
    z = z + p["bias"]
    z = (z - p["mean"]) / jnp.sqrt(p["var"] + BN_EPS) * p["gamma"] + p["beta"]
    return jnp.maximum(z, 0.0)


def ref_forward(x_nchw, params, downsample):
    x = jnp.transpose(x_nchw, (0, 2, 3, 1))
    for i, bp in enumerate(params["blocks"]):
        ds = downsample and i == 0
        if ds:
            w_sc = jnp.transpose(bp["w_sc"], (2, 3, 1, 0))
            residual = lax.conv_general_dilated(
                x, w_sc, (2, 2), ((0, 0), (0, 0)),
                dimension_numbers=("NHWC", "HWIO", "NHWC"))
        else:
            residual = x
        h = _ref_convset(x, bp["conv1"], 2 if ds else 1)
        h = _ref_convset(h, bp["conv2"], 1)
        x = jnp.maximum(h + residual, 0.0)
    return jnp.transpose(x, (0, 3, 1, 2))


# ----------------------------------------------------------------------------
if __name__ == "__main__":
    in_channels, num_blocks, downsample = 4, 2, True
    key = jax.random.PRNGKey(0)
    kx, kp = jax.random.split(key)

    x = jax.random.normal(kx, (2, in_channels, 16, 16), jnp.float32)   # NCHW
    params = init_layer(kp, in_channels, num_blocks, downsample)

    fwd = jax.jit(functools.partial(resnet_layer_forward,
                                    downsample=downsample))
    out = jax.block_until_ready(fwd(x, params))

    ref = jax.block_until_ready(ref_forward(x, params, downsample))
    assert out.shape == (2, 2 * in_channels, 8, 8), out.shape
    max_err = float(jnp.max(jnp.abs(out - ref)))
    assert jnp.allclose(out, ref, atol=5e-2, rtol=5e-2), (
        f"mismatch vs reference (max abs err {max_err})")

    print("KERNEL_OK")
</pallas_src>

<mosaic_0001>
module attributes {stable_mosaic.version = 11 : i64} {
  func.func @kernel(%arg0: i32, %arg1: i32, %arg2: memref<1x6x9x8x128xbf16, #tpu.memory_space<vmem>>, %arg3: memref<9x128x128xbf16, #tpu.memory_space<vmem>>, %arg4: memref<1x128xf32, #tpu.memory_space<vmem>>, %arg5: memref<1x64x128xbf16, #tpu.memory_space<vmem>>) attributes {dimension_semantics = [#tpu.dimension_semantics<parallel>, #tpu.dimension_semantics<parallel>], iteration_bounds = array<i64: 1, 2>, scalar_prefetch = 0 : i64, scratch_operands = 0 : i64, tpu.core_type = #tpu.core_type<tc>, window_params = [{transform_indices = @transform_0, window_bounds = array<i64: 1, 6, 9, 8, 128>}, {transform_indices = @transform_1, window_bounds = array<i64: 9, 128, 128>}, {transform_indices = @transform_2, window_bounds = array<i64: 1, 128>}, {transform_indices = @transform_3, window_bounds = array<i64: 1, 64, 128>}]} {
    %c0 = arith.constant 0 : index
    %c0_0 = arith.constant 0 : index
    %c0_1 = arith.constant 0 : index
    %c0_2 = arith.constant 0 : index
    %c0_3 = arith.constant 0 : index
    %0 = vector.load %arg2[%c0, %c0_0, %c0_1, %c0_2, %c0_3] : memref<1x6x9x8x128xbf16, #tpu.memory_space<vmem>>, vector<1x1x8x8x128xbf16>
    %1 = vector.shape_cast %0 : vector<1x1x8x8x128xbf16> to vector<8x8x128xbf16>
    %2 = vector.shape_cast %1 : vector<8x8x128xbf16> to vector<64x128xbf16>
    %c0_4 = arith.constant 0 : index
    %c0_5 = arith.constant 0 : index
    %c0_6 = arith.constant 0 : index
    %3 = vector.load %arg3[%c0_4, %c0_5, %c0_6] : memref<9x128x128xbf16, #tpu.memory_space<vmem>>, vector<1x128x128xbf16>
    %4 = vector.shape_cast %3 : vector<1x128x128xbf16> to vector<128x128xbf16>
    %cst = arith.constant dense<0.000000e+00> : vector<64x128xf32>
    %5 = tpu.matmul %2, %4, %cst {dimension_numbers = #tpu.dot_dimension_numbers<[1], [0], [0], [1], [0, 0, 1, 1], [], []>} : vector<64x128xbf16>, vector<128x128xbf16>, vector<64x128xf32> -> vector<64x128xf32>
    %c0_7 = arith.constant 0 : index
    %c1 = arith.constant 1 : index
    %c0_8 = arith.constant 0 : index
    %c0_9 = arith.constant 0 : index
    %c0_10 = arith.constant 0 : index
    %6 = vector.load %arg2[%c0_7, %c1, %c0_8, %c0_9, %c0_10] : memref<1x6x9x8x128xbf16, #tpu.memory_space<vmem>>, vector<1x1x8x8x128xbf16>
    %7 = vector.shape_cast %6 : vector<1x1x8x8x128xbf16> to vector<8x8x128xbf16>
    %8 = vector.shape_cast %7 : vector<8x8x128xbf16> to vector<64x128xbf16>
    %c1_11 = arith.constant 1 : index
    %c0_12 = arith.constant 0 : index
    %c0_13 = arith.constant 0 : index
    %9 = vector.load %arg3[%c1_11, %c0_12, %c0_13] : memref<9x128x128xbf16, #tpu.memory_space<vmem>>, vector<1x128x128xbf16>
    %10 = vector.shape_cast %9 : vector<1x128x128xbf16> to vector<128x128xbf16>
    %cst_14 = arith.constant dense<0.000000e+00> : vector<64x128xf32>
    %11 = tpu.matmul %8, %10, %cst_14 {dimension_numbers = #tpu.dot_dimension_numbers<[1], [0], [0], [1], [0, 0, 1, 1], [], []>} : vector<64x128xbf16>, vector<128x128xbf16>, vector<64x128xf32> -> vector<64x128xf32>
    %12 = arith.addf %5, %11 : vector<64x128xf32>
    %c0_15 = arith.constant 0 : index
    %c2 = arith.constant 2 : index
    %c0_16 = arith.constant 0 : index
    %c0_17 = arith.constant 0 : index
    %c0_18 = arith.constant 0 : index
    %13 = vector.load %arg2[%c0_15, %c2, %c0_16, %c0_17, %c0_18] : memref<1x6x9x8x128xbf16, #tpu.memory_space<vmem>>, vector<1x1x8x8x128xbf16>
    %14 = vector.shape_cast %13 : vector<1x1x8x8x128xbf16> to vector<8x8x128xbf16>
    %15 = vector.shape_cast %14 : vector<8x8x128xbf16> to vector<64x128xbf16>
    %c2_19 = arith.constant 2 : index
    %c0_20 = arith.constant 0 : index
    %c0_21 = arith.constant 0 : index
    %16 = vector.load %arg3[%c2_19, %c0_20, %c0_21] : memref<9x128x128xbf16, #tpu.memory_space<vmem>>, vector<1x128x128xbf16>
    %17 = vector.shape_cast %16 : vector<1x128x128xbf16> to vector<128x128xbf16>
    %cst_22 = arith.constant dense<0.000000e+00> : vector<64x128xf32>
    %18 = tpu.matmul %15, %17, %cst_22 {dimension_numbers = #tpu.dot_dimension_numbers<[1], [0], [0], [1], [0, 0, 1, 1], [], []>} : vector<64x128xbf16>, vector<128x128xbf16>, vector<64x128xf32> -> vector<64x128xf32>
    %19 = arith.addf %12, %18 : vector<64x128xf32>
    %c0_23 = arith.constant 0 : index
    %c3 = arith.constant 3 : index
    %c0_24 = arith.constant 0 : index
    %c0_25 = arith.constant 0 : index
    %c0_26 = arith.constant 0 : index
    %20 = vector.load %arg2[%c0_23, %c3, %c0_24, %c0_25, %c0_26] : memref<1x6x9x8x128xbf16, #tpu.memory_space<vmem>>, vector<1x1x8x8x128xbf16>
    %21 = vector.shape_cast %20 : vector<1x1x8x8x128xbf16> to vector<8x8x128xbf16>
    %22 = vector.shape_cast %21 : vector<8x8x128xbf16> to vector<64x128xbf16>
    %c3_27 = arith.constant 3 : index
    %c0_28 = arith.constant 0 : index
    %c0_29 = arith.constant 0 : index
    %23 = vector.load %arg3[%c3_27, %c0_28, %c0_29] : memref<9x128x128xbf16, #tpu.memory_space<vmem>>, vector<1x128x128xbf16>
    %24 = vector.shape_cast %23 : vector<1x128x128xbf16> to vector<128x128xbf16>
    %cst_30 = arith.constant dense<0.000000e+00> : vector<64x128xf32>
    %25 = tpu.matmul %22, %24, %cst_30 {dimension_numbers = #tpu.dot_dimension_numbers<[1], [0], [0], [1], [0, 0, 1, 1], [], []>} : vector<64x128xbf16>, vector<128x128xbf16>, vector<64x128xf32> -> vector<64x128xf32>
    %26 = arith.addf %19, %25 : vector<64x128xf32>
    %c0_31 = arith.constant 0 : index
    %c4 = arith.constant 4 : index
    %c0_32 = arith.constant 0 : index
    %c0_33 = arith.constant 0 : index
    %c0_34 = arith.constant 0 : index
    %27 = vector.load %arg2[%c0_31, %c4, %c0_32, %c0_33, %c0_34] : memref<1x6x9x8x128xbf16, #tpu.memory_space<vmem>>, vector<1x1x8x8x128xbf16>
    %28 = vector.shape_cast %27 : vector<1x1x8x8x128xbf16> to vector<8x8x128xbf16>
    %29 = vector.shape_cast %28 : vector<8x8x128xbf16> to vector<64x128xbf16>
    %c4_35 = arith.constant 4 : index
    %c0_36 = arith.constant 0 : index
    %c0_37 = arith.constant 0 : index
    %30 = vector.load %arg3[%c4_35, %c0_36, %c0_37] : memref<9x128x128xbf16, #tpu.memory_space<vmem>>, vector<1x128x128xbf16>
    %31 = vector.shape_cast %30 : vector<1x128x128xbf16> to vector<128x128xbf16>
    %cst_38 = arith.constant dense<0.000000e+00> : vector<64x128xf32>
    %32 = tpu.matmul %29, %31, %cst_38 {dimension_numbers = #tpu.dot_dimension_numbers<[1], [0], [0], [1], [0, 0, 1, 1], [], []>} : vector<64x128xbf16>, vector<128x128xbf16>, vector<64x128xf32> -> vector<64x128xf32>
    %33 = arith.addf %26, %32 : vector<64x128xf32>
    %c0_39 = arith.constant 0 : index
    %c5 = arith.constant 5 : index
    %c0_40 = arith.constant 0 : index
    %c0_41 = arith.constant 0 : index
    %c0_42 = arith.constant 0 : index
    %34 = vector.load %arg2[%c0_39, %c5, %c0_40, %c0_41, %c0_42] : memref<1x6x9x8x128xbf16, #tpu.memory_space<vmem>>, vector<1x1x8x8x128xbf16>
    %35 = vector.shape_cast %34 : vector<1x1x8x8x128xbf16> to vector<8x8x128xbf16>
    %36 = vector.shape_cast %35 : vector<8x8x128xbf16> to vector<64x128xbf16>
    %c5_43 = arith.constant 5 : index
    %c0_44 = arith.constant 0 : index
    %c0_45 = arith.constant 0 : index
    %37 = vector.load %arg3[%c5_43, %c0_44, %c0_45] : memref<9x128x128xbf16, #tpu.memory_space<vmem>>, vector<1x128x128xbf16>
    %38 = vector.shape_cast %37 : vector<1x128x128xbf16> to vector<128x128xbf16>
    %cst_46 = arith.constant dense<0.000000e+00> : vector<64x128xf32>
    %39 = tpu.matmul %36, %38, %cst_46 {dimension_numbers = #tpu.dot_dimension_numbers<[1], [0], [0], [1], [0, 0, 1, 1], [], []>} : vector<64x128xbf16>, vector<128x128xbf16>, vector<64x128xf32> -> vector<64x128xf32>
    %40 = arith.addf %33, %39 : vector<64x128xf32>
    %c0_47 = arith.constant 0 : index
    %c0_48 = arith.constant 0 : index
    %c1_49 = arith.constant 1 : index
    %c0_50 = arith.constant 0 : index
    %c0_51 = arith.constant 0 : index
    %41 = vector.load %arg2[%c0_47, %c0_48, %c1_49, %c0_50, %c0_51] : memref<1x6x9x8x128xbf16, #tpu.memory_space<vmem>>, vector<1x1x8x8x128xbf16>
    %42 = vector.shape_cast %41 : vector<1x1x8x8x128xbf16> to vector<8x8x128xbf16>
    %43 = vector.shape_cast %42 : vector<8x8x128xbf16> to vector<64x128xbf16>
    %c6 = arith.constant 6 : index
    %c0_52 = arith.constant 0 : index
    %c0_53 = arith.constant 0 : index
    %44 = vector.load %arg3[%c6, %c0_52, %c0_53] : memref<9x128x128xbf16, #tpu.memory_space<vmem>>, vector<1x128x128xbf16>
    %45 = vector.shape_cast %44 : vector<1x128x128xbf16> to vector<128x128xbf16>
    %cst_54 = arith.constant dense<0.000000e+00> : vector<64x128xf32>
    %46 = tpu.matmul %43, %45, %cst_54 {dimension_numbers = #tpu.dot_dimension_numbers<[1], [0], [0], [1], [0, 0, 1, 1], [], []>} : vector<64x128xbf16>, vector<128x128xbf16>, vector<64x128xf32> -> vector<64x128xf32>
    %47 = arith.addf %40, %46 : vector<64x128xf32>
    %c0_55 = arith.constant 0 : index
    %c1_56 = arith.constant 1 : index
    %c1_57 = arith.constant 1 : index
    %c0_58 = arith.constant 0 : index
    %c0_59 = arith.constant 0 : index
    %48 = vector.load %arg2[%c0_55, %c1_56, %c1_57, %c0_58, %c0_59] : memref<1x6x9x8x128xbf16, #tpu.memory_space<vmem>>, vector<1x1x8x8x128xbf16>
    %49 = vector.shape_cast %48 : vector<1x1x8x8x128xbf16> to vector<8x8x128xbf16>
    %50 = vector.shape_cast %49 : vector<8x8x128xbf16> to vector<64x128xbf16>
    %c7 = arith.constant 7 : index
    %c0_60 = arith.constant 0 : index
    %c0_61 = arith.constant 0 : index
    %51 = vector.load %arg3[%c7, %c0_60, %c0_61] : memref<9x128x128xbf16, #tpu.memory_space<vmem>>, vector<1x128x128xbf16>
    %52 = vector.shape_cast %51 : vector<1x128x128xbf16> to vector<128x128xbf16>
    %cst_62 = arith.constant dense<0.000000e+00> : vector<64x128xf32>
    %53 = tpu.matmul %50, %52, %cst_62 {dimension_numbers = #tpu.dot_dimension_numbers<[1], [0], [0], [1], [0, 0, 1, 1], [], []>} : vector<64x128xbf16>, vector<128x128xbf16>, vector<64x128xf32> -> vector<64x128xf32>
    %54 = arith.addf %47, %53 : vector<64x128xf32>
    %c0_63 = arith.constant 0 : index
    %c2_64 = arith.constant 2 : index
    %c1_65 = arith.constant 1 : index
    %c0_66 = arith.constant 0 : index
    %c0_67 = arith.constant 0 : index
    %55 = vector.load %arg2[%c0_63, %c2_64, %c1_65, %c0_66, %c0_67] : memref<1x6x9x8x128xbf16, #tpu.memory_space<vmem>>, vector<1x1x8x8x128xbf16>
    %56 = vector.shape_cast %55 : vector<1x1x8x8x128xbf16> to vector<8x8x128xbf16>
    %57 = vector.shape_cast %56 : vector<8x8x128xbf16> to vector<64x128xbf16>
    %c8 = arith.constant 8 : index
    %c0_68 = arith.constant 0 : index
    %c0_69 = arith.constant 0 : index
    %58 = vector.load %arg3[%c8, %c0_68, %c0_69] : memref<9x128x128xbf16, #tpu.memory_space<vmem>>, vector<1x128x128xbf16>
    %59 = vector.shape_cast %58 : vector<1x128x128xbf16> to vector<128x128xbf16>
    %cst_70 = arith.constant dense<0.000000e+00> : vector<64x128xf32>
    %60 = tpu.matmul %57, %59, %cst_70 {dimension_numbers = #tpu.dot_dimension_numbers<[1], [0], [0], [1], [0, 0, 1, 1], [], []>} : vector<64x128xbf16>, vector<128x128xbf16>, vector<64x128xf32> -> vector<64x128xf32>
    %61 = arith.addf %54, %60 : vector<64x128xf32>
    %c0_71 = arith.constant 0 : index
    %c0_72 = arith.constant 0 : index
    %62 = vector.load %arg4[%c0_71, %c0_72] : memref<1x128xf32, #tpu.memory_space<vmem>>, vector<1x128xf32>
    %63 = vector.broadcast %62 : vector<1x128xf32> to vector<64x128xf32>
    %64 = arith.addf %61, %63 : vector<64x128xf32>
    %cst_73 = arith.constant 0.000000e+00 : f32
    %65 = vector.broadcast %cst_73 : f32 to vector<64x128xf32>
    %66 = arith.maximumf %64, %65 : vector<64x128xf32>
    %67 = arith.truncf %66 : vector<64x128xf32> to vector<64x128xbf16>
    %c0_74 = arith.constant 0 : index
    %c0_75 = arith.constant 0 : index
    %c0_76 = arith.constant 0 : index
    %68 = vector.load %arg5[%c0_74, %c0_75, %c0_76] : memref<1x64x128xbf16, #tpu.memory_space<vmem>>, vector<1x64x128xbf16>
    %69 = vector.shape_cast %68 : vector<1x64x128xbf16> to vector<64x128xbf16>
    %70 = vector.shape_cast %67 : vector<64x128xbf16> to vector<1x64x128xbf16>
    tpu.vector_store %arg5[%c0_74, %c0_75, %c0_76], %70 {strides = array<i32>} : memref<1x64x128xbf16, #tpu.memory_space<vmem>>, vector<1x64x128xbf16>,
    return
  }
  func.func @transform_0(%arg0: i32, %arg1: i32) -> (i32, i32, i32, i32, i32) {
    %c0_i32 = arith.constant 0 : i32
    %c0_i32_0 = arith.constant 0 : i32
    %c0_i32_1 = arith.constant 0 : i32
    %c0_i32_2 = arith.constant 0 : i32
    %c0_i32_3 = arith.constant 0 : i32
    return %arg1, %c0_i32, %c0_i32_0, %c0_i32_1, %c0_i32_2 : i32, i32, i32, i32, i32
  }
  func.func @transform_1(%arg0: i32, %arg1: i32) -> (i32, i32, i32) {
    %c0_i32 = arith.constant 0 : i32
    %c0_i32_0 = arith.constant 0 : i32
    %c0_i32_1 = arith.constant 0 : i32
    return %c0_i32, %c0_i32_0, %arg0 : i32, i32, i32
  }
  func.func @transform_2(%arg0: i32, %arg1: i32) -> (i32, i32) {
    %c0_i32 = arith.constant 0 : i32
    %c0_i32_0 = arith.constant 0 : i32
    return %c0_i32, %arg0 : i32, i32
  }
  func.func @transform_3(%arg0: i32, %arg1: i32) -> (i32, i32, i32) {
    %c0_i32 = arith.constant 0 : i32
    %c0_i32_0 = arith.constant 0 : i32
    return %arg1, %c0_i32, %arg0 : i32, i32, i32
  }
}

module attributes {stable_mosaic.version = 11 : i64} {
  func.func @kernel(%arg0: i32, %arg1: i32, %arg2: memref<1x3x10x8x128xbf16, #tpu.memory_space<vmem>>, %arg3: memref<9x128x128xbf16, #tpu.memory_space<vmem>>, %arg4: memref<1x128xf32, #tpu.memory_space<vmem>>, %arg5: memref<1x64x128xbf16, #tpu.memory_space<vmem>>, %arg6: memref<128x128xbf16, #tpu.memory_space<vmem>>, %arg7: memref<1x64x128xbf16, #tpu.memory_space<vmem>>) attributes {dimension_semantics = [#tpu.dimension_semantics<parallel>, #tpu.dimension_semantics<parallel>], iteration_bounds = array<i64: 1, 2>, scalar_prefetch = 0 : i64, scratch_operands = 0 : i64, tpu.core_type = #tpu.core_type<tc>, window_params = [{transform_indices = @transform_0, window_bounds = array<i64: 1, 3, 10, 8, 128>}, {transform_indices = @transform_1, window_bounds = array<i64: 9, 128, 128>}, {transform_indices = @transform_2, window_bounds = array<i64: 1, 128>}, {transform_indices = @transform_3, window_bounds = array<i64: 1, 64, 128>}, {transform_indices = @transform_4, window_bounds = array<i64: 128, 128>}, {transform_indices = @transform_5, window_bounds = array<i64: 1, 64, 128>}]} {
    %c0 = arith.constant 0 : index
    %c0_0 = arith.constant 0 : index
    %c0_1 = arith.constant 0 : index
    %c0_2 = arith.constant 0 : index
    %c0_3 = arith.constant 0 : index
    %0 = vector.load %arg2[%c0, %c0_0, %c0_1, %c0_2, %c0_3] : memref<1x3x10x8x128xbf16, #tpu.memory_space<vmem>>, vector<1x1x8x8x128xbf16>
    %1 = vector.shape_cast %0 : vector<1x1x8x8x128xbf16> to vector<8x8x128xbf16>
    %2 = vector.shape_cast %1 : vector<8x8x128xbf16> to vector<64x128xbf16>
    %c0_4 = arith.constant 0 : index
    %c0_5 = arith.constant 0 : index
    %c0_6 = arith.constant 0 : index
    %3 = vector.load %arg3[%c0_4, %c0_5, %c0_6] : memref<9x128x128xbf16, #tpu.memory_space<vmem>>, vector<1x128x128xbf16>
    %4 = vector.shape_cast %3 : vector<1x128x128xbf16> to vector<128x128xbf16>
    %cst = arith.constant dense<0.000000e+00> : vector<64x128xf32>
    %5 = tpu.matmul %2, %4, %cst {dimension_numbers = #tpu.dot_dimension_numbers<[1], [0], [0], [1], [0, 0, 1, 1], [], []>} : vector<64x128xbf16>, vector<128x128xbf16>, vector<64x128xf32> -> vector<64x128xf32>
    %c0_7 = arith.constant 0 : index
    %c1 = arith.constant 1 : index
    %c0_8 = arith.constant 0 : index
    %c0_9 = arith.constant 0 : index
    %c0_10 = arith.constant 0 : index
    %6 = vector.load %arg2[%c0_7, %c1, %c0_8, %c0_9, %c0_10] : memref<1x3x10x8x128xbf16, #tpu.memory_space<vmem>>, vector<1x1x8x8x128xbf16>
    %7 = vector.shape_cast %6 : vector<1x1x8x8x128xbf16> to vector<8x8x128xbf16>
    %8 = vector.shape_cast %7 : vector<8x8x128xbf16> to vector<64x128xbf16>
    %c1_11 = arith.constant 1 : index
    %c0_12 = arith.constant 0 : index
    %c0_13 = arith.constant 0 : index
    %9 = vector.load %arg3[%c1_11, %c0_12, %c0_13] : memref<9x128x128xbf16, #tpu.memory_space<vmem>>, vector<1x128x128xbf16>
    %10 = vector.shape_cast %9 : vector<1x128x128xbf16> to vector<128x128xbf16>
    %cst_14 = arith.constant dense<0.000000e+00> : vector<64x128xf32>
    %11 = tpu.matmul %8, %10, %cst_14 {dimension_numbers = #tpu.dot_dimension_numbers<[1], [0], [0], [1], [0, 0, 1, 1], [], []>} : vector<64x128xbf16>, vector<128x128xbf16>, vector<64x128xf32> -> vector<64x128xf32>
    %12 = arith.addf %5, %11 : vector<64x128xf32>
    %c0_15 = arith.constant 0 : index
    %c2 = arith.constant 2 : index
    %c0_16 = arith.constant 0 : index
    %c0_17 = arith.constant 0 : index
    %c0_18 = arith.constant 0 : index
    %13 = vector.load %arg2[%c0_15, %c2, %c0_16, %c0_17, %c0_18] : memref<1x3x10x8x128xbf16, #tpu.memory_space<vmem>>, vector<1x1x8x8x128xbf16>
    %14 = vector.shape_cast %13 : vector<1x1x8x8x128xbf16> to vector<8x8x128xbf16>
    %15 = vector.shape_cast %14 : vector<8x8x128xbf16> to vector<64x128xbf16>
    %c2_19 = arith.constant 2 : index
    %c0_20 = arith.constant 0 : index
    %c0_21 = arith.constant 0 : index
    %16 = vector.load %arg3[%c2_19, %c0_20, %c0_21] : memref<9x128x128xbf16, #tpu.memory_space<vmem>>, vector<1x128x128xbf16>
    %17 = vector.shape_cast %16 : vector<1x128x128xbf16> to vector<128x128xbf16>
    %cst_22 = arith.constant dense<0.000000e+00> : vector<64x128xf32>
    %18 = tpu.matmul %15, %17, %cst_22 {dimension_numbers = #tpu.dot_dimension_numbers<[1], [0], [0], [1], [0, 0, 1, 1], [], []>} : vector<64x128xbf16>, vector<128x128xbf16>, vector<64x128xf32> -> vector<64x128xf32>
    %19 = arith.addf %12, %18 : vector<64x128xf32>
    %c0_23 = arith.constant 0 : index
    %c0_24 = arith.constant 0 : index
    %c1_25 = arith.constant 1 : index
    %c0_26 = arith.constant 0 : index
    %c0_27 = arith.constant 0 : index
    %20 = vector.load %arg2[%c0_23, %c0_24, %c1_25, %c0_26, %c0_27] : memref<1x3x10x8x128xbf16, #tpu.memory_space<vmem>>, vector<1x1x8x8x128xbf16>
    %21 = vector.shape_cast %20 : vector<1x1x8x8x128xbf16> to vector<8x8x128xbf16>
    %22 = vector.shape_cast %21 : vector<8x8x128xbf16> to vector<64x128xbf16>
    %c3 = arith.constant 3 : index
    %c0_28 = arith.constant 0 : index
    %c0_29 = arith.constant 0 : index
    %23 = vector.load %arg3[%c3, %c0_28, %c0_29] : memref<9x128x128xbf16, #tpu.memory_space<vmem>>, vector<1x128x128xbf16>
    %24 = vector.shape_cast %23 : vector<1x128x128xbf16> to vector<128x128xbf16>
    %cst_30 = arith.constant dense<0.000000e+00> : vector<64x128xf32>
    %25 = tpu.matmul %22, %24, %cst_30 {dimension_numbers = #tpu.dot_dimension_numbers<[1], [0], [0], [1], [0, 0, 1, 1], [], []>} : vector<64x128xbf16>, vector<128x128xbf16>, vector<64x128xf32> -> vector<64x128xf32>
    %26 = arith.addf %19, %25 : vector<64x128xf32>
    %c0_31 = arith.constant 0 : index
    %c1_32 = arith.constant 1 : index
    %c1_33 = arith.constant 1 : index
    %c0_34 = arith.constant 0 : index
    %c0_35 = arith.constant 0 : index
    %27 = vector.load %arg2[%c0_31, %c1_32, %c1_33, %c0_34, %c0_35] : memref<1x3x10x8x128xbf16, #tpu.memory_space<vmem>>, vector<1x1x8x8x128xbf16>
    %28 = vector.shape_cast %27 : vector<1x1x8x8x128xbf16> to vector<8x8x128xbf16>
    %29 = vector.shape_cast %28 : vector<8x8x128xbf16> to vector<64x128xbf16>
    %c4 = arith.constant 4 : index
    %c0_36 = arith.constant 0 : index
    %c0_37 = arith.constant 0 : index
    %30 = vector.load %arg3[%c4, %c0_36, %c0_37] : memref<9x128x128xbf16, #tpu.memory_space<vmem>>, vector<1x128x128xbf16>
    %31 = vector.shape_cast %30 : vector<1x128x128xbf16> to vector<128x128xbf16>
    %cst_38 = arith.constant dense<0.000000e+00> : vector<64x128xf32>
    %32 = tpu.matmul %29, %31, %cst_38 {dimension_numbers = #tpu.dot_dimension_numbers<[1], [0], [0], [1], [0, 0, 1, 1], [], []>} : vector<64x128xbf16>, vector<128x128xbf16>, vector<64x128xf32> -> vector<64x128xf32>
    %33 = arith.addf %26, %32 : vector<64x128xf32>
    %c0_39 = arith.constant 0 : index
    %c2_40 = arith.constant 2 : index
    %c1_41 = arith.constant 1 : index
    %c0_42 = arith.constant 0 : index
    %c0_43 = arith.constant 0 : index
    %34 = vector.load %arg2[%c0_39, %c2_40, %c1_41, %c0_42, %c0_43] : memref<1x3x10x8x128xbf16, #tpu.memory_space<vmem>>, vector<1x1x8x8x128xbf16>
    %35 = vector.shape_cast %34 : vector<1x1x8x8x128xbf16> to vector<8x8x128xbf16>
    %36 = vector.shape_cast %35 : vector<8x8x128xbf16> to vector<64x128xbf16>
    %c5 = arith.constant 5 : index
    %c0_44 = arith.constant 0 : index
    %c0_45 = arith.constant 0 : index
    %37 = vector.load %arg3[%c5, %c0_44, %c0_45] : memref<9x128x128xbf16, #tpu.memory_space<vmem>>, vector<1x128x128xbf16>
    %38 = vector.shape_cast %37 : vector<1x128x128xbf16> to vector<128x128xbf16>
    %cst_46 = arith.constant dense<0.000000e+00> : vector<64x128xf32>
    %39 = tpu.matmul %36, %38, %cst_46 {dimension_numbers = #tpu.dot_dimension_numbers<[1], [0], [0], [1], [0, 0, 1, 1], [], []>} : vector<64x128xbf16>, vector<128x128xbf16>, vector<64x128xf32> -> vector<64x128xf32>
    %40 = arith.addf %33, %39 : vector<64x128xf32>
    %c0_47 = arith.constant 0 : index
    %c0_48 = arith.constant 0 : index
    %c2_49 = arith.constant 2 : index
    %c0_50 = arith.constant 0 : index
    %c0_51 = arith.constant 0 : index
    %41 = vector.load %arg2[%c0_47, %c0_48, %c2_49, %c0_50, %c0_51] : memref<1x3x10x8x128xbf16, #tpu.memory_space<vmem>>, vector<1x1x8x8x128xbf16>
    %42 = vector.shape_cast %41 : vector<1x1x8x8x128xbf16> to vector<8x8x128xbf16>
    %43 = vector.shape_cast %42 : vector<8x8x128xbf16> to vector<64x128xbf16>
    %c6 = arith.constant 6 : index
    %c0_52 = arith.constant 0 : index
    %c0_53 = arith.constant 0 : index
    %44 = vector.load %arg3[%c6, %c0_52, %c0_53] : memref<9x128x128xbf16, #tpu.memory_space<vmem>>, vector<1x128x128xbf16>
    %45 = vector.shape_cast %44 : vector<1x128x128xbf16> to vector<128x128xbf16>
    %cst_54 = arith.constant dense<0.000000e+00> : vector<64x128xf32>
    %46 = tpu.matmul %43, %45, %cst_54 {dimension_numbers = #tpu.dot_dimension_numbers<[1], [0], [0], [1], [0, 0, 1, 1], [], []>} : vector<64x128xbf16>, vector<128x128xbf16>, vector<64x128xf32> -> vector<64x128xf32>
    %47 = arith.addf %40, %46 : vector<64x128xf32>
    %c0_55 = arith.constant 0 : index
    %c1_56 = arith.constant 1 : index
    %c2_57 = arith.constant 2 : index
    %c0_58 = arith.constant 0 : index
    %c0_59 = arith.constant 0 : index
    %48 = vector.load %arg2[%c0_55, %c1_56, %c2_57, %c0_58, %c0_59] : memref<1x3x10x8x128xbf16, #tpu.memory_space<vmem>>, vector<1x1x8x8x128xbf16>
    %49 = vector.shape_cast %48 : vector<1x1x8x8x128xbf16> to vector<8x8x128xbf16>
    %50 = vector.shape_cast %49 : vector<8x8x128xbf16> to vector<64x128xbf16>
    %c7 = arith.constant 7 : index
    %c0_60 = arith.constant 0 : index
    %c0_61 = arith.constant 0 : index
    %51 = vector.load %arg3[%c7, %c0_60, %c0_61] : memref<9x128x128xbf16, #tpu.memory_space<vmem>>, vector<1x128x128xbf16>
    %52 = vector.shape_cast %51 : vector<1x128x128xbf16> to vector<128x128xbf16>
    %cst_62 = arith.constant dense<0.000000e+00> : vector<64x128xf32>
    %53 = tpu.matmul %50, %52, %cst_62 {dimension_numbers = #tpu.dot_dimension_numbers<[1], [0], [0], [1], [0, 0, 1, 1], [], []>} : vector<64x128xbf16>, vector<128x128xbf16>, vector<64x128xf32> -> vector<64x128xf32>
    %54 = arith.addf %47, %53 : vector<64x128xf32>
    %c0_63 = arith.constant 0 : index
    %c2_64 = arith.constant 2 : index
    %c2_65 = arith.constant 2 : index
    %c0_66 = arith.constant 0 : index
    %c0_67 = arith.constant 0 : index
    %55 = vector.load %arg2[%c0_63, %c2_64, %c2_65, %c0_66, %c0_67] : memref<1x3x10x8x128xbf16, #tpu.memory_space<vmem>>, vector<1x1x8x8x128xbf16>
    %56 = vector.shape_cast %55 : vector<1x1x8x8x128xbf16> to vector<8x8x128xbf16>
    %57 = vector.shape_cast %56 : vector<8x8x128xbf16> to vector<64x128xbf16>
    %c8 = arith.constant 8 : index
    %c0_68 = arith.constant 0 : index
    %c0_69 = arith.constant 0 : index
    %58 = vector.load %arg3[%c8, %c0_68, %c0_69] : memref<9x128x128xbf16, #tpu.memory_space<vmem>>, vector<1x128x128xbf16>
    %59 = vector.shape_cast %58 : vector<1x128x128xbf16> to vector<128x128xbf16>
    %cst_70 = arith.constant dense<0.000000e+00> : vector<64x128xf32>
    %60 = tpu.matmul %57, %59, %cst_70 {dimension_numbers = #tpu.dot_dimension_numbers<[1], [0], [0], [1], [0, 0, 1, 1], [], []>} : vector<64x128xbf16>, vector<128x128xbf16>, vector<64x128xf32> -> vector<64x128xf32>
    %61 = arith.addf %54, %60 : vector<64x128xf32>
    %c0_71 = arith.constant 0 : index
    %c0_72 = arith.constant 0 : index
    %62 = vector.load %arg4[%c0_71, %c0_72] : memref<1x128xf32, #tpu.memory_space<vmem>>, vector<1x128xf32>
    %63 = vector.broadcast %62 : vector<1x128xf32> to vector<64x128xf32>
    %64 = arith.addf %61, %63 : vector<64x128xf32>
    %cst_73 = arith.constant 0.000000e+00 : f32
    %65 = vector.broadcast %cst_73 : f32 to vector<64x128xf32>
    %66 = arith.maximumf %64, %65 : vector<64x128xf32>
    %c0_74 = arith.constant 0 : index
    %c0_75 = arith.constant 0 : index
    %c0_76 = arith.constant 0 : index
    %67 = vector.load %arg5[%c0_74, %c0_75, %c0_76] : memref<1x64x128xbf16, #tpu.memory_space<vmem>>, vector<1x64x128xbf16>
    %68 = vector.shape_cast %67 : vector<1x64x128xbf16> to vector<64x128xbf16>
    %c0_77 = arith.constant 0 : index
    %c0_78 = arith.constant 0 : index
    %69 = vector.load %arg6[%c0_77, %c0_78] : memref<128x128xbf16, #tpu.memory_space<vmem>>, vector<128x128xbf16>
    %cst_79 = arith.constant dense<0.000000e+00> : vector<64x128xf32>
    %70 = tpu.matmul %68, %69, %cst_79 {dimension_numbers = #tpu.dot_dimension_numbers<[1], [0], [0], [1], [0, 0, 1, 1], [], []>} : vector<64x128xbf16>, vector<128x128xbf16>, vector<64x128xf32> -> vector<64x128xf32>
    %71 = arith.addf %66, %70 : vector<64x128xf32>
    %cst_80 = arith.constant 0.000000e+00 : f32
    %72 = vector.broadcast %cst_80 : f32 to vector<64x128xf32>
    %73 = arith.maximumf %71, %72 : vector<64x128xf32>
    %74 = arith.truncf %73 : vector<64x128xf32> to vector<64x128xbf16>
    %c0_81 = arith.constant 0 : index
    %c0_82 = arith.constant 0 : index
    %c0_83 = arith.constant 0 : index
    %75 = vector.load %arg7[%c0_81, %c0_82, %c0_83] : memref<1x64x128xbf16, #tpu.memory_space<vmem>>, vector<1x64x128xbf16>
    %76 = vector.shape_cast %75 : vector<1x64x128xbf16> to vector<64x128xbf16>
    %77 = vector.shape_cast %74 : vector<64x128xbf16> to vector<1x64x128xbf16>
    tpu.vector_store %arg7[%c0_81, %c0_82, %c0_83], %77 {strides = array<i32>} : memref<1x64x128xbf16, #tpu.memory_space<vmem>>, vector<1x64x128xbf16>,
    return
  }
  func.func @transform_0(%arg0: i32, %arg1: i32) -> (i32, i32, i32, i32, i32) {
    %c0_i32 = arith.constant 0 : i32
    %c0_i32_0 = arith.constant 0 : i32
    %c0_i32_1 = arith.constant 0 : i32
    %c0_i32_2 = arith.constant 0 : i32
    %c0_i32_3 = arith.constant 0 : i32
    return %arg1, %c0_i32, %c0_i32_0, %c0_i32_1, %c0_i32_2 : i32, i32, i32, i32, i32
  }
  func.func @transform_1(%arg0: i32, %arg1: i32) -> (i32, i32, i32) {
    %c0_i32 = arith.constant 0 : i32
    %c0_i32_0 = arith.constant 0 : i32
    %c0_i32_1 = arith.constant 0 : i32
    return %c0_i32, %c0_i32_0, %arg0 : i32, i32, i32
  }
  func.func @transform_2(%arg0: i32, %arg1: i32) -> (i32, i32) {
    %c0_i32 = arith.constant 0 : i32
    %c0_i32_0 = arith.constant 0 : i32
    return %c0_i32, %arg0 : i32, i32
  }
  func.func @transform_3(%arg0: i32, %arg1: i32) -> (i32, i32, i32) {
    %c0_i32 = arith.constant 0 : i32
    %c0_i32_0 = arith.constant 0 : i32
    %c0_i32_1 = arith.constant 0 : i32
    return %arg1, %c0_i32, %c0_i32_0 : i32, i32, i32
  }
  func.func @transform_4(%arg0: i32, %arg1: i32) -> (i32, i32) {
    %c0_i32 = arith.constant 0 : i32
    %c0_i32_0 = arith.constant 0 : i32
    return %c0_i32, %arg0 : i32, i32
  }
  func.func @transform_5(%arg0: i32, %arg1: i32) -> (i32, i32, i32) {
    %c0_i32 = arith.constant 0 : i32
    %c0_i32_0 = arith.constant 0 : i32
    return %arg1, %c0_i32, %arg0 : i32, i32, i32
  }
}

module attributes {stable_mosaic.version = 11 : i64} {
  func.func @kernel(%arg0: i32, %arg1: i32, %arg2: memref<1x3x10x8x128xbf16, #tpu.memory_space<vmem>>, %arg3: memref<9x128x128xbf16, #tpu.memory_space<vmem>>, %arg4: memref<1x128xf32, #tpu.memory_space<vmem>>, %arg5: memref<1x64x128xbf16, #tpu.memory_space<vmem>>) attributes {dimension_semantics = [#tpu.dimension_semantics<parallel>, #tpu.dimension_semantics<parallel>], iteration_bounds = array<i64: 1, 2>, scalar_prefetch = 0 : i64, scratch_operands = 0 : i64, tpu.core_type = #tpu.core_type<tc>, window_params = [{transform_indices = @transform_0, window_bounds = array<i64: 1, 3, 10, 8, 128>}, {transform_indices = @transform_1, window_bounds = array<i64: 9, 128, 128>}, {transform_indices = @transform_2, window_bounds = array<i64: 1, 128>}, {transform_indices = @transform_3, window_bounds = array<i64: 1, 64, 128>}]} {
    %c0 = arith.constant 0 : index
    %c0_0 = arith.constant 0 : index
    %c0_1 = arith.constant 0 : index
    %c0_2 = arith.constant 0 : index
    %c0_3 = arith.constant 0 : index
    %0 = vector.load %arg2[%c0, %c0_0, %c0_1, %c0_2, %c0_3] : memref<1x3x10x8x128xbf16, #tpu.memory_space<vmem>>, vector<1x1x8x8x128xbf16>
    %1 = vector.shape_cast %0 : vector<1x1x8x8x128xbf16> to vector<8x8x128xbf16>
    %2 = vector.shape_cast %1 : vector<8x8x128xbf16> to vector<64x128xbf16>
    %c0_4 = arith.constant 0 : index
    %c0_5 = arith.constant 0 : index
    %c0_6 = arith.constant 0 : index
    %3 = vector.load %arg3[%c0_4, %c0_5, %c0_6] : memref<9x128x128xbf16, #tpu.memory_space<vmem>>, vector<1x128x128xbf16>
    %4 = vector.shape_cast %3 : vector<1x128x128xbf16> to vector<128x128xbf16>
    %cst = arith.constant dense<0.000000e+00> : vector<64x128xf32>
    %5 = tpu.matmul %2, %4, %cst {dimension_numbers = #tpu.dot_dimension_numbers<[1], [0], [0], [1], [0, 0, 1, 1], [], []>} : vector<64x128xbf16>, vector<128x128xbf16>, vector<64x128xf32> -> vector<64x128xf32>
    %c0_7 = arith.constant 0 : index
    %c1 = arith.constant 1 : index
    %c0_8 = arith.constant 0 : index
    %c0_9 = arith.constant 0 : index
    %c0_10 = arith.constant 0 : index
    %6 = vector.load %arg2[%c0_7, %c1, %c0_8, %c0_9, %c0_10] : memref<1x3x10x8x128xbf16, #tpu.memory_space<vmem>>, vector<1x1x8x8x128xbf16>
    %7 = vector.shape_cast %6 : vector<1x1x8x8x128xbf16> to vector<8x8x128xbf16>
    %8 = vector.shape_cast %7 : vector<8x8x128xbf16> to vector<64x128xbf16>
    %c1_11 = arith.constant 1 : index
    %c0_12 = arith.constant 0 : index
    %c0_13 = arith.constant 0 : index
    %9 = vector.load %arg3[%c1_11, %c0_12, %c0_13] : memref<9x128x128xbf16, #tpu.memory_space<vmem>>, vector<1x128x128xbf16>
    %10 = vector.shape_cast %9 : vector<1x128x128xbf16> to vector<128x128xbf16>
    %cst_14 = arith.constant dense<0.000000e+00> : vector<64x128xf32>
    %11 = tpu.matmul %8, %10, %cst_14 {dimension_numbers = #tpu.dot_dimension_numbers<[1], [0], [0], [1], [0, 0, 1, 1], [], []>} : vector<64x128xbf16>, vector<128x128xbf16>, vector<64x128xf32> -> vector<64x128xf32>
    %12 = arith.addf %5, %11 : vector<64x128xf32>
    %c0_15 = arith.constant 0 : index
    %c2 = arith.constant 2 : index
    %c0_16 = arith.constant 0 : index
    %c0_17 = arith.constant 0 : index
    %c0_18 = arith.constant 0 : index
    %13 = vector.load %arg2[%c0_15, %c2, %c0_16, %c0_17, %c0_18] : memref<1x3x10x8x128xbf16, #tpu.memory_space<vmem>>, vector<1x1x8x8x128xbf16>
    %14 = vector.shape_cast %13 : vector<1x1x8x8x128xbf16> to vector<8x8x128xbf16>
    %15 = vector.shape_cast %14 : vector<8x8x128xbf16> to vector<64x128xbf16>
    %c2_19 = arith.constant 2 : index
    %c0_20 = arith.constant 0 : index
    %c0_21 = arith.constant 0 : index
    %16 = vector.load %arg3[%c2_19, %c0_20, %c0_21] : memref<9x128x128xbf16, #tpu.memory_space<vmem>>, vector<1x128x128xbf16>
    %17 = vector.shape_cast %16 : vector<1x128x128xbf16> to vector<128x128xbf16>
    %cst_22 = arith.constant dense<0.000000e+00> : vector<64x128xf32>
    %18 = tpu.matmul %15, %17, %cst_22 {dimension_numbers = #tpu.dot_dimension_numbers<[1], [0], [0], [1], [0, 0, 1, 1], [], []>} : vector<64x128xbf16>, vector<128x128xbf16>, vector<64x128xf32> -> vector<64x128xf32>
    %19 = arith.addf %12, %18 : vector<64x128xf32>
    %c0_23 = arith.constant 0 : index
    %c0_24 = arith.constant 0 : index
    %c1_25 = arith.constant 1 : index
    %c0_26 = arith.constant 0 : index
    %c0_27 = arith.constant 0 : index
    %20 = vector.load %arg2[%c0_23, %c0_24, %c1_25, %c0_26, %c0_27] : memref<1x3x10x8x128xbf16, #tpu.memory_space<vmem>>, vector<1x1x8x8x128xbf16>
    %21 = vector.shape_cast %20 : vector<1x1x8x8x128xbf16> to vector<8x8x128xbf16>
    %22 = vector.shape_cast %21 : vector<8x8x128xbf16> to vector<64x128xbf16>
    %c3 = arith.constant 3 : index
    %c0_28 = arith.constant 0 : index
    %c0_29 = arith.constant 0 : index
    %23 = vector.load %arg3[%c3, %c0_28, %c0_29] : memref<9x128x128xbf16, #tpu.memory_space<vmem>>, vector<1x128x128xbf16>
    %24 = vector.shape_cast %23 : vector<1x128x128xbf16> to vector<128x128xbf16>
    %cst_30 = arith.constant dense<0.000000e+00> : vector<64x128xf32>
    %25 = tpu.matmul %22, %24, %cst_30 {dimension_numbers = #tpu.dot_dimension_numbers<[1], [0], [0], [1], [0, 0, 1, 1], [], []>} : vector<64x128xbf16>, vector<128x128xbf16>, vector<64x128xf32> -> vector<64x128xf32>
    %26 = arith.addf %19, %25 : vector<64x128xf32>
    %c0_31 = arith.constant 0 : index
    %c1_32 = arith.constant 1 : index
    %c1_33 = arith.constant 1 : index
    %c0_34 = arith.constant 0 : index
    %c0_35 = arith.constant 0 : index
    %27 = vector.load %arg2[%c0_31, %c1_32, %c1_33, %c0_34, %c0_35] : memref<1x3x10x8x128xbf16, #tpu.memory_space<vmem>>, vector<1x1x8x8x128xbf16>
    %28 = vector.shape_cast %27 : vector<1x1x8x8x128xbf16> to vector<8x8x128xbf16>
    %29 = vector.shape_cast %28 : vector<8x8x128xbf16> to vector<64x128xbf16>
    %c4 = arith.constant 4 : index
    %c0_36 = arith.constant 0 : index
    %c0_37 = arith.constant 0 : index
    %30 = vector.load %arg3[%c4, %c0_36, %c0_37] : memref<9x128x128xbf16, #tpu.memory_space<vmem>>, vector<1x128x128xbf16>
    %31 = vector.shape_cast %30 : vector<1x128x128xbf16> to vector<128x128xbf16>
    %cst_38 = arith.constant dense<0.000000e+00> : vector<64x128xf32>
    %32 = tpu.matmul %29, %31, %cst_38 {dimension_numbers = #tpu.dot_dimension_numbers<[1], [0], [0], [1], [0, 0, 1, 1], [], []>} : vector<64x128xbf16>, vector<128x128xbf16>, vector<64x128xf32> -> vector<64x128xf32>
    %33 = arith.addf %26, %32 : vector<64x128xf32>
    %c0_39 = arith.constant 0 : index
    %c2_40 = arith.constant 2 : index
    %c1_41 = arith.constant 1 : index
    %c0_42 = arith.constant 0 : index
    %c0_43 = arith.constant 0 : index
    %34 = vector.load %arg2[%c0_39, %c2_40, %c1_41, %c0_42, %c0_43] : memref<1x3x10x8x128xbf16, #tpu.memory_space<vmem>>, vector<1x1x8x8x128xbf16>
    %35 = vector.shape_cast %34 : vector<1x1x8x8x128xbf16> to vector<8x8x128xbf16>
    %36 = vector.shape_cast %35 : vector<8x8x128xbf16> to vector<64x128xbf16>
    %c5 = arith.constant 5 : index
    %c0_44 = arith.constant 0 : index
    %c0_45 = arith.constant 0 : index
    %37 = vector.load %arg3[%c5, %c0_44, %c0_45] : memref<9x128x128xbf16, #tpu.memory_space<vmem>>, vector<1x128x128xbf16>
    %38 = vector.shape_cast %37 : vector<1x128x128xbf16> to vector<128x128xbf16>
    %cst_46 = arith.constant dense<0.000000e+00> : vector<64x128xf32>
    %39 = tpu.matmul %36, %38, %cst_46 {dimension_numbers = #tpu.dot_dimension_numbers<[1], [0], [0], [1], [0, 0, 1, 1], [], []>} : vector<64x128xbf16>, vector<128x128xbf16>, vector<64x128xf32> -> vector<64x128xf32>
    %40 = arith.addf %33, %39 : vector<64x128xf32>
    %c0_47 = arith.constant 0 : index
    %c0_48 = arith.constant 0 : index
    %c2_49 = arith.constant 2 : index
    %c0_50 = arith.constant 0 : index
    %c0_51 = arith.constant 0 : index
    %41 = vector.load %arg2[%c0_47, %c0_48, %c2_49, %c0_50, %c0_51] : memref<1x3x10x8x128xbf16, #tpu.memory_space<vmem>>, vector<1x1x8x8x128xbf16>
    %42 = vector.shape_cast %41 : vector<1x1x8x8x128xbf16> to vector<8x8x128xbf16>
    %43 = vector.shape_cast %42 : vector<8x8x128xbf16> to vector<64x128xbf16>
    %c6 = arith.constant 6 : index
    %c0_52 = arith.constant 0 : index
    %c0_53 = arith.constant 0 : index
    %44 = vector.load %arg3[%c6, %c0_52, %c0_53] : memref<9x128x128xbf16, #tpu.memory_space<vmem>>, vector<1x128x128xbf16>
    %45 = vector.shape_cast %44 : vector<1x128x128xbf16> to vector<128x128xbf16>
    %cst_54 = arith.constant dense<0.000000e+00> : vector<64x128xf32>
    %46 = tpu.matmul %43, %45, %cst_54 {dimension_numbers = #tpu.dot_dimension_numbers<[1], [0], [0], [1], [0, 0, 1, 1], [], []>} : vector<64x128xbf16>, vector<128x128xbf16>, vector<64x128xf32> -> vector<64x128xf32>
    %47 = arith.addf %40, %46 : vector<64x128xf32>
    %c0_55 = arith.constant 0 : index
    %c1_56 = arith.constant 1 : index
    %c2_57 = arith.constant 2 : index
    %c0_58 = arith.constant 0 : index
    %c0_59 = arith.constant 0 : index
    %48 = vector.load %arg2[%c0_55, %c1_56, %c2_57, %c0_58, %c0_59] : memref<1x3x10x8x128xbf16, #tpu.memory_space<vmem>>, vector<1x1x8x8x128xbf16>
    %49 = vector.shape_cast %48 : vector<1x1x8x8x128xbf16> to vector<8x8x128xbf16>
    %50 = vector.shape_cast %49 : vector<8x8x128xbf16> to vector<64x128xbf16>
    %c7 = arith.constant 7 : index
    %c0_60 = arith.constant 0 : index
    %c0_61 = arith.constant 0 : index
    %51 = vector.load %arg3[%c7, %c0_60, %c0_61] : memref<9x128x128xbf16, #tpu.memory_space<vmem>>, vector<1x128x128xbf16>
    %52 = vector.shape_cast %51 : vector<1x128x128xbf16> to vector<128x128xbf16>
    %cst_62 = arith.constant dense<0.000000e+00> : vector<64x128xf32>
    %53 = tpu.matmul %50, %52, %cst_62 {dimension_numbers = #tpu.dot_dimension_numbers<[1], [0], [0], [1], [0, 0, 1, 1], [], []>} : vector<64x128xbf16>, vector<128x128xbf16>, vector<64x128xf32> -> vector<64x128xf32>
    %54 = arith.addf %47, %53 : vector<64x128xf32>
    %c0_63 = arith.constant 0 : index
    %c2_64 = arith.constant 2 : index
    %c2_65 = arith.constant 2 : index
    %c0_66 = arith.constant 0 : index
    %c0_67 = arith.constant 0 : index
    %55 = vector.load %arg2[%c0_63, %c2_64, %c2_65, %c0_66, %c0_67] : memref<1x3x10x8x128xbf16, #tpu.memory_space<vmem>>, vector<1x1x8x8x128xbf16>
    %56 = vector.shape_cast %55 : vector<1x1x8x8x128xbf16> to vector<8x8x128xbf16>
    %57 = vector.shape_cast %56 : vector<8x8x128xbf16> to vector<64x128xbf16>
    %c8 = arith.constant 8 : index
    %c0_68 = arith.constant 0 : index
    %c0_69 = arith.constant 0 : index
    %58 = vector.load %arg3[%c8, %c0_68, %c0_69] : memref<9x128x128xbf16, #tpu.memory_space<vmem>>, vector<1x128x128xbf16>
    %59 = vector.shape_cast %58 : vector<1x128x128xbf16> to vector<128x128xbf16>
    %cst_70 = arith.constant dense<0.000000e+00> : vector<64x128xf32>
    %60 = tpu.matmul %57, %59, %cst_70 {dimension_numbers = #tpu.dot_dimension_numbers<[1], [0], [0], [1], [0, 0, 1, 1], [], []>} : vector<64x128xbf16>, vector<128x128xbf16>, vector<64x128xf32> -> vector<64x128xf32>
    %61 = arith.addf %54, %60 : vector<64x128xf32>
    %c0_71 = arith.constant 0 : index
    %c0_72 = arith.constant 0 : index
    %62 = vector.load %arg4[%c0_71, %c0_72] : memref<1x128xf32, #tpu.memory_space<vmem>>, vector<1x128xf32>
    %63 = vector.broadcast %62 : vector<1x128xf32> to vector<64x128xf32>
    %64 = arith.addf %61, %63 : vector<64x128xf32>
    %cst_73 = arith.constant 0.000000e+00 : f32
    %65 = vector.broadcast %cst_73 : f32 to vector<64x128xf32>
    %66 = arith.maximumf %64, %65 : vector<64x128xf32>
    %67 = arith.truncf %66 : vector<64x128xf32> to vector<64x128xbf16>
    %c0_74 = arith.constant 0 : index
    %c0_75 = arith.constant 0 : index
    %c0_76 = arith.constant 0 : index
    %68 = vector.load %arg5[%c0_74, %c0_75, %c0_76] : memref<1x64x128xbf16, #tpu.memory_space<vmem>>, vector<1x64x128xbf16>
    %69 = vector.shape_cast %68 : vector<1x64x128xbf16> to vector<64x128xbf16>
    %70 = vector.shape_cast %67 : vector<64x128xbf16> to vector<1x64x128xbf16>
    tpu.vector_store %arg5[%c0_74, %c0_75, %c0_76], %70 {strides = array<i32>} : memref<1x64x128xbf16, #tpu.memory_space<vmem>>, vector<1x64x128xbf16>,
    return
  }
  func.func @transform_0(%arg0: i32, %arg1: i32) -> (i32, i32, i32, i32, i32) {
    %c0_i32 = arith.constant 0 : i32
    %c0_i32_0 = arith.constant 0 : i32
    %c0_i32_1 = arith.constant 0 : i32
    %c0_i32_2 = arith.constant 0 : i32
    %c0_i32_3 = arith.constant 0 : i32
    return %arg1, %c0_i32, %c0_i32_0, %c0_i32_1, %c0_i32_2 : i32, i32, i32, i32, i32
  }
  func.func @transform_1(%arg0: i32, %arg1: i32) -> (i32, i32, i32) {
    %c0_i32 = arith.constant 0 : i32
    %c0_i32_0 = arith.constant 0 : i32
    %c0_i32_1 = arith.constant 0 : i32
    return %c0_i32, %c0_i32_0, %arg0 : i32, i32, i32
  }
  func.func @transform_2(%arg0: i32, %arg1: i32) -> (i32, i32) {
    %c0_i32 = arith.constant 0 : i32
    %c0_i32_0 = arith.constant 0 : i32
    return %c0_i32, %arg0 : i32, i32
  }
  func.func @transform_3(%arg0: i32, %arg1: i32) -> (i32, i32, i32) {
    %c0_i32 = arith.constant 0 : i32
    %c0_i32_0 = arith.constant 0 : i32
    return %arg1, %c0_i32, %arg0 : i32, i32, i32
  }
}

module attributes {stable_mosaic.version = 11 : i64} {
  func.func @kernel(%arg0: i32, %arg1: i32, %arg2: memref<1x3x10x8x128xbf16, #tpu.memory_space<vmem>>, %arg3: memref<9x128x128xbf16, #tpu.memory_space<vmem>>, %arg4: memref<1x128xf32, #tpu.memory_space<vmem>>, %arg5: memref<1x64x128xbf16, #tpu.memory_space<vmem>>, %arg6: memref<1x64x128xbf16, #tpu.memory_space<vmem>>) attributes {dimension_semantics = [#tpu.dimension_semantics<parallel>, #tpu.dimension_semantics<parallel>], iteration_bounds = array<i64: 1, 2>, scalar_prefetch = 0 : i64, scratch_operands = 0 : i64, tpu.core_type = #tpu.core_type<tc>, window_params = [{transform_indices = @transform_0, window_bounds = array<i64: 1, 3, 10, 8, 128>}, {transform_indices = @transform_1, window_bounds = array<i64: 9, 128, 128>}, {transform_indices = @transform_2, window_bounds = array<i64: 1, 128>}, {transform_indices = @transform_3, window_bounds = array<i64: 1, 64, 128>}, {transform_indices = @transform_4, window_bounds = array<i64: 1, 64, 128>}]} {
    %c0 = arith.constant 0 : index
    %c0_0 = arith.constant 0 : index
    %c0_1 = arith.constant 0 : index
    %c0_2 = arith.constant 0 : index
    %c0_3 = arith.constant 0 : index
    %0 = vector.load %arg2[%c0, %c0_0, %c0_1, %c0_2, %c0_3] : memref<1x3x10x8x128xbf16, #tpu.memory_space<vmem>>, vector<1x1x8x8x128xbf16>
    %1 = vector.shape_cast %0 : vector<1x1x8x8x128xbf16> to vector<8x8x128xbf16>
    %2 = vector.shape_cast %1 : vector<8x8x128xbf16> to vector<64x128xbf16>
    %c0_4 = arith.constant 0 : index
    %c0_5 = arith.constant 0 : index
    %c0_6 = arith.constant 0 : index
    %3 = vector.load %arg3[%c0_4, %c0_5, %c0_6] : memref<9x128x128xbf16, #tpu.memory_space<vmem>>, vector<1x128x128xbf16>
    %4 = vector.shape_cast %3 : vector<1x128x128xbf16> to vector<128x128xbf16>
    %cst = arith.constant dense<0.000000e+00> : vector<64x128xf32>
    %5 = tpu.matmul %2, %4, %cst {dimension_numbers = #tpu.dot_dimension_numbers<[1], [0], [0], [1], [0, 0, 1, 1], [], []>} : vector<64x128xbf16>, vector<128x128xbf16>, vector<64x128xf32> -> vector<64x128xf32>
    %c0_7 = arith.constant 0 : index
    %c1 = arith.constant 1 : index
    %c0_8 = arith.constant 0 : index
    %c0_9 = arith.constant 0 : index
    %c0_10 = arith.constant 0 : index
    %6 = vector.load %arg2[%c0_7, %c1, %c0_8, %c0_9, %c0_10] : memref<1x3x10x8x128xbf16, #tpu.memory_space<vmem>>, vector<1x1x8x8x128xbf16>
    %7 = vector.shape_cast %6 : vector<1x1x8x8x128xbf16> to vector<8x8x128xbf16>
    %8 = vector.shape_cast %7 : vector<8x8x128xbf16> to vector<64x128xbf16>
    %c1_11 = arith.constant 1 : index
    %c0_12 = arith.constant 0 : index
    %c0_13 = arith.constant 0 : index
    %9 = vector.load %arg3[%c1_11, %c0_12, %c0_13] : memref<9x128x128xbf16, #tpu.memory_space<vmem>>, vector<1x128x128xbf16>
    %10 = vector.shape_cast %9 : vector<1x128x128xbf16> to vector<128x128xbf16>
    %cst_14 = arith.constant dense<0.000000e+00> : vector<64x128xf32>
    %11 = tpu.matmul %8, %10, %cst_14 {dimension_numbers = #tpu.dot_dimension_numbers<[1], [0], [0], [1], [0, 0, 1, 1], [], []>} : vector<64x128xbf16>, vector<128x128xbf16>, vector<64x128xf32> -> vector<64x128xf32>
    %12 = arith.addf %5, %11 : vector<64x128xf32>
    %c0_15 = arith.constant 0 : index
    %c2 = arith.constant 2 : index
    %c0_16 = arith.constant 0 : index
    %c0_17 = arith.constant 0 : index
    %c0_18 = arith.constant 0 : index
    %13 = vector.load %arg2[%c0_15, %c2, %c0_16, %c0_17, %c0_18] : memref<1x3x10x8x128xbf16, #tpu.memory_space<vmem>>, vector<1x1x8x8x128xbf16>
    %14 = vector.shape_cast %13 : vector<1x1x8x8x128xbf16> to vector<8x8x128xbf16>
    %15 = vector.shape_cast %14 : vector<8x8x128xbf16> to vector<64x128xbf16>
    %c2_19 = arith.constant 2 : index
    %c0_20 = arith.constant 0 : index
    %c0_21 = arith.constant 0 : index
    %16 = vector.load %arg3[%c2_19, %c0_20, %c0_21] : memref<9x128x128xbf16, #tpu.memory_space<vmem>>, vector<1x128x128xbf16>
    %17 = vector.shape_cast %16 : vector<1x128x128xbf16> to vector<128x128xbf16>
    %cst_22 = arith.constant dense<0.000000e+00> : vector<64x128xf32>
    %18 = tpu.matmul %15, %17, %cst_22 {dimension_numbers = #tpu.dot_dimension_numbers<[1], [0], [0], [1], [0, 0, 1, 1], [], []>} : vector<64x128xbf16>, vector<128x128xbf16>, vector<64x128xf32> -> vector<64x128xf32>
    %19 = arith.addf %12, %18 : vector<64x128xf32>
    %c0_23 = arith.constant 0 : index
    %c0_24 = arith.constant 0 : index
    %c1_25 = arith.constant 1 : index
    %c0_26 = arith.constant 0 : index
    %c0_27 = arith.constant 0 : index
    %20 = vector.load %arg2[%c0_23, %c0_24, %c1_25, %c0_26, %c0_27] : memref<1x3x10x8x128xbf16, #tpu.memory_space<vmem>>, vector<1x1x8x8x128xbf16>
    %21 = vector.shape_cast %20 : vector<1x1x8x8x128xbf16> to vector<8x8x128xbf16>
    %22 = vector.shape_cast %21 : vector<8x8x128xbf16> to vector<64x128xbf16>
    %c3 = arith.constant 3 : index
    %c0_28 = arith.constant 0 : index
    %c0_29 = arith.constant 0 : index
    %23 = vector.load %arg3[%c3, %c0_28, %c0_29] : memref<9x128x128xbf16, #tpu.memory_space<vmem>>, vector<1x128x128xbf16>
    %24 = vector.shape_cast %23 : vector<1x128x128xbf16> to vector<128x128xbf16>
    %cst_30 = arith.constant dense<0.000000e+00> : vector<64x128xf32>
    %25 = tpu.matmul %22, %24, %cst_30 {dimension_numbers = #tpu.dot_dimension_numbers<[1], [0], [0], [1], [0, 0, 1, 1], [], []>} : vector<64x128xbf16>, vector<128x128xbf16>, vector<64x128xf32> -> vector<64x128xf32>
    %26 = arith.addf %19, %25 : vector<64x128xf32>
    %c0_31 = arith.constant 0 : index
    %c1_32 = arith.constant 1 : index
    %c1_33 = arith.constant 1 : index
    %c0_34 = arith.constant 0 : index
    %c0_35 = arith.constant 0 : index
    %27 = vector.load %arg2[%c0_31, %c1_32, %c1_33, %c0_34, %c0_35] : memref<1x3x10x8x128xbf16, #tpu.memory_space<vmem>>, vector<1x1x8x8x128xbf16>
    %28 = vector.shape_cast %27 : vector<1x1x8x8x128xbf16> to vector<8x8x128xbf16>
    %29 = vector.shape_cast %28 : vector<8x8x128xbf16> to vector<64x128xbf16>
    %c4 = arith.constant 4 : index
    %c0_36 = arith.constant 0 : index
    %c0_37 = arith.constant 0 : index
    %30 = vector.load %arg3[%c4, %c0_36, %c0_37] : memref<9x128x128xbf16, #tpu.memory_space<vmem>>, vector<1x128x128xbf16>
    %31 = vector.shape_cast %30 : vector<1x128x128xbf16> to vector<128x128xbf16>
    %cst_38 = arith.constant dense<0.000000e+00> : vector<64x128xf32>
    %32 = tpu.matmul %29, %31, %cst_38 {dimension_numbers = #tpu.dot_dimension_numbers<[1], [0], [0], [1], [0, 0, 1, 1], [], []>} : vector<64x128xbf16>, vector<128x128xbf16>, vector<64x128xf32> -> vector<64x128xf32>
    %33 = arith.addf %26, %32 : vector<64x128xf32>
    %c0_39 = arith.constant 0 : index
    %c2_40 = arith.constant 2 : index
    %c1_41 = arith.constant 1 : index
    %c0_42 = arith.constant 0 : index
    %c0_43 = arith.constant 0 : index
    %34 = vector.load %arg2[%c0_39, %c2_40, %c1_41, %c0_42, %c0_43] : memref<1x3x10x8x128xbf16, #tpu.memory_space<vmem>>, vector<1x1x8x8x128xbf16>
    %35 = vector.shape_cast %34 : vector<1x1x8x8x128xbf16> to vector<8x8x128xbf16>
    %36 = vector.shape_cast %35 : vector<8x8x128xbf16> to vector<64x128xbf16>
    %c5 = arith.constant 5 : index
    %c0_44 = arith.constant 0 : index
    %c0_45 = arith.constant 0 : index
    %37 = vector.load %arg3[%c5, %c0_44, %c0_45] : memref<9x128x128xbf16, #tpu.memory_space<vmem>>, vector<1x128x128xbf16>
    %38 = vector.shape_cast %37 : vector<1x128x128xbf16> to vector<128x128xbf16>
    %cst_46 = arith.constant dense<0.000000e+00> : vector<64x128xf32>
    %39 = tpu.matmul %36, %38, %cst_46 {dimension_numbers = #tpu.dot_dimension_numbers<[1], [0], [0], [1], [0, 0, 1, 1], [], []>} : vector<64x128xbf16>, vector<128x128xbf16>, vector<64x128xf32> -> vector<64x128xf32>
    %40 = arith.addf %33, %39 : vector<64x128xf32>
    %c0_47 = arith.constant 0 : index
    %c0_48 = arith.constant 0 : index
    %c2_49 = arith.constant 2 : index
    %c0_50 = arith.constant 0 : index
    %c0_51 = arith.constant 0 : index
    %41 = vector.load %arg2[%c0_47, %c0_48, %c2_49, %c0_50, %c0_51] : memref<1x3x10x8x128xbf16, #tpu.memory_space<vmem>>, vector<1x1x8x8x128xbf16>
    %42 = vector.shape_cast %41 : vector<1x1x8x8x128xbf16> to vector<8x8x128xbf16>
    %43 = vector.shape_cast %42 : vector<8x8x128xbf16> to vector<64x128xbf16>
    %c6 = arith.constant 6 : index
    %c0_52 = arith.constant 0 : index
    %c0_53 = arith.constant 0 : index
    %44 = vector.load %arg3[%c6, %c0_52, %c0_53] : memref<9x128x128xbf16, #tpu.memory_space<vmem>>, vector<1x128x128xbf16>
    %45 = vector.shape_cast %44 : vector<1x128x128xbf16> to vector<128x128xbf16>
    %cst_54 = arith.constant dense<0.000000e+00> : vector<64x128xf32>
    %46 = tpu.matmul %43, %45, %cst_54 {dimension_numbers = #tpu.dot_dimension_numbers<[1], [0], [0], [1], [0, 0, 1, 1], [], []>} : vector<64x128xbf16>, vector<128x128xbf16>, vector<64x128xf32> -> vector<64x128xf32>
    %47 = arith.addf %40, %46 : vector<64x128xf32>
    %c0_55 = arith.constant 0 : index
    %c1_56 = arith.constant 1 : index
    %c2_57 = arith.constant 2 : index
    %c0_58 = arith.constant 0 : index
    %c0_59 = arith.constant 0 : index
    %48 = vector.load %arg2[%c0_55, %c1_56, %c2_57, %c0_58, %c0_59] : memref<1x3x10x8x128xbf16, #tpu.memory_space<vmem>>, vector<1x1x8x8x128xbf16>
    %49 = vector.shape_cast %48 : vector<1x1x8x8x128xbf16> to vector<8x8x128xbf16>
    %50 = vector.shape_cast %49 : vector<8x8x128xbf16> to vector<64x128xbf16>
    %c7 = arith.constant 7 : index
    %c0_60 = arith.constant 0 : index
    %c0_61 = arith.constant 0 : index
    %51 = vector.load %arg3[%c7, %c0_60, %c0_61] : memref<9x128x128xbf16, #tpu.memory_space<vmem>>, vector<1x128x128xbf16>
    %52 = vector.shape_cast %51 : vector<1x128x128xbf16> to vector<128x128xbf16>
    %cst_62 = arith.constant dense<0.000000e+00> : vector<64x128xf32>
    %53 = tpu.matmul %50, %52, %cst_62 {dimension_numbers = #tpu.dot_dimension_numbers<[1], [0], [0], [1], [0, 0, 1, 1], [], []>} : vector<64x128xbf16>, vector<128x128xbf16>, vector<64x128xf32> -> vector<64x128xf32>
    %54 = arith.addf %47, %53 : vector<64x128xf32>
    %c0_63 = arith.constant 0 : index
    %c2_64 = arith.constant 2 : index
    %c2_65 = arith.constant 2 : index
    %c0_66 = arith.constant 0 : index
    %c0_67 = arith.constant 0 : index
    %55 = vector.load %arg2[%c0_63, %c2_64, %c2_65, %c0_66, %c0_67] : memref<1x3x10x8x128xbf16, #tpu.memory_space<vmem>>, vector<1x1x8x8x128xbf16>
    %56 = vector.shape_cast %55 : vector<1x1x8x8x128xbf16> to vector<8x8x128xbf16>
    %57 = vector.shape_cast %56 : vector<8x8x128xbf16> to vector<64x128xbf16>
    %c8 = arith.constant 8 : index
    %c0_68 = arith.constant 0 : index
    %c0_69 = arith.constant 0 : index
    %58 = vector.load %arg3[%c8, %c0_68, %c0_69] : memref<9x128x128xbf16, #tpu.memory_space<vmem>>, vector<1x128x128xbf16>
    %59 = vector.shape_cast %58 : vector<1x128x128xbf16> to vector<128x128xbf16>
    %cst_70 = arith.constant dense<0.000000e+00> : vector<64x128xf32>
    %60 = tpu.matmul %57, %59, %cst_70 {dimension_numbers = #tpu.dot_dimension_numbers<[1], [0], [0], [1], [0, 0, 1, 1], [], []>} : vector<64x128xbf16>, vector<128x128xbf16>, vector<64x128xf32> -> vector<64x128xf32>
    %61 = arith.addf %54, %60 : vector<64x128xf32>
    %c0_71 = arith.constant 0 : index
    %c0_72 = arith.constant 0 : index
    %62 = vector.load %arg4[%c0_71, %c0_72] : memref<1x128xf32, #tpu.memory_space<vmem>>, vector<1x128xf32>
    %63 = vector.broadcast %62 : vector<1x128xf32> to vector<64x128xf32>
    %64 = arith.addf %61, %63 : vector<64x128xf32>
    %cst_73 = arith.constant 0.000000e+00 : f32
    %65 = vector.broadcast %cst_73 : f32 to vector<64x128xf32>
    %66 = arith.maximumf %64, %65 : vector<64x128xf32>
    %c0_74 = arith.constant 0 : index
    %c0_75 = arith.constant 0 : index
    %c0_76 = arith.constant 0 : index
    %67 = vector.load %arg5[%c0_74, %c0_75, %c0_76] : memref<1x64x128xbf16, #tpu.memory_space<vmem>>, vector<1x64x128xbf16>
    %68 = vector.shape_cast %67 : vector<1x64x128xbf16> to vector<64x128xbf16>
    %69 = arith.extf %68 : vector<64x128xbf16> to vector<64x128xf32>
    %70 = arith.addf %66, %69 : vector<64x128xf32>
    %cst_77 = arith.constant 0.000000e+00 : f32
    %71 = vector.broadcast %cst_77 : f32 to vector<64x128xf32>
    %72 = arith.maximumf %70, %71 : vector<64x128xf32>
    %73 = arith.truncf %72 : vector<64x128xf32> to vector<64x128xbf16>
    %c0_78 = arith.constant 0 : index
    %c0_79 = arith.constant 0 : index
    %c0_80 = arith.constant 0 : index
    %74 = vector.load %arg6[%c0_78, %c0_79, %c0_80] : memref<1x64x128xbf16, #tpu.memory_space<vmem>>, vector<1x64x128xbf16>
    %75 = vector.shape_cast %74 : vector<1x64x128xbf16> to vector<64x128xbf16>
    %76 = vector.shape_cast %73 : vector<64x128xbf16> to vector<1x64x128xbf16>
    tpu.vector_store %arg6[%c0_78, %c0_79, %c0_80], %76 {strides = array<i32>} : memref<1x64x128xbf16, #tpu.memory_space<vmem>>, vector<1x64x128xbf16>,
    return
  }
  func.func @transform_0(%arg0: i32, %arg1: i32) -> (i32, i32, i32, i32, i32) {
    %c0_i32 = arith.constant 0 : i32
    %c0_i32_0 = arith.constant 0 : i32
    %c0_i32_1 = arith.constant 0 : i32
    %c0_i32_2 = arith.constant 0 : i32
    %c0_i32_3 = arith.constant 0 : i32
    return %arg1, %c0_i32, %c0_i32_0, %c0_i32_1, %c0_i32_2 : i32, i32, i32, i32, i32
  }
  func.func @transform_1(%arg0: i32, %arg1: i32) -> (i32, i32, i32) {
    %c0_i32 = arith.constant 0 : i32
    %c0_i32_0 = arith.constant 0 : i32
    %c0_i32_1 = arith.constant 0 : i32
    return %c0_i32, %c0_i32_0, %arg0 : i32, i32, i32
  }
  func.func @transform_2(%arg0: i32, %arg1: i32) -> (i32, i32) {
    %c0_i32 = arith.constant 0 : i32
    %c0_i32_0 = arith.constant 0 : i32
    return %c0_i32, %arg0 : i32, i32
  }
  func.func @transform_3(%arg0: i32, %arg1: i32) -> (i32, i32, i32) {
    %c0_i32 = arith.constant 0 : i32
    %c0_i32_0 = arith.constant 0 : i32
    return %arg1, %c0_i32, %arg0 : i32, i32, i32
  }
  func.func @transform_4(%arg0: i32, %arg1: i32) -> (i32, i32, i32) {
    %c0_i32 = arith.constant 0 : i32
    %c0_i32_0 = arith.constant 0 : i32
    return %arg1, %c0_i32, %arg0 : i32, i32, i32
  }
}

</mosaic_0001>

<llo_original>
// kernel: resnet_layer_forward.4
$region0: #{resnet_layer_forward.4}
  #allocation0 [shape = 'u32[]', space=smem, size = 0x4, offset = 0x4, fixed_abs, tag = 'smem constant byte address 0x4 - core index']
  #allocation1 [shape = 'u32[72,128]{1,0:T(1,128)}', space=vmem, size = 0x9000, scoped, tag = 'internal scratch']
  %s0 = inlined_call_operand.vmem [shape: bf16[2,6,9,8,128], index: 0, kind: input, shape index: {}]
  %s1 = inlined_call_operand.vmem [shape: bf16[9,128,128], index: 1, kind: input, shape index: {}]
  %s2 = inlined_call_operand.vmem [shape: f32[1,128], index: 2, kind: input, shape index: {}]
  %s3 = inlined_call_operand.vmem [shape: bf16[2,64,128], index: 3, kind: output, shape index: {}]
  %s4 = sld [smem:[#allocation0]]
  $region45: #{resnet_layer_forward.4} parent=0
    _
  %s6 = ssub.s32 1, %s4
  %s7 = scalar_select 0, %s6, %s4
  loop: start=0, step=1, limit=4
  $region2: #{resnet_layer_forward.4} parent=0 // loop_pre_header
    _
  $region3: #{resnet_layer_forward.4} parent=0 // loop_header
    %s9 = sphi 0, %s13
    %p10 = scmp.ge.s32.totalorder %s9, 4
    %s16 = sphi 0, %s28
    %s17 = sphi 0, %s24
    %s18 = sphi 0, %s16
    %s19 = sphi 0, %s17
    %s20 = sphi 0, %s18
    %s21 = sphi 0, %s19
    %s31 = sphi 0, %s33
    %s34 = sphi 0, %s31
    %s35 = sphi 0, %s34
    %s51 = sphi 0, %s35
    %s57 = sphi 0, %s59
    %s60 = sphi 0, %s57
    %s61 = sphi 0, %s60
    %s77 = sphi 0, %s61
    %s83 = sphi 0, %s85
    %s86 = sphi 0, %s83
    %s87 = sphi 0, %s86
    %s103 = sphi 0, %s87
    %s111 = sphi 0, %s113
    %s114 = sphi 0, %s111
    %s115 = sphi 0, %s114
    %s131 = sphi 0, %s115
  $region4: #{resnet_layer_forward.4} parent=0 // loop_header_branch
    %12 = sbr.rel (%p10) target = $region8
  $region5: #{resnet_layer_forward.4} parent=0 // loop_body
    %s14 = ssub.s32 %s9, 1
    %s15 = ssub.s32 %s9, 2
    %s22 = sadd.s32 1, %s17
    %p23 = scmp.ge.s32.totalorder %s22, 2
    %s24 = scalar_select %p23, 0, %s22
    %s25 = sadd.s32 1, %s16
    %s26 = scalar_select %p23, %s25, %s16
    %p27 = scmp.ge.s32.totalorder %s26, 1
    %s28 = scalar_select %p27, 0, %s26
    %s29 = ssub.s32 %s17, %s24
    %p30 = scmp.eq.s32.totalorder %s29, 0
    %s32 = sadd.s32 %s31, 1
    %s33 = scalar_select %p30, %s31, %s32
    %p36 = pneg %p30
    %p37 = scmp.eq.s32.totalorder %s9, 1
    %p38 = por %p36, %p37
    %p39 = scmp.ne.s32.totalorder %s31, %s34
    %p40 = scmp.eq.s32.totalorder %s9, 0
    %p41 = por %p39, %p40
    %p42 = scmp.ne.s32.totalorder %s31, %s34
    %p43 = scmp.eq.s32.totalorder %s14, 1
    %p44 = por %p42, %p43
    %p45 = scmp.ne.s32.totalorder %s34, %s35
    %p46 = scmp.eq.s32.totalorder %s14, 0
    %p47 = por %p45, %p46
    %p48 = scmp.ne.s32.totalorder %s34, %s35
    %p49 = scmp.eq.s32.totalorder %s15, 1
    %p50 = por %p48, %p49
    %p52 = scmp.ne.s32.totalorder %s35, %s51
    %p53 = scmp.eq.s32.totalorder %s15, 0
    %p54 = por %p52, %p53
    %s55 = ssub.s32 %s16, %s28
    %p56 = scmp.eq.s32.totalorder %s55, 0
    %s58 = sadd.s32 %s57, 1
    %s59 = scalar_select %p56, %s57, %s58
    %p62 = pneg %p56
    %p63 = scmp.eq.s32.totalorder %s9, 1
    %p64 = por %p62, %p63
    %p65 = scmp.ne.s32.totalorder %s57, %s60
    %p66 = scmp.eq.s32.totalorder %s9, 0
    %p67 = por %p65, %p66
    %p68 = scmp.ne.s32.totalorder %s57, %s60
    %p69 = scmp.eq.s32.totalorder %s14, 1
    %p70 = por %p68, %p69
    %p71 = scmp.ne.s32.totalorder %s60, %s61
    %p72 = scmp.eq.s32.totalorder %s14, 0
    %p73 = por %p71, %p72
    %p74 = scmp.ne.s32.totalorder %s60, %s61
    %p75 = scmp.eq.s32.totalorder %s15, 1
    %p76 = por %p74, %p75
    %p78 = scmp.ne.s32.totalorder %s61, %s77
    %p79 = scmp.eq.s32.totalorder %s15, 0
    %p80 = por %p78, %p79
    %s81 = ssub.s32 %s16, %s28
    %p82 = scmp.eq.s32.totalorder %s81, 0
    %s84 = sadd.s32 %s83, 1
    %s85 = scalar_select %p82, %s83, %s84
    %p88 = pneg %p82
    %p89 = scmp.eq.s32.totalorder %s9, 1
    %p90 = por %p88, %p89
    %p91 = scmp.ne.s32.totalorder %s83, %s86
    %p92 = scmp.eq.s32.totalorder %s9, 0
    %p93 = por %p91, %p92
    %p94 = scmp.ne.s32.totalorder %s83, %s86
    %p95 = scmp.eq.s32.totalorder %s14, 1
    %p96 = por %p94, %p95
    %p97 = scmp.ne.s32.totalorder %s86, %s87
    %p98 = scmp.eq.s32.totalorder %s14, 0
    %p99 = por %p97, %p98
    %p100 = scmp.ne.s32.totalorder %s86, %s87
    %p101 = scmp.eq.s32.totalorder %s15, 1
    %p102 = por %p100, %p101
    %p104 = scmp.ne.s32.totalorder %s87, %s103
    %p105 = scmp.eq.s32.totalorder %s15, 0
    %p106 = por %p104, %p105
    %s107 = ssub.s32 %s17, %s24
    %s108 = ssub.s32 %s16, %s28
    %s109 = sor.u32 %s107, %s108
    %p110 = scmp.eq.s32.totalorder %s109, 0
    %s112 = sadd.s32 %s111, 1
    %s113 = scalar_select %p110, %s111, %s112
    %p116 = pneg %p110
    %p117 = scmp.eq.s32.totalorder %s9, 1
    %p118 = por %p116, %p117
    %p119 = scmp.ne.s32.totalorder %s111, %s114
    %p120 = scmp.eq.s32.totalorder %s9, 0
    %p121 = por %p119, %p120
    %p122 = scmp.ne.s32.totalorder %s111, %s114
    %p123 = scmp.eq.s32.totalorder %s14, 1
    %p124 = por %p122, %p123
    %p125 = scmp.ne.s32.totalorder %s114, %s115
    %p126 = scmp.eq.s32.totalorder %s14, 0
    %p127 = por %p125, %p126
    %p128 = scmp.ne.s32.totalorder %s114, %s115
    %p129 = scmp.eq.s32.totalorder %s15, 1
    %p130 = por %p128, %p129
    %p132 = scmp.ne.s32.totalorder %s115, %s131
    %p133 = scmp.eq.s32.totalorder %s15, 0
    %p134 = por %p132, %p133
    %p135 = scmp.le.s32.totalorder 1, %s9
    %p136 = scmp.lt.s32.totalorder %s9, 3
    %p137 = pnand %p135, %p136
    %p138 = pneg %p137
    // Predicated region
    $region9: #{resnet_layer_forward.4} parent=5 // pred_check
      _
    $region10: #{resnet_layer_forward.4} parent=5 // pred_check_branch
      %140 = sbr.rel (%p137) target = $region12
    $region11: #{resnet_layer_forward.4} parent=5 // pred_region
      %s141 = ssub.s32 %s9, 1
      // Predicated region
      $region13: #{resnet_layer_forward.4} parent=11 // pred_check
        %p142 = pneg %p73
      $region14: #{resnet_layer_forward.4} parent=11 // pred_check_branch
        %144 = sbr.rel (%p142) target = $region16
      $region15: #{resnet_layer_forward.4} parent=11 // pred_region
        %p145 = scmp.lt.s32.totalorder %s18, 0
        %s146 = scalar_select %p145, %s18, 0
        %s147 = smul.addr %s146, 4
        %s148 = scalar_lea.vmem %s1, %s147
      $region16: #{resnet_layer_forward.4} parent=11 // pred_fallthru
        _
      // Predicated region
      $region17: #{resnet_layer_forward.4} parent=11 // pred_check
        %p149 = pneg %p99
      $region18: #{resnet_layer_forward.4} parent=11 // pred_check_branch
        %151 = sbr.rel (%p149) target = $region20
      $region19: #{resnet_layer_forward.4} parent=11 // pred_region
        %p152 = scmp.lt.s32.totalorder %s18, 0
        %s153 = scalar_select %p152, %s18, 0
        %s154 = scalar_lea.vmem %s2, %s153
      $region20: #{resnet_layer_forward.4} parent=11 // pred_fallthru
        _
    $region12: #{resnet_layer_forward.4} parent=5 // pred_fallthru
      _
    %p155 = scmp.lt.s32.totalorder %s9, 2
    // Predicated region
    $region21: #{resnet_layer_forward.4} parent=5 // pred_check
      %p156 = pneg %p155
    $region22: #{resnet_layer_forward.4} parent=5 // pred_check_branch
      %158 = sbr.rel (%p156) target = $region24
    $region23: #{resnet_layer_forward.4} parent=5 // pred_region
      // Predicated region
      $region25: #{resnet_layer_forward.4} parent=23 // pred_check
        %p159 = pneg %p41
      $region26: #{resnet_layer_forward.4} parent=23 // pred_check_branch
        %161 = sbr.rel (%p159) target = $region28
      $region27: #{resnet_layer_forward.4} parent=23 // pred_region
        %p162 = scmp.lt.s32.totalorder %s17, 1
        %s163 = scalar_select %p162, %s17, 1
        %s164 = smul.addr %s163, 54
        %s165 = smul.addr %s164, 4
        %s166 = scalar_lea.vmem %s0, %s165
      $region28: #{resnet_layer_forward.4} parent=23 // pred_fallthru
        _
    $region24: #{resnet_layer_forward.4} parent=5 // pred_fallthru
      _
    %p167 = scmp.le.s32.totalorder 1, %s9
    %p168 = scmp.lt.s32.totalorder %s9, 3
    %p169 = pnand %p167, %p168
    %p170 = pneg %p169
    // Predicated region
    $region29: #{resnet_layer_forward.4} parent=5 // pred_check
      _
    $region30: #{resnet_layer_forward.4} parent=5 // pred_check_branch
      %172 = sbr.rel (%p169) target = $region32
    $region31: #{resnet_layer_forward.4} parent=5 // pred_region
      %s173 = ssub.s32 %s9, 1
      %p174 = scmp.lt.s32.totalorder %s19, 1
      %s175 = scalar_select %p174, %s19, 1
      %s176 = smul.addr %s175, 54
      %s177 = smul.addr %s176, 4
      %s178 = scalar_lea.vmem %s0, %s177
      %p179 = pneg %p47
      %p180 = pneg %p44
      %p181 = scmp.lt.s32.totalorder %s18, 0
      %s182 = scalar_select %p181, %s18, 0
      %s183 = smul.addr %s182, 4
      %s184 = scalar_lea.vmem %s1, %s183
      %p185 = pneg %p73
      %p186 = pneg %p70
      %p187 = scmp.lt.s32.totalorder %s18, 0
      %s188 = scalar_select %p187, %s18, 0
      %s189 = scalar_lea.vmem %s2, %s188
      %p190 = pneg %p99
      %p191 = pneg %p96
      %p192 = pneg %p127
      %p193 = pneg %p124
      %p194 = scmp.lt.s32.totalorder %s19, 1
      %s195 = scalar_select %p194, %s19, 1
      %p196 = scmp.lt.s32.totalorder %s18, 0
      %s197 = scalar_select %p196, %s18, 0
      %s198 = smul.addr %s195, 8
      %s199 = sadd.s32 %s197, %s198
      %s200 = smul.addr %s199, 4
      %s201 = scalar_lea.vmem %s3, %s200
      %p202 = scmp.lt.s32.totalorder %s19, 1
      %s203 = scalar_select %p202, %s19, 1
      %s204 = smul.addr %s203, 54
      %s205 = smul.addr %s204, 4
      %s206 = scalar_lea.vmem %s0, %s205
      %p207 = scmp.lt.s32.totalorder %s18, 0
      %s208 = scalar_select %p207, %s18, 0
      %s209 = smul.addr %s208, 4
      %s210 = scalar_lea.vmem %s1, %s209
      %p211 = scmp.lt.s32.totalorder %s18, 0
      %s212 = scalar_select %p211, %s18, 0
      %s213 = scalar_lea.vmem %s2, %s212
      %p214 = scmp.lt.s32.totalorder %s19, 1
      %s215 = scalar_select %p214, %s19, 1
      %p216 = scmp.lt.s32.totalorder %s18, 0
      %s217 = scalar_select %p216, %s18, 0
      %s218 = smul.addr %s215, 8
      %s219 = sadd.s32 %s217, %s218
      %s220 = smul.addr %s219, 4
      %s221 = scalar_lea.vmem %s3, %s220
      %v222 = vld [vmem:[%s206] sm:$0xf]
      %v223 = vld [vmem:[%s206 + $0x4] sm:$0xf]
      %v224 = vld [vmem:[%s206 + $0x8] sm:$0xf]
      %v225 = vld [vmem:[%s206 + $0xc] sm:$0xf]
      %v226 = vld [vmem:[%s206 + $0x10] sm:$0xf]
      %v227 = vld [vmem:[%s206 + $0x14] sm:$0xf]
      %v228 = vld [vmem:[%s206 + $0x18] sm:$0xf]
      %v229 = vld [vmem:[%s206 + $0x1c] sm:$0xf]
      %v230 = vld [vmem:[%s210] sm:$0xf]
      %v231 = vld [vmem:[%s210 + $0x4] sm:$0xf]
      %v232 = vld [vmem:[%s210 + $0x8] sm:$0xf]
      %v233 = vld [vmem:[%s210 + $0xc] sm:$0xf]
      %v234 = vld [vmem:[%s210 + $0x10] sm:$0xf]
      %v235 = vld [vmem:[%s210 + $0x14] sm:$0xf]
      %v236 = vld [vmem:[%s210 + $0x18] sm:$0xf]
      %v237 = vld [vmem:[%s210 + $0x1c] sm:$0xf]
      %v238 = vld [vmem:[%s210 + $0x20] sm:$0xf]
      %v239 = vld [vmem:[%s210 + $0x24] sm:$0xf]
      %v240 = vld [vmem:[%s210 + $0x28] sm:$0xf]
      %v241 = vld [vmem:[%s210 + $0x2c] sm:$0xf]
      %v242 = vld [vmem:[%s210 + $0x30] sm:$0xf]
      %v243 = vld [vmem:[%s210 + $0x34] sm:$0xf]
      %v244 = vld [vmem:[%s210 + $0x38] sm:$0xf]
      %v245 = vld [vmem:[%s210 + $0x3c] sm:$0xf]
      %s246 = scalar_lea.vmem %s206, 36
      %v247 = vld [vmem:[%s246] sm:$0xf]
      %v248 = vld [vmem:[%s246 + $0x4] sm:$0xf]
      %v249 = vld [vmem:[%s246 + $0x8] sm:$0xf]
      %v250 = vld [vmem:[%s246 + $0xc] sm:$0xf]
      %v251 = vld [vmem:[%s246 + $0x10] sm:$0xf]
      %v252 = vld [vmem:[%s246 + $0x14] sm:$0xf]
      %v253 = vld [vmem:[%s246 + $0x18] sm:$0xf]
      %v254 = vld [vmem:[%s246 + $0x1c] sm:$0xf]
      %s255 = scalar_lea.vmem %s210, 64
      %v256 = vld [vmem:[%s255] sm:$0xf]
      %v257 = vld [vmem:[%s255 + $0x4] sm:$0xf]
      %v258 = vld [vmem:[%s255 + $0x8] sm:$0xf]
      %v259 = vld [vmem:[%s255 + $0xc] sm:$0xf]
      %v260 = vld [vmem:[%s255 + $0x10] sm:$0xf]
      %v261 = vld [vmem:[%s255 + $0x14] sm:$0xf]
      %v262 = vld [vmem:[%s255 + $0x18] sm:$0xf]
      %v263 = vld [vmem:[%s255 + $0x1c] sm:$0xf]
      %v264 = vld [vmem:[%s255 + $0x20] sm:$0xf]
      %v265 = vld [vmem:[%s255 + $0x24] sm:$0xf]
      %v266 = vld [vmem:[%s255 + $0x28] sm:$0xf]
      %v267 = vld [vmem:[%s255 + $0x2c] sm:$0xf]
      %v268 = vld [vmem:[%s255 + $0x30] sm:$0xf]
      %v269 = vld [vmem:[%s255 + $0x34] sm:$0xf]
      %v270 = vld [vmem:[%s255 + $0x38] sm:$0xf]
      %v271 = vld [vmem:[%s255 + $0x3c] sm:$0xf]
      %v280 = vunpack.c.l.b16 %v247
      %v281 = vunpack.c.l.b16 %v248
      %v282 = vunpack.c.l.b16 %v249
      %v283 = vunpack.c.l.b16 %v250
      %v284 = vunpack.c.l.b16 %v251
      %v285 = vunpack.c.l.b16 %v252
      %v286 = vunpack.c.l.b16 %v253
      %v287 = vunpack.c.l.b16 %v254
      %v288 = vpack.c.b16 %v281, %v280
      %v289 = vpack.c.b16 %v283, %v282
      %v290 = vpack.c.b16 %v285, %v284
      %v291 = vpack.c.b16 %v287, %v286
      %v312 = vunpack.c.l.b16 %v256
      %v313 = vunpack.c.l.b16 %v257
      %v314 = vunpack.c.l.b16 %v258
      %v315 = vunpack.c.l.b16 %v259
      %v316 = vunpack.c.l.b16 %v260
      %v317 = vunpack.c.l.b16 %v261
      %v318 = vunpack.c.l.b16 %v262
      %v319 = vunpack.c.l.b16 %v263
      %v320 = vunpack.c.l.b16 %v264
      %v321 = vunpack.c.l.b16 %v265
      %v322 = vunpack.c.l.b16 %v266
      %v323 = vunpack.c.l.b16 %v267
      %v324 = vunpack.c.l.b16 %v268
      %v325 = vunpack.c.l.b16 %v269
      %v326 = vunpack.c.l.b16 %v270
      %v327 = vunpack.c.l.b16 %v271
      %v328 = vpack.c.b16 %v313, %v312
      %v329 = vpack.c.b16 %v315, %v314
      %v330 = vpack.c.b16 %v317, %v316
      %v331 = vpack.c.b16 %v319, %v318
      %v332 = vpack.c.b16 %v321, %v320
      %v333 = vpack.c.b16 %v323, %v322
      %v334 = vpack.c.b16 %v325, %v324
      %v335 = vpack.c.b16 %v327, %v326
      %344 = vmatpush.bf16.msra.mxu0 %v335
      %345 = vmatpush.bf16.msra.mxu0 %v334
      %346 = vmatpush.bf16.msra.mxu0 %v333
      %347 = vmatpush.bf16.msra.mxu0 %v332
      %348 = vmatpush.bf16.msra.mxu0 %v331
      %349 = vmatpush.bf16.msra.mxu0 %v330
      %350 = vmatpush.bf16.msra.mxu0 %v329
      %351 = vmatpush.bf16.msra.mxu0 %v328
      %352 = vmatmul.bf16.gmra.mxu0 %v288
      %v353 = vpop.f32.mrf.mxu0
      %v354 = vadd.f32 0.0, %v353
      %v355 = vpop.f32.mrf.mxu0
      %v356 = vadd.f32 0.0, %v355
      %357 = vmatmul.bf16.gmra.mxu0 %v289
      %v358 = vpop.f32.mrf.mxu0
      %v359 = vadd.f32 0.0, %v358
      %v360 = vpop.f32.mrf.mxu0
      %v361 = vadd.f32 0.0, %v360
      %362 = vmatmul.bf16.gmra.mxu0 %v290
      %v363 = vpop.f32.mrf.mxu0
      %v364 = vadd.f32 0.0, %v363
      %v365 = vpop.f32.mrf.mxu0
      %v366 = vadd.f32 0.0, %v365
      %367 = vmatmul.bf16.gmra.mxu0 %v291
      %v368 = vpop.f32.mrf.mxu0
      %v369 = vadd.f32 0.0, %v368
      %v370 = vpop.f32.mrf.mxu0
      %v371 = vadd.f32 0.0, %v370
      %372 = vdwg.mxu0
      %v381 = vunpack.c.l.b16 %v222
      %v382 = vunpack.c.l.b16 %v223
      %v383 = vunpack.c.l.b16 %v224
      %v384 = vunpack.c.l.b16 %v225
      %v385 = vunpack.c.l.b16 %v226
      %v386 = vunpack.c.l.b16 %v227
      %v387 = vunpack.c.l.b16 %v228
      %v388 = vunpack.c.l.b16 %v229
      %v389 = vpack.c.b16 %v382, %v381
      %v390 = vpack.c.b16 %v384, %v383
      %v391 = vpack.c.b16 %v386, %v385
      %v392 = vpack.c.b16 %v388, %v387
      %v413 = vunpack.c.l.b16 %v230
      %v414 = vunpack.c.l.b16 %v231
      %v415 = vunpack.c.l.b16 %v232
      %v416 = vunpack.c.l.b16 %v233
      %v417 = vunpack.c.l.b16 %v234
      %v418 = vunpack.c.l.b16 %v235
      %v419 = vunpack.c.l.b16 %v236
      %v420 = vunpack.c.l.b16 %v237
      %v421 = vunpack.c.l.b16 %v238
      %v422 = vunpack.c.l.b16 %v239
      %v423 = vunpack.c.l.b16 %v240
      %v424 = vunpack.c.l.b16 %v241
      %v425 = vunpack.c.l.b16 %v242
      %v426 = vunpack.c.l.b16 %v243
      %v427 = vunpack.c.l.b16 %v244
      %v428 = vunpack.c.l.b16 %v245
      %v429 = vpack.c.b16 %v414, %v413
      %v430 = vpack.c.b16 %v416, %v415
      %v431 = vpack.c.b16 %v418, %v417
      %v432 = vpack.c.b16 %v420, %v419
      %v433 = vpack.c.b16 %v422, %v421
      %v434 = vpack.c.b16 %v424, %v423
      %v435 = vpack.c.b16 %v426, %v425
      %v436 = vpack.c.b16 %v428, %v427
      %445 = vmatpush.bf16.msra.mxu0 %v436
      %446 = vmatpush.bf16.msra.mxu0 %v435
      %447 = vmatpush.bf16.msra.mxu0 %v434
      %448 = vmatpush.bf16.msra.mxu0 %v433
      %449 = vmatpush.bf16.msra.mxu0 %v432
      %450 = vmatpush.bf16.msra.mxu0 %v431
      %451 = vmatpush.bf16.msra.mxu0 %v430
      %452 = vmatpush.bf16.msra.mxu0 %v429
      %453 = vmatmul.bf16.gmra.mxu0 %v389
      %v454 = vpop.f32.mrf.mxu0
      %v455 = vadd.f32 %v354, %v454
      %v456 = vpop.f32.mrf.mxu0
      %v457 = vadd.f32 %v356, %v456
      %458 = vmatmul.bf16.gmra.mxu0 %v390
      %v459 = vpop.f32.mrf.mxu0
      %v460 = vadd.f32 %v359, %v459
      %v461 = vpop.f32.mrf.mxu0
      %v462 = vadd.f32 %v361, %v461
      %463 = vmatmul.bf16.gmra.mxu0 %v391
      %v464 = vpop.f32.mrf.mxu0
      %v465 = vadd.f32 %v364, %v464
      %v466 = vpop.f32.mrf.mxu0
      %v467 = vadd.f32 %v366, %v466
      %468 = vmatmul.bf16.gmra.mxu0 %v392
      %v469 = vpop.f32.mrf.mxu0
      %v470 = vadd.f32 %v369, %v469
      %v471 = vpop.f32.mrf.mxu0
      %v472 = vadd.f32 %v371, %v471
      %473 = vdwg.mxu0
      %s474 = scalar_lea.vmem %s206, 72
      %v475 = vld [vmem:[%s474] sm:$0xf]
      %v476 = vld [vmem:[%s474 + $0x4] sm:$0xf]
      %v477 = vld [vmem:[%s474 + $0x8] sm:$0xf]
      %v478 = vld [vmem:[%s474 + $0xc] sm:$0xf]
      %v479 = vld [vmem:[%s474 + $0x10] sm:$0xf]
      %v480 = vld [vmem:[%s474 + $0x14] sm:$0xf]
      %v481 = vld [vmem:[%s474 + $0x18] sm:$0xf]
      %v482 = vld [vmem:[%s474 + $0x1c] sm:$0xf]
      %s483 = scalar_lea.vmem %s210, 128
      %v484 = vld [vmem:[%s483] sm:$0xf]
      %v485 = vld [vmem:[%s483 + $0x4] sm:$0xf]
      %v486 = vld [vmem:[%s483 + $0x8] sm:$0xf]
      %v487 = vld [vmem:[%s483 + $0xc] sm:$0xf]
      %v488 = vld [vmem:[%s483 + $0x10] sm:$0xf]
      %v489 = vld [vmem:[%s483 + $0x14] sm:$0xf]
      %v490 = vld [vmem:[%s483 + $0x18] sm:$0xf]
      %v491 = vld [vmem:[%s483 + $0x1c] sm:$0xf]
      %v492 = vld [vmem:[%s483 + $0x20] sm:$0xf]
      %v493 = vld [vmem:[%s483 + $0x24] sm:$0xf]
      %v494 = vld [vmem:[%s483 + $0x28] sm:$0xf]
      %v495 = vld [vmem:[%s483 + $0x2c] sm:$0xf]
      %v496 = vld [vmem:[%s483 + $0x30] sm:$0xf]
      %v497 = vld [vmem:[%s483 + $0x34] sm:$0xf]
      %v498 = vld [vmem:[%s483 + $0x38] sm:$0xf]
      %v499 = vld [vmem:[%s483 + $0x3c] sm:$0xf]
      %v508 = vunpack.c.l.b16 %v475
      %v509 = vunpack.c.l.b16 %v476
      %v510 = vunpack.c.l.b16 %v477
      %v511 = vunpack.c.l.b16 %v478
      %v512 = vunpack.c.l.b16 %v479
      %v513 = vunpack.c.l.b16 %v480
      %v514 = vunpack.c.l.b16 %v481
      %v515 = vunpack.c.l.b16 %v482
      %v516 = vpack.c.b16 %v509, %v508
      %v517 = vpack.c.b16 %v511, %v510
      %v518 = vpack.c.b16 %v513, %v512
      %v519 = vpack.c.b16 %v515, %v514
      %v540 = vunpack.c.l.b16 %v484
      %v541 = vunpack.c.l.b16 %v485
      %v542 = vunpack.c.l.b16 %v486
      %v543 = vunpack.c.l.b16 %v487
      %v544 = vunpack.c.l.b16 %v488
      %v545 = vunpack.c.l.b16 %v489
      %v546 = vunpack.c.l.b16 %v490
      %v547 = vunpack.c.l.b16 %v491
      %v548 = vunpack.c.l.b16 %v492
      %v549 = vunpack.c.l.b16 %v493
      %v550 = vunpack.c.l.b16 %v494
      %v551 = vunpack.c.l.b16 %v495
      %v552 = vunpack.c.l.b16 %v496
      %v553 = vunpack.c.l.b16 %v497
      %v554 = vunpack.c.l.b16 %v498
      %v555 = vunpack.c.l.b16 %v499
      %v556 = vpack.c.b16 %v541, %v540
      %v557 = vpack.c.b16 %v543, %v542
      %v558 = vpack.c.b16 %v545, %v544
      %v559 = vpack.c.b16 %v547, %v546
      %v560 = vpack.c.b16 %v549, %v548
      %v561 = vpack.c.b16 %v551, %v550
      %v562 = vpack.c.b16 %v553, %v552
      %v563 = vpack.c.b16 %v555, %v554
      %572 = vmatpush.bf16.msra.mxu0 %v563
      %573 = vmatpush.bf16.msra.mxu0 %v562
      %574 = vmatpush.bf16.msra.mxu0 %v561
      %575 = vmatpush.bf16.msra.mxu0 %v560
      %576 = vmatpush.bf16.msra.mxu0 %v559
      %577 = vmatpush.bf16.msra.mxu0 %v558
      %578 = vmatpush.bf16.msra.mxu0 %v557
      %579 = vmatpush.bf16.msra.mxu0 %v556
      %580 = vmatmul.bf16.gmra.mxu0 %v516
      %v581 = vpop.f32.mrf.mxu0
      %v582 = vadd.f32 0.0, %v581
      %v583 = vpop.f32.mrf.mxu0
      %v584 = vadd.f32 0.0, %v583
      %585 = vmatmul.bf16.gmra.mxu0 %v517
      %v586 = vpop.f32.mrf.mxu0
      %v587 = vadd.f32 0.0, %v586
      %v588 = vpop.f32.mrf.mxu0
      %v589 = vadd.f32 0.0, %v588
      %590 = vmatmul.bf16.gmra.mxu0 %v518
      %v591 = vpop.f32.mrf.mxu0
      %v592 = vadd.f32 0.0, %v591
      %v593 = vpop.f32.mrf.mxu0
      %v594 = vadd.f32 0.0, %v593
      %595 = vmatmul.bf16.gmra.mxu0 %v519
      %v596 = vpop.f32.mrf.mxu0
      %v597 = vadd.f32 0.0, %v596
      %v598 = vpop.f32.mrf.mxu0
      %v599 = vadd.f32 0.0, %v598
      %600 = vdwg.mxu0
      %v601 = vadd.f32 %v455, %v582
      %v602 = vadd.f32 %v457, %v584
      %v603 = vadd.f32 %v460, %v587
      %v604 = vadd.f32 %v462, %v589
      %v605 = vadd.f32 %v465, %v592
      %v606 = vadd.f32 %v467, %v594
      %v607 = vadd.f32 %v470, %v597
      %v608 = vadd.f32 %v472, %v599
      %s609 = scalar_lea.vmem %s206, 108
      %v610 = vld [vmem:[%s609] sm:$0xf]
      %v611 = vld [vmem:[%s609 + $0x4] sm:$0xf]
      %v612 = vld [vmem:[%s609 + $0x8] sm:$0xf]
      %v613 = vld [vmem:[%s609 + $0xc] sm:$0xf]
      %v614 = vld [vmem:[%s609 + $0x10] sm:$0xf]
      %v615 = vld [vmem:[%s609 + $0x14] sm:$0xf]
      %v616 = vld [vmem:[%s609 + $0x18] sm:$0xf]
      %v617 = vld [vmem:[%s609 + $0x1c] sm:$0xf]
      %s618 = scalar_lea.vmem %s210, 192
      %v619 = vld [vmem:[%s618] sm:$0xf]
      %v620 = vld [vmem:[%s618 + $0x4] sm:$0xf]
      %v621 = vld [vmem:[%s618 + $0x8] sm:$0xf]
      %v622 = vld [vmem:[%s618 + $0xc] sm:$0xf]
      %v623 = vld [vmem:[%s618 + $0x10] sm:$0xf]
      %v624 = vld [vmem:[%s618 + $0x14] sm:$0xf]
      %v625 = vld [vmem:[%s618 + $0x18] sm:$0xf]
      %v626 = vld [vmem:[%s618 + $0x1c] sm:$0xf]
      %v627 = vld [vmem:[%s618 + $0x20] sm:$0xf]
      %v628 = vld [vmem:[%s618 + $0x24] sm:$0xf]
      %v629 = vld [vmem:[%s618 + $0x28] sm:$0xf]
      %v630 = vld [vmem:[%s618 + $0x2c] sm:$0xf]
      %v631 = vld [vmem:[%s618 + $0x30] sm:$0xf]
      %v632 = vld [vmem:[%s618 + $0x34] sm:$0xf]
      %v633 = vld [vmem:[%s618 + $0x38] sm:$0xf]
      %v634 = vld [vmem:[%s618 + $0x3c] sm:$0xf]
      %v643 = vunpack.c.l.b16 %v610
      %v644 = vunpack.c.l.b16 %v611
      %v645 = vunpack.c.l.b16 %v612
      %v646 = vunpack.c.l.b16 %v613
      %v647 = vunpack.c.l.b16 %v614
      %v648 = vunpack.c.l.b16 %v615
      %v649 = vunpack.c.l.b16 %v616
      %v650 = vunpack.c.l.b16 %v617
      %v651 = vpack.c.b16 %v644, %v643
      %v652 = vpack.c.b16 %v646, %v645
      %v653 = vpack.c.b16 %v648, %v647
      %v654 = vpack.c.b16 %v650, %v649
      %v675 = vunpack.c.l.b16 %v619
      %v676 = vunpack.c.l.b16 %v620
      %v677 = vunpack.c.l.b16 %v621
      %v678 = vunpack.c.l.b16 %v622
      %v679 = vunpack.c.l.b16 %v623
      %v680 = vunpack.c.l.b16 %v624
      %v681 = vunpack.c.l.b16 %v625
      %v682 = vunpack.c.l.b16 %v626
      %v683 = vunpack.c.l.b16 %v627
      %v684 = vunpack.c.l.b16 %v628
      %v685 = vunpack.c.l.b16 %v629
      %v686 = vunpack.c.l.b16 %v630
      %v687 = vunpack.c.l.b16 %v631
      %v688 = vunpack.c.l.b16 %v632
      %v689 = vunpack.c.l.b16 %v633
      %v690 = vunpack.c.l.b16 %v634
      %v691 = vpack.c.b16 %v676, %v675
      %v692 = vpack.c.b16 %v678, %v677
      %v693 = vpack.c.b16 %v680, %v679
      %v694 = vpack.c.b16 %v682, %v681
      %v695 = vpack.c.b16 %v684, %v683
      %v696 = vpack.c.b16 %v686, %v685
      %v697 = vpack.c.b16 %v688, %v687
      %v698 = vpack.c.b16 %v690, %v689
      %707 = vmatpush.bf16.msra.mxu0 %v698
      %708 = vmatpush.bf16.msra.mxu0 %v697
      %709 = vmatpush.bf16.msra.mxu0 %v696
      %710 = vmatpush.bf16.msra.mxu0 %v695
      %711 = vmatpush.bf16.msra.mxu0 %v694
      %712 = vmatpush.bf16.msra.mxu0 %v693
      %713 = vmatpush.bf16.msra.mxu0 %v692
      %714 = vmatpush.bf16.msra.mxu0 %v691
      %715 = vmatmul.bf16.gmra.mxu0 %v651
      %v716 = vpop.f32.mrf.mxu0
      %v717 = vadd.f32 0.0, %v716
      %v718 = vpop.f32.mrf.mxu0
      %v719 = vadd.f32 0.0, %v718
      %720 = vmatmul.bf16.gmra.mxu0 %v652
      %v721 = vpop.f32.mrf.mxu0
      %v722 = vadd.f32 0.0, %v721
      %v723 = vpop.f32.mrf.mxu0
      %v724 = vadd.f32 0.0, %v723
      %725 = vmatmul.bf16.gmra.mxu0 %v653
      %v726 = vpop.f32.mrf.mxu0
      %v727 = vadd.f32 0.0, %v726
      %v728 = vpop.f32.mrf.mxu0
      %v729 = vadd.f32 0.0, %v728
      %730 = vmatmul.bf16.gmra.mxu0 %v654
      %v731 = vpop.f32.mrf.mxu0
      %v732 = vadd.f32 0.0, %v731
      %v733 = vpop.f32.mrf.mxu0
      %v734 = vadd.f32 0.0, %v733
      %735 = vdwg.mxu0
      %v736 = vadd.f32 %v601, %v717
      %v737 = vadd.f32 %v602, %v719
      %v738 = vadd.f32 %v603, %v722
      %v739 = vadd.f32 %v604, %v724
      %v740 = vadd.f32 %v605, %v727
      %v741 = vadd.f32 %v606, %v729
      %v742 = vadd.f32 %v607, %v732
      %v743 = vadd.f32 %v608, %v734
      %s744 = scalar_lea.vmem %s206, 144
      %v745 = vld [vmem:[%s744] sm:$0xf]
      %v746 = vld [vmem:[%s744 + $0x4] sm:$0xf]
      %v747 = vld [vmem:[%s744 + $0x8] sm:$0xf]
      %v748 = vld [vmem:[%s744 + $0xc] sm:$0xf]
      %v749 = vld [vmem:[%s744 + $0x10] sm:$0xf]
      %v750 = vld [vmem:[%s744 + $0x14] sm:$0xf]
      %v751 = vld [vmem:[%s744 + $0x18] sm:$0xf]
      %v752 = vld [vmem:[%s744 + $0x1c] sm:$0xf]
      %s753 = scalar_lea.vmem %s210, 256
      %v754 = vld [vmem:[%s753] sm:$0xf]
      %v755 = vld [vmem:[%s753 + $0x4] sm:$0xf]
      %v756 = vld [vmem:[%s753 + $0x8] sm:$0xf]
      %v757 = vld [vmem:[%s753 + $0xc] sm:$0xf]
      %v758 = vld [vmem:[%s753 + $0x10] sm:$0xf]
      %v759 = vld [vmem:[%s753 + $0x14] sm:$0xf]
      %v760 = vld [vmem:[%s753 + $0x18] sm:$0xf]
      %v761 = vld [vmem:[%s753 + $0x1c] sm:$0xf]
      %v762 = vld [vmem:[%s753 + $0x20] sm:$0xf]
      %v763 = vld [vmem:[%s753 + $0x24] sm:$0xf]
      %v764 = vld [vmem:[%s753 + $0x28] sm:$0xf]
      %v765 = vld [vmem:[%s753 + $0x2c] sm:$0xf]
      %v766 = vld [vmem:[%s753 + $0x30] sm:$0xf]
      %v767 = vld [vmem:[%s753 + $0x34] sm:$0xf]
      %v768 = vld [vmem:[%s753 + $0x38] sm:$0xf]
      %v769 = vld [vmem:[%s753 + $0x3c] sm:$0xf]
      %v778 = vunpack.c.l.b16 %v745
      %v779 = vunpack.c.l.b16 %v746
      %v780 = vunpack.c.l.b16 %v747
      %v781 = vunpack.c.l.b16 %v748
      %v782 = vunpack.c.l.b16 %v749
      %v783 = vunpack.c.l.b16 %v750
      %v784 = vunpack.c.l.b16 %v751
      %v785 = vunpack.c.l.b16 %v752
      %v786 = vpack.c.b16 %v779, %v778
      %v787 = vpack.c.b16 %v781, %v780
      %v788 = vpack.c.b16 %v783, %v782
      %v789 = vpack.c.b16 %v785, %v784
      %v810 = vunpack.c.l.b16 %v754
      %v811 = vunpack.c.l.b16 %v755
      %v812 = vunpack.c.l.b16 %v756
      %v813 = vunpack.c.l.b16 %v757
      %v814 = vunpack.c.l.b16 %v758
      %v815 = vunpack.c.l.b16 %v759
      %v816 = vunpack.c.l.b16 %v760
      %v817 = vunpack.c.l.b16 %v761
      %v818 = vunpack.c.l.b16 %v762
      %v819 = vunpack.c.l.b16 %v763
      %v820 = vunpack.c.l.b16 %v764
      %v821 = vunpack.c.l.b16 %v765
      %v822 = vunpack.c.l.b16 %v766
      %v823 = vunpack.c.l.b16 %v767
      %v824 = vunpack.c.l.b16 %v768
      %v825 = vunpack.c.l.b16 %v769
      %v826 = vpack.c.b16 %v811, %v810
      %v827 = vpack.c.b16 %v813, %v812
      %v828 = vpack.c.b16 %v815, %v814
      %v829 = vpack.c.b16 %v817, %v816
      %v830 = vpack.c.b16 %v819, %v818
      %v831 = vpack.c.b16 %v821, %v820
      %v832 = vpack.c.b16 %v823, %v822
      %v833 = vpack.c.b16 %v825, %v824
      %842 = vmatpush.bf16.msra.mxu0 %v833
      %843 = vmatpush.bf16.msra.mxu0 %v832
      %844 = vmatpush.bf16.msra.mxu0 %v831
      %845 = vmatpush.bf16.msra.mxu0 %v830
      %846 = vmatpush.bf16.msra.mxu0 %v829
      %847 = vmatpush.bf16.msra.mxu0 %v828
      %848 = vmatpush.bf16.msra.mxu0 %v827
      %849 = vmatpush.bf16.msra.mxu0 %v826
      %850 = vmatmul.bf16.gmra.mxu0 %v786
      %v851 = vpop.f32.mrf.mxu0
      %v852 = vadd.f32 0.0, %v851
      %v853 = vpop.f32.mrf.mxu0
      %v854 = vadd.f32 0.0, %v853
      %855 = vmatmul.bf16.gmra.mxu0 %v787
      %v856 = vpop.f32.mrf.mxu0
      %v857 = vadd.f32 0.0, %v856
      %v858 = vpop.f32.mrf.mxu0
      %v859 = vadd.f32 0.0, %v858
      %860 = vmatmul.bf16.gmra.mxu0 %v788
      %v861 = vpop.f32.mrf.mxu0
      %v862 = vadd.f32 0.0, %v861
      %v863 = vpop.f32.mrf.mxu0
      %v864 = vadd.f32 0.0, %v863
      %865 = vmatmul.bf16.gmra.mxu0 %v789
      %v866 = vpop.f32.mrf.mxu0
      %v867 = vadd.f32 0.0, %v866
      %v868 = vpop.f32.mrf.mxu0
      %v869 = vadd.f32 0.0, %v868
      %870 = vdwg.mxu0
      %v871 = vadd.f32 %v736, %v852
      %v872 = vadd.f32 %v737, %v854
      %v873 = vadd.f32 %v738, %v857
      %v874 = vadd.f32 %v739, %v859
      %v875 = vadd.f32 %v740, %v862
      %v876 = vadd.f32 %v741, %v864
      %v877 = vadd.f32 %v742, %v867
      %v878 = vadd.f32 %v743, %v869
      %s879 = scalar_lea.vmem %s206, 180
      %v880 = vld [vmem:[%s879] sm:$0xf]
      %v881 = vld [vmem:[%s879 + $0x4] sm:$0xf]
      %v882 = vld [vmem:[%s879 + $0x8] sm:$0xf]
      %v883 = vld [vmem:[%s879 + $0xc] sm:$0xf]
      %v884 = vld [vmem:[%s879 + $0x10] sm:$0xf]
      %v885 = vld [vmem:[%s879 + $0x14] sm:$0xf]
      %v886 = vld [vmem:[%s879 + $0x18] sm:$0xf]
      %v887 = vld [vmem:[%s879 + $0x1c] sm:$0xf]
      %s888 = scalar_lea.vmem %s210, 320
      %v889 = vld [vmem:[%s888] sm:$0xf]
      %v890 = vld [vmem:[%s888 + $0x4] sm:$0xf]
      %v891 = vld [vmem:[%s888 + $0x8] sm:$0xf]
      %v892 = vld [vmem:[%s888 + $0xc] sm:$0xf]
      %v893 = vld [vmem:[%s888 + $0x10] sm:$0xf]
      %v894 = vld [vmem:[%s888 + $0x14] sm:$0xf]
      %v895 = vld [vmem:[%s888 + $0x18] sm:$0xf]
      %v896 = vld [vmem:[%s888 + $0x1c] sm:$0xf]
      %v897 = vld [vmem:[%s888 + $0x20] sm:$0xf]
      %v898 = vld [vmem:[%s888 + $0x24] sm:$0xf]
      %v899 = vld [vmem:[%s888 + $0x28] sm:$0xf]
      %v900 = vld [vmem:[%s888 + $0x2c] sm:$0xf]
      %v901 = vld [vmem:[%s888 + $0x30] sm:$0xf]
      %v902 = vld [vmem:[%s888 + $0x34] sm:$0xf]
      %v903 = vld [vmem:[%s888 + $0x38] sm:$0xf]
      %v904 = vld [vmem:[%s888 + $0x3c] sm:$0xf]
      %v913 = vunpack.c.l.b16 %v880
      %v914 = vunpack.c.l.b16 %v881
      %v915 = vunpack.c.l.b16 %v882
      %v916 = vunpack.c.l.b16 %v883
      %v917 = vunpack.c.l.b16 %v884
      %v918 = vunpack.c.l.b16 %v885
      %v919 = vunpack.c.l.b16 %v886
      %v920 = vunpack.c.l.b16 %v887
      %v921 = vpack.c.b16 %v914, %v913
      %v922 = vpack.c.b16 %v916, %v915
      %v923 = vpack.c.b16 %v918, %v917
      %v924 = vpack.c.b16 %v920, %v919
      %v945 = vunpack.c.l.b16 %v889
      %v946 = vunpack.c.l.b16 %v890
      %v947 = vunpack.c.l.b16 %v891
      %v948 = vunpack.c.l.b16 %v892
      %v949 = vunpack.c.l.b16 %v893
      %v950 = vunpack.c.l.b16 %v894
      %v951 = vunpack.c.l.b16 %v895
      %v952 = vunpack.c.l.b16 %v896
      %v953 = vunpack.c.l.b16 %v897
      %v954 = vunpack.c.l.b16 %v898
      %v955 = vunpack.c.l.b16 %v899
      %v956 = vunpack.c.l.b16 %v900
      %v957 = vunpack.c.l.b16 %v901
      %v958 = vunpack.c.l.b16 %v902
      %v959 = vunpack.c.l.b16 %v903
      %v960 = vunpack.c.l.b16 %v904
      %v961 = vpack.c.b16 %v946, %v945
      %v962 = vpack.c.b16 %v948, %v947
      %v963 = vpack.c.b16 %v950, %v949
      %v964 = vpack.c.b16 %v952, %v951
      %v965 = vpack.c.b16 %v954, %v953
      %v966 = vpack.c.b16 %v956, %v955
      %v967 = vpack.c.b16 %v958, %v957
      %v968 = vpack.c.b16 %v960, %v959
      %977 = vmatpush.bf16.msra.mxu0 %v968
      %978 = vmatpush.bf16.msra.mxu0 %v967
      %979 = vmatpush.bf16.msra.mxu0 %v966
      %980 = vmatpush.bf16.msra.mxu0 %v965
      %981 = vmatpush.bf16.msra.mxu0 %v964
      %982 = vmatpush.bf16.msra.mxu0 %v963
      %983 = vmatpush.bf16.msra.mxu0 %v962
      %984 = vmatpush.bf16.msra.mxu0 %v961
      %985 = vmatmul.bf16.gmra.mxu0 %v921
      %v986 = vpop.f32.mrf.mxu0
      %v987 = vadd.f32 0.0, %v986
      %v988 = vpop.f32.mrf.mxu0
      %v989 = vadd.f32 0.0, %v988
      %990 = vmatmul.bf16.gmra.mxu0 %v922
      %v991 = vpop.f32.mrf.mxu0
      %v992 = vadd.f32 0.0, %v991
      %v993 = vpop.f32.mrf.mxu0
      %v994 = vadd.f32 0.0, %v993
      %995 = vmatmul.bf16.gmra.mxu0 %v923
      %v996 = vpop.f32.mrf.mxu0
      %v997 = vadd.f32 0.0, %v996
      %v998 = vpop.f32.mrf.mxu0
      %v999 = vadd.f32 0.0, %v998
      %1000 = vmatmul.bf16.gmra.mxu0 %v924
      %v1001 = vpop.f32.mrf.mxu0
      %v1002 = vadd.f32 0.0, %v1001
      %v1003 = vpop.f32.mrf.mxu0
      %v1004 = vadd.f32 0.0, %v1003
      %1005 = vdwg.mxu0
      %v1006 = vadd.f32 %v871, %v987
      %v1007 = vadd.f32 %v872, %v989
      %v1008 = vadd.f32 %v873, %v992
      %v1009 = vadd.f32 %v874, %v994
      %v1010 = vadd.f32 %v875, %v997
      %v1011 = vadd.f32 %v876, %v999
      %v1012 = vadd.f32 %v877, %v1002
      %v1013 = vadd.f32 %v878, %v1004
      %s1014 = scalar_lea.vmem %s206, 4
      %v1015 = vld [vmem:[%s1014] sm:$0xf]
      %v1016 = vld [vmem:[%s1014 + $0x4] sm:$0xf]
      %v1017 = vld [vmem:[%s1014 + $0x8] sm:$0xf]
      %v1018 = vld [vmem:[%s1014 + $0xc] sm:$0xf]
      %v1019 = vld [vmem:[%s1014 + $0x10] sm:$0xf]
      %v1020 = vld [vmem:[%s1014 + $0x14] sm:$0xf]
      %v1021 = vld [vmem:[%s1014 + $0x18] sm:$0xf]
      %v1022 = vld [vmem:[%s1014 + $0x1c] sm:$0xf]
      %s1023 = scalar_lea.vmem %s210, 384
      %v1024 = vld [vmem:[%s1023] sm:$0xf]
      %v1025 = vld [vmem:[%s1023 + $0x4] sm:$0xf]
      %v1026 = vld [vmem:[%s1023 + $0x8] sm:$0xf]
      %v1027 = vld [vmem:[%s1023 + $0xc] sm:$0xf]
      %v1028 = vld [vmem:[%s1023 + $0x10] sm:$0xf]
      %v1029 = vld [vmem:[%s1023 + $0x14] sm:$0xf]
      %v1030 = vld [vmem:[%s1023 + $0x18] sm:$0xf]
      %v1031 = vld [vmem:[%s1023 + $0x1c] sm:$0xf]
      %v1032 = vld [vmem:[%s1023 + $0x20] sm:$0xf]
      %v1033 = vld [vmem:[%s1023 + $0x24] sm:$0xf]
      %v1034 = vld [vmem:[%s1023 + $0x28] sm:$0xf]
      %v1035 = vld [vmem:[%s1023 + $0x2c] sm:$0xf]
      %v1036 = vld [vmem:[%s1023 + $0x30] sm:$0xf]
      %v1037 = vld [vmem:[%s1023 + $0x34] sm:$0xf]
      %v1038 = vld [vmem:[%s1023 + $0x38] sm:$0xf]
      %v1039 = vld [vmem:[%s1023 + $0x3c] sm:$0xf]
      %v1048 = vunpack.c.l.b16 %v1015
      %v1049 = vunpack.c.l.b16 %v1016
      %v1050 = vunpack.c.l.b16 %v1017
      %v1051 = vunpack.c.l.b16 %v1018
      %v1052 = vunpack.c.l.b16 %v1019
      %v1053 = vunpack.c.l.b16 %v1020
      %v1054 = vunpack.c.l.b16 %v1021
      %v1055 = vunpack.c.l.b16 %v1022
      %v1056 = vpack.c.b16 %v1049, %v1048
      %v1057 = vpack.c.b16 %v1051, %v1050
      %v1058 = vpack.c.b16 %v1053, %v1052
      %v1059 = vpack.c.b16 %v1055, %v1054
      %v1080 = vunpack.c.l.b16 %v1024
      %v1081 = vunpack.c.l.b16 %v1025
      %v1082 = vunpack.c.l.b16 %v1026
      %v1083 = vunpack.c.l.b16 %v1027
      %v1084 = vunpack.c.l.b16 %v1028
      %v1085 = vunpack.c.l.b16 %v1029
      %v1086 = vunpack.c.l.b16 %v1030
      %v1087 = vunpack.c.l.b16 %v1031
      %v1088 = vunpack.c.l.b16 %v1032
      %v1089 = vunpack.c.l.b16 %v1033
      %v1090 = vunpack.c.l.b16 %v1034
      %v1091 = vunpack.c.l.b16 %v1035
      %v1092 = vunpack.c.l.b16 %v1036
      %v1093 = vunpack.c.l.b16 %v1037
      %v1094 = vunpack.c.l.b16 %v1038
      %v1095 = vunpack.c.l.b16 %v1039
      %v1096 = vpack.c.b16 %v1081, %v1080
      %v1097 = vpack.c.b16 %v1083, %v1082
      %v1098 = vpack.c.b16 %v1085, %v1084
      %v1099 = vpack.c.b16 %v1087, %v1086
      %v1100 = vpack.c.b16 %v1089, %v1088
      %v1101 = vpack.c.b16 %v1091, %v1090
      %v1102 = vpack.c.b16 %v1093, %v1092
      %v1103 = vpack.c.b16 %v1095, %v1094
      %1112 = vmatpush.bf16.msra.mxu0 %v1103
      %1113 = vmatpush.bf16.msra.mxu0 %v1102
      %1114 = vmatpush.bf16.msra.mxu0 %v1101
      %1115 = vmatpush.bf16.msra.mxu0 %v1100
      %1116 = vmatpush.bf16.msra.mxu0 %v1099
      %1117 = vmatpush.bf16.msra.mxu0 %v1098
      %1118 = vmatpush.bf16.msra.mxu0 %v1097
      %1119 = vmatpush.bf16.msra.mxu0 %v1096
      %1120 = vmatmul.bf16.gmra.mxu0 %v1056
      %v1121 = vpop.f32.mrf.mxu0
      %v1122 = vadd.f32 0.0, %v1121
      %v1123 = vpop.f32.mrf.mxu0
      %v1124 = vadd.f32 0.0, %v1123
      %1125 = vmatmul.bf16.gmra.mxu0 %v1057
      %v1126 = vpop.f32.mrf.mxu0
      %v1127 = vadd.f32 0.0, %v1126
      %v1128 = vpop.f32.mrf.mxu0
      %v1129 = vadd.f32 0.0, %v1128
      %1130 = vmatmul.bf16.gmra.mxu0 %v1058
      %v1131 = vpop.f32.mrf.mxu0
      %v1132 = vadd.f32 0.0, %v1131
      %v1133 = vpop.f32.mrf.mxu0
      %v1134 = vadd.f32 0.0, %v1133
      %1135 = vmatmul.bf16.gmra.mxu0 %v1059
      %v1136 = vpop.f32.mrf.mxu0
      %v1137 = vadd.f32 0.0, %v1136
      %v1138 = vpop.f32.mrf.mxu0
      %v1139 = vadd.f32 0.0, %v1138
      %1140 = vdwg.mxu0
      %v1141 = vadd.f32 %v1006, %v1122
      %v1142 = vadd.f32 %v1007, %v1124
      %v1143 = vadd.f32 %v1008, %v1127
      %v1144 = vadd.f32 %v1009, %v1129
      %v1145 = vadd.f32 %v1010, %v1132
      %v1146 = vadd.f32 %v1011, %v1134
      %v1147 = vadd.f32 %v1012, %v1137
      %v1148 = vadd.f32 %v1013, %v1139
      %s1149 = scalar_lea.vmem %s206, 40
      %v1150 = vld [vmem:[%s1149] sm:$0xf]
      %v1151 = vld [vmem:[%s1149 + $0x4] sm:$0xf]
      %v1152 = vld [vmem:[%s1149 + $0x8] sm:$0xf]
      %v1153 = vld [vmem:[%s1149 + $0xc] sm:$0xf]
      %v1154 = vld [vmem:[%s1149 + $0x10] sm:$0xf]
      %v1155 = vld [vmem:[%s1149 + $0x14] sm:$0xf]
      %v1156 = vld [vmem:[%s1149 + $0x18] sm:$0xf]
      %v1157 = vld [vmem:[%s1149 + $0x1c] sm:$0xf]
      %s1158 = scalar_lea.vmem %s210, 448
      %v1159 = vld [vmem:[%s1158] sm:$0xf]
      %v1160 = vld [vmem:[%s1158 + $0x4] sm:$0xf]
      %v1161 = vld [vmem:[%s1158 + $0x8] sm:$0xf]
      %v1162 = vld [vmem:[%s1158 + $0xc] sm:$0xf]
      %v1163 = vld [vmem:[%s1158 + $0x10] sm:$0xf]
      %v1164 = vld [vmem:[%s1158 + $0x14] sm:$0xf]
      %v1165 = vld [vmem:[%s1158 + $0x18] sm:$0xf]
      %v1166 = vld [vmem:[%s1158 + $0x1c] sm:$0xf]
      %v1167 = vld [vmem:[%s1158 + $0x20] sm:$0xf]
      %v1168 = vld [vmem:[%s1158 + $0x24] sm:$0xf]
      %v1169 = vld [vmem:[%s1158 + $0x28] sm:$0xf]
      %v1170 = vld [vmem:[%s1158 + $0x2c] sm:$0xf]
      %v1171 = vld [vmem:[%s1158 + $0x30] sm:$0xf]
      %v1172 = vld [vmem:[%s1158 + $0x34] sm:$0xf]
      %v1173 = vld [vmem:[%s1158 + $0x38] sm:$0xf]
      %v1174 = vld [vmem:[%s1158 + $0x3c] sm:$0xf]
      %v1183 = vunpack.c.l.b16 %v1150
      %v1184 = vunpack.c.l.b16 %v1151
      %v1185 = vunpack.c.l.b16 %v1152
      %v1186 = vunpack.c.l.b16 %v1153
      %v1187 = vunpack.c.l.b16 %v1154
      %v1188 = vunpack.c.l.b16 %v1155
      %v1189 = vunpack.c.l.b16 %v1156
      %v1190 = vunpack.c.l.b16 %v1157
      %v1191 = vpack.c.b16 %v1184, %v1183
      %v1192 = vpack.c.b16 %v1186, %v1185
      %v1193 = vpack.c.b16 %v1188, %v1187
      %v1194 = vpack.c.b16 %v1190, %v1189
      %v1215 = vunpack.c.l.b16 %v1159
      %v1216 = vunpack.c.l.b16 %v1160
      %v1217 = vunpack.c.l.b16 %v1161
      %v1218 = vunpack.c.l.b16 %v1162
      %v1219 = vunpack.c.l.b16 %v1163
      %v1220 = vunpack.c.l.b16 %v1164
      %v1221 = vunpack.c.l.b16 %v1165
      %v1222 = vunpack.c.l.b16 %v1166
      %v1223 = vunpack.c.l.b16 %v1167
      %v1224 = vunpack.c.l.b16 %v1168
      %v1225 = vunpack.c.l.b16 %v1169
      %v1226 = vunpack.c.l.b16 %v1170
      %v1227 = vunpack.c.l.b16 %v1171
      %v1228 = vunpack.c.l.b16 %v1172
      %v1229 = vunpack.c.l.b16 %v1173
      %v1230 = vunpack.c.l.b16 %v1174
      %v1231 = vpack.c.b16 %v1216, %v1215
      %v1232 = vpack.c.b16 %v1218, %v1217
      %v1233 = vpack.c.b16 %v1220, %v1219
      %v1234 = vpack.c.b16 %v1222, %v1221
      %v1235 = vpack.c.b16 %v1224, %v1223
      %v1236 = vpack.c.b16 %v1226, %v1225
      %v1237 = vpack.c.b16 %v1228, %v1227
      %v1238 = vpack.c.b16 %v1230, %v1229
      %1247 = vmatpush.bf16.msra.mxu0 %v1238
      %1248 = vmatpush.bf16.msra.mxu0 %v1237
      %1249 = vmatpush.bf16.msra.mxu0 %v1236
      %1250 = vmatpush.bf16.msra.mxu0 %v1235
      %1251 = vmatpush.bf16.msra.mxu0 %v1234
      %1252 = vmatpush.bf16.msra.mxu0 %v1233
      %1253 = vmatpush.bf16.msra.mxu0 %v1232
      %1254 = vmatpush.bf16.msra.mxu0 %v1231
      %1255 = vmatmul.bf16.gmra.mxu0 %v1191
      %v1256 = vpop.f32.mrf.mxu0
      %v1257 = vadd.f32 0.0, %v1256
      %v1258 = vpop.f32.mrf.mxu0
      %v1259 = vadd.f32 0.0, %v1258
      %1260 = vmatmul.bf16.gmra.mxu0 %v1192
      %v1261 = vpop.f32.mrf.mxu0
      %v1262 = vadd.f32 0.0, %v1261
      %v1263 = vpop.f32.mrf.mxu0
      %v1264 = vadd.f32 0.0, %v1263
      %1265 = vmatmul.bf16.gmra.mxu0 %v1193
      %v1266 = vpop.f32.mrf.mxu0
      %v1267 = vadd.f32 0.0, %v1266
      %v1268 = vpop.f32.mrf.mxu0
      %v1269 = vadd.f32 0.0, %v1268
      %1270 = vmatmul.bf16.gmra.mxu0 %v1194
      %v1271 = vpop.f32.mrf.mxu0
      %v1272 = vadd.f32 0.0, %v1271
      %v1273 = vpop.f32.mrf.mxu0
      %v1274 = vadd.f32 0.0, %v1273
      %1275 = vdwg.mxu0
      %v1276 = vadd.f32 %v1141, %v1257
      %v1277 = vadd.f32 %v1142, %v1259
      %v1278 = vadd.f32 %v1143, %v1262
      %v1279 = vadd.f32 %v1144, %v1264
      %v1280 = vadd.f32 %v1145, %v1267
      %v1281 = vadd.f32 %v1146, %v1269
      %v1282 = vadd.f32 %v1147, %v1272
      %v1283 = vadd.f32 %v1148, %v1274
      %s1284 = scalar_lea.vmem %s206, 76
      %v1285 = vld [vmem:[%s1284] sm:$0xf]
      %v1286 = vld [vmem:[%s1284 + $0x4] sm:$0xf]
      %v1287 = vld [vmem:[%s1284 + $0x8] sm:$0xf]
      %v1288 = vld [vmem:[%s1284 + $0xc] sm:$0xf]
      %v1289 = vld [vmem:[%s1284 + $0x10] sm:$0xf]
      %v1290 = vld [vmem:[%s1284 + $0x14] sm:$0xf]
      %v1291 = vld [vmem:[%s1284 + $0x18] sm:$0xf]
      %v1292 = vld [vmem:[%s1284 + $0x1c] sm:$0xf]
      %s1293 = scalar_lea.vmem %s210, 512
      %v1294 = vld [vmem:[%s1293] sm:$0xf]
      %v1295 = vld [vmem:[%s1293 + $0x4] sm:$0xf]
      %v1296 = vld [vmem:[%s1293 + $0x8] sm:$0xf]
      %v1297 = vld [vmem:[%s1293 + $0xc] sm:$0xf]
      %v1298 = vld [vmem:[%s1293 + $0x10] sm:$0xf]
      %v1299 = vld [vmem:[%s1293 + $0x14] sm:$0xf]
      %v1300 = vld [vmem:[%s1293 + $0x18] sm:$0xf]
      %v1301 = vld [vmem:[%s1293 + $0x1c] sm:$0xf]
      %v1302 = vld [vmem:[%s1293 + $0x20] sm:$0xf]
      %v1303 = vld [vmem:[%s1293 + $0x24] sm:$0xf]
      %v1304 = vld [vmem:[%s1293 + $0x28] sm:$0xf]
      %v1305 = vld [vmem:[%s1293 + $0x2c] sm:$0xf]
      %v1306 = vld [vmem:[%s1293 + $0x30] sm:$0xf]
      %v1307 = vld [vmem:[%s1293 + $0x34] sm:$0xf]
      %v1308 = vld [vmem:[%s1293 + $0x38] sm:$0xf]
      %v1309 = vld [vmem:[%s1293 + $0x3c] sm:$0xf]
      %v1318 = vunpack.c.l.b16 %v1285
      %v1319 = vunpack.c.l.b16 %v1286
      %v1320 = vunpack.c.l.b16 %v1287
      %v1321 = vunpack.c.l.b16 %v1288
      %v1322 = vunpack.c.l.b16 %v1289
      %v1323 = vunpack.c.l.b16 %v1290
      %v1324 = vunpack.c.l.b16 %v1291
      %v1325 = vunpack.c.l.b16 %v1292
      %v1326 = vpack.c.b16 %v1319, %v1318
      %v1327 = vpack.c.b16 %v1321, %v1320
      %v1328 = vpack.c.b16 %v1323, %v1322
      %v1329 = vpack.c.b16 %v1325, %v1324
      %v1350 = vunpack.c.l.b16 %v1294
      %v1351 = vunpack.c.l.b16 %v1295
      %v1352 = vunpack.c.l.b16 %v1296
      %v1353 = vunpack.c.l.b16 %v1297
      %v1354 = vunpack.c.l.b16 %v1298
      %v1355 = vunpack.c.l.b16 %v1299
      %v1356 = vunpack.c.l.b16 %v1300
      %v1357 = vunpack.c.l.b16 %v1301
      %v1358 = vunpack.c.l.b16 %v1302
      %v1359 = vunpack.c.l.b16 %v1303
      %v1360 = vunpack.c.l.b16 %v1304
      %v1361 = vunpack.c.l.b16 %v1305
      %v1362 = vunpack.c.l.b16 %v1306
      %v1363 = vunpack.c.l.b16 %v1307
      %v1364 = vunpack.c.l.b16 %v1308
      %v1365 = vunpack.c.l.b16 %v1309
      %v1366 = vpack.c.b16 %v1351, %v1350
      %v1367 = vpack.c.b16 %v1353, %v1352
      %v1368 = vpack.c.b16 %v1355, %v1354
      %v1369 = vpack.c.b16 %v1357, %v1356
      %v1370 = vpack.c.b16 %v1359, %v1358
      %v1371 = vpack.c.b16 %v1361, %v1360
      %v1372 = vpack.c.b16 %v1363, %v1362
      %v1373 = vpack.c.b16 %v1365, %v1364
      %1382 = vmatpush.bf16.msra.mxu0 %v1373
      %1383 = vmatpush.bf16.msra.mxu0 %v1372
      %1384 = vmatpush.bf16.msra.mxu0 %v1371
      %1385 = vmatpush.bf16.msra.mxu0 %v1370
      %1386 = vmatpush.bf16.msra.mxu0 %v1369
      %1387 = vmatpush.bf16.msra.mxu0 %v1368
      %1388 = vmatpush.bf16.msra.mxu0 %v1367
      %1389 = vmatpush.bf16.msra.mxu0 %v1366
      %1390 = vmatmul.bf16.gmra.mxu0 %v1326
      %v1391 = vpop.f32.mrf.mxu0
      %v1392 = vadd.f32 0.0, %v1391
      %v1393 = vpop.f32.mrf.mxu0
      %v1394 = vadd.f32 0.0, %v1393
      %1395 = vmatmul.bf16.gmra.mxu0 %v1327
      %v1396 = vpop.f32.mrf.mxu0
      %v1397 = vadd.f32 0.0, %v1396
      %v1398 = vpop.f32.mrf.mxu0
      %v1399 = vadd.f32 0.0, %v1398
      %1400 = vmatmul.bf16.gmra.mxu0 %v1328
      %v1401 = vpop.f32.mrf.mxu0
      %v1402 = vadd.f32 0.0, %v1401
      %v1403 = vpop.f32.mrf.mxu0
      %v1404 = vadd.f32 0.0, %v1403
      %1405 = vmatmul.bf16.gmra.mxu0 %v1329
      %v1406 = vpop.f32.mrf.mxu0
      %v1407 = vadd.f32 0.0, %v1406
      %v1408 = vpop.f32.mrf.mxu0
      %v1409 = vadd.f32 0.0, %v1408
      %1410 = vdwg.mxu0
      %v1411 = vadd.f32 %v1276, %v1392
      %v1412 = vadd.f32 %v1277, %v1394
      %v1413 = vadd.f32 %v1278, %v1397
      %v1414 = vadd.f32 %v1279, %v1399
      %v1415 = vadd.f32 %v1280, %v1402
      %v1416 = vadd.f32 %v1281, %v1404
      %v1417 = vadd.f32 %v1282, %v1407
      %v1418 = vadd.f32 %v1283, %v1409
      %v1419 = vld [vmem:[%s213] sm:$0x1]
      %v1421 = vperm.slane %v1419, 0
      %v1423 = vadd.f32 %v1411, %v1421
      %v1424 = vadd.f32 %v1412, %v1421
      %v1425 = vadd.f32 %v1413, %v1421
      %v1426 = vadd.f32 %v1414, %v1421
      %v1427 = vadd.f32 %v1415, %v1421
      %v1428 = vadd.f32 %v1416, %v1421
      %v1429 = vadd.f32 %v1417, %v1421
      %v1430 = vadd.f32 %v1418, %v1421
      %v1431 = vmax.f32 %v1423, 0.0
      %v1432 = vmax.f32 %v1424, 0.0
      %v1433 = vmax.f32 %v1425, 0.0
      %v1434 = vmax.f32 %v1426, 0.0
      %v1435 = vmax.f32 %v1427, 0.0
      %v1436 = vmax.f32 %v1428, 0.0
      %v1437 = vmax.f32 %v1429, 0.0
      %v1438 = vmax.f32 %v1430, 0.0
      %v1439 = vpack.c.bf16 %v1431, %v1431
      %v1440 = vpack.c.bf16 %v1432, %v1432
      %v1441 = vpack.c.bf16 %v1433, %v1433
      %v1442 = vpack.c.bf16 %v1434, %v1434
      %v1443 = vpack.c.bf16 %v1435, %v1435
      %v1444 = vpack.c.bf16 %v1436, %v1436
      %v1445 = vpack.c.bf16 %v1437, %v1437
      %v1446 = vpack.c.bf16 %v1438, %v1438
      %1447 = vst [vmem:[%s221] sm:$0xf] %v1439
      %1448 = vst [vmem:[%s221 + $0x4] sm:$0xf] %v1440
      %1449 = vst [vmem:[%s221 + $0x8] sm:$0xf] %v1441
      %1450 = vst [vmem:[%s221 + $0xc] sm:$0xf] %v1442
      %1451 = vst [vmem:[%s221 + $0x10] sm:$0xf] %v1443
      %1452 = vst [vmem:[%s221 + $0x14] sm:$0xf] %v1444
      %1453 = vst [vmem:[%s221 + $0x18] sm:$0xf] %v1445
      %1454 = vst [vmem:[%s221 + $0x1c] sm:$0xf] %v1446
      %p1455 = scmp.lt.s32.totalorder %s19, 1
      %s1456 = scalar_select %p1455, %s19, 1
      %p1457 = scmp.lt.s32.totalorder %s18, 0
      %s1458 = scalar_select %p1457, %s18, 0
      %s1459 = smul.addr %s1456, 8
      %s1460 = sadd.s32 %s1458, %s1459
      %s1461 = smul.addr %s1460, 4
      %s1462 = scalar_lea.vmem %s3, %s1461
      // Predicated region
      $region33: #{resnet_layer_forward.4} parent=31 // pred_check
        %p1463 = pneg %p124
      $region34: #{resnet_layer_forward.4} parent=31 // pred_check_branch
        %1465 = sbr.rel (%p1463) target = $region36
      $region35: #{resnet_layer_forward.4} parent=31 // pred_region
        _
      $region36: #{resnet_layer_forward.4} parent=31 // pred_fallthru
        _
    $region32: #{resnet_layer_forward.4} parent=5 // pred_fallthru
      _
    %p1466 = scmp.le.s32.totalorder 2, %s9
    // Predicated region
    $region37: #{resnet_layer_forward.4} parent=5 // pred_check
      %p1467 = pneg %p1466
    $region38: #{resnet_layer_forward.4} parent=5 // pred_check_branch
      %1469 = sbr.rel (%p1467) target = $region40
    $region39: #{resnet_layer_forward.4} parent=5 // pred_region
      %s1470 = ssub.s32 %s9, 2
      // Predicated region
      $region41: #{resnet_layer_forward.4} parent=39 // pred_check
        %p1471 = pneg %p130
      $region42: #{resnet_layer_forward.4} parent=39 // pred_check_branch
        %1473 = sbr.rel (%p1471) target = $region44
      $region43: #{resnet_layer_forward.4} parent=39 // pred_region
        %p1474 = scmp.lt.s32.totalorder %s21, 1
        %s1475 = scalar_select %p1474, %s21, 1
        %p1476 = scmp.lt.s32.totalorder %s20, 0
        %s1477 = scalar_select %p1476, %s20, 0
        %s1478 = smul.addr %s1475, 8
        %s1479 = sadd.s32 %s1477, %s1478
        %s1480 = smul.addr %s1479, 4
        %s1481 = scalar_lea.vmem %s3, %s1480
      $region44: #{resnet_layer_forward.4} parent=39 // pred_fallthru
        _
    $region40: #{resnet_layer_forward.4} parent=5 // pred_fallthru
      _
  $region6: #{resnet_layer_forward.4} parent=0 // loop_footer
    %s13 = sadd.s32 1, %s9
  $region7: #{resnet_layer_forward.4} parent=0 // loop_footer_branch
    %8 = sbr.rel target = $region3
  $region8: #{resnet_layer_forward.4} parent=0 // loop_exit
    _

// kernel: resnet_layer_forward.7
$region0: #{resnet_layer_forward.7}
  #allocation0 [shape = 'u32[]', space=smem, size = 0x4, offset = 0x4, fixed_abs, tag = 'smem constant byte address 0x4 - core index']
  #allocation1 [shape = 'u32[72,128]{1,0:T(1,128)}', space=vmem, size = 0x9000, scoped, tag = 'internal scratch']
  %s0 = inlined_call_operand.vmem [shape: bf16[2,3,10,8,128], index: 0, kind: input, shape index: {}]
  %s1 = inlined_call_operand.vmem [shape: bf16[9,128,128], index: 1, kind: input, shape index: {}]
  %s2 = inlined_call_operand.vmem [shape: f32[1,128], index: 2, kind: input, shape index: {}]
  %s3 = inlined_call_operand.vmem [shape: bf16[2,64,128], index: 3, kind: input, shape index: {}]
  %s4 = inlined_call_operand.vmem [shape: bf16[2,64,128], index: 4, kind: output, shape index: {}]
  %s5 = sld [smem:[#allocation0]]
  $region49: #{resnet_layer_forward.7} parent=0
    _
  %s7 = ssub.s32 1, %s5
  %s8 = scalar_select 0, %s7, %s5
  loop: start=0, step=1, limit=4
  $region2: #{resnet_layer_forward.7} parent=0 // loop_pre_header
    _
  $region3: #{resnet_layer_forward.7} parent=0 // loop_header
    %s10 = sphi 0, %s14
    %p11 = scmp.ge.s32.totalorder %s10, 4
    %s17 = sphi 0, %s29
    %s18 = sphi 0, %s25
    %s19 = sphi 0, %s17
    %s20 = sphi 0, %s18
    %s21 = sphi 0, %s19
    %s22 = sphi 0, %s20
    %s32 = sphi 0, %s34
    %s35 = sphi 0, %s32
    %s36 = sphi 0, %s35
    %s52 = sphi 0, %s36
    %s58 = sphi 0, %s60
    %s61 = sphi 0, %s58
    %s62 = sphi 0, %s61
    %s78 = sphi 0, %s62
    %s84 = sphi 0, %s86
    %s87 = sphi 0, %s84
    %s88 = sphi 0, %s87
    %s104 = sphi 0, %s88
    %s112 = sphi 0, %s114
    %s115 = sphi 0, %s112
    %s116 = sphi 0, %s115
    %s132 = sphi 0, %s116
    %s140 = sphi 0, %s142
    %s143 = sphi 0, %s140
    %s144 = sphi 0, %s143
    %s160 = sphi 0, %s144
  $region4: #{resnet_layer_forward.7} parent=0 // loop_header_branch
    %13 = sbr.rel (%p11) target = $region8
  $region5: #{resnet_layer_forward.7} parent=0 // loop_body
    %s15 = ssub.s32 %s10, 1
    %s16 = ssub.s32 %s10, 2
    %s23 = sadd.s32 1, %s18
    %p24 = scmp.ge.s32.totalorder %s23, 2
    %s25 = scalar_select %p24, 0, %s23
    %s26 = sadd.s32 1, %s17
    %s27 = scalar_select %p24, %s26, %s17
    %p28 = scmp.ge.s32.totalorder %s27, 1
    %s29 = scalar_select %p28, 0, %s27
    %s30 = ssub.s32 %s18, %s25
    %p31 = scmp.eq.s32.totalorder %s30, 0
    %s33 = sadd.s32 %s32, 1
    %s34 = scalar_select %p31, %s32, %s33
    %p37 = pneg %p31
    %p38 = scmp.eq.s32.totalorder %s10, 1
    %p39 = por %p37, %p38
    %p40 = scmp.ne.s32.totalorder %s32, %s35
    %p41 = scmp.eq.s32.totalorder %s10, 0
    %p42 = por %p40, %p41
    %p43 = scmp.ne.s32.totalorder %s32, %s35
    %p44 = scmp.eq.s32.totalorder %s15, 1
    %p45 = por %p43, %p44
    %p46 = scmp.ne.s32.totalorder %s35, %s36
    %p47 = scmp.eq.s32.totalorder %s15, 0
    %p48 = por %p46, %p47
    %p49 = scmp.ne.s32.totalorder %s35, %s36
    %p50 = scmp.eq.s32.totalorder %s16, 1
    %p51 = por %p49, %p50
    %p53 = scmp.ne.s32.totalorder %s36, %s52
    %p54 = scmp.eq.s32.totalorder %s16, 0
    %p55 = por %p53, %p54
    %s56 = ssub.s32 %s17, %s29
    %p57 = scmp.eq.s32.totalorder %s56, 0
    %s59 = sadd.s32 %s58, 1
    %s60 = scalar_select %p57, %s58, %s59
    %p63 = pneg %p57
    %p64 = scmp.eq.s32.totalorder %s10, 1
    %p65 = por %p63, %p64
    %p66 = scmp.ne.s32.totalorder %s58, %s61
    %p67 = scmp.eq.s32.totalorder %s10, 0
    %p68 = por %p66, %p67
    %p69 = scmp.ne.s32.totalorder %s58, %s61
    %p70 = scmp.eq.s32.totalorder %s15, 1
    %p71 = por %p69, %p70
    %p72 = scmp.ne.s32.totalorder %s61, %s62
    %p73 = scmp.eq.s32.totalorder %s15, 0
    %p74 = por %p72, %p73
    %p75 = scmp.ne.s32.totalorder %s61, %s62
    %p76 = scmp.eq.s32.totalorder %s16, 1
    %p77 = por %p75, %p76
    %p79 = scmp.ne.s32.totalorder %s62, %s78
    %p80 = scmp.eq.s32.totalorder %s16, 0
    %p81 = por %p79, %p80
    %s82 = ssub.s32 %s17, %s29
    %p83 = scmp.eq.s32.totalorder %s82, 0
    %s85 = sadd.s32 %s84, 1
    %s86 = scalar_select %p83, %s84, %s85
    %p89 = pneg %p83
    %p90 = scmp.eq.s32.totalorder %s10, 1
    %p91 = por %p89, %p90
    %p92 = scmp.ne.s32.totalorder %s84, %s87
    %p93 = scmp.eq.s32.totalorder %s10, 0
    %p94 = por %p92, %p93
    %p95 = scmp.ne.s32.totalorder %s84, %s87
    %p96 = scmp.eq.s32.totalorder %s15, 1
    %p97 = por %p95, %p96
    %p98 = scmp.ne.s32.totalorder %s87, %s88
    %p99 = scmp.eq.s32.totalorder %s15, 0
    %p100 = por %p98, %p99
    %p101 = scmp.ne.s32.totalorder %s87, %s88
    %p102 = scmp.eq.s32.totalorder %s16, 1
    %p103 = por %p101, %p102
    %p105 = scmp.ne.s32.totalorder %s88, %s104
    %p106 = scmp.eq.s32.totalorder %s16, 0
    %p107 = por %p105, %p106
    %s108 = ssub.s32 %s18, %s25
    %s109 = ssub.s32 %s17, %s29
    %s110 = sor.u32 %s108, %s109
    %p111 = scmp.eq.s32.totalorder %s110, 0
    %s113 = sadd.s32 %s112, 1
    %s114 = scalar_select %p111, %s112, %s113
    %p117 = pneg %p111
    %p118 = scmp.eq.s32.totalorder %s10, 1
    %p119 = por %p117, %p118
    %p120 = scmp.ne.s32.totalorder %s112, %s115
    %p121 = scmp.eq.s32.totalorder %s10, 0
    %p122 = por %p120, %p121
    %p123 = scmp.ne.s32.totalorder %s112, %s115
    %p124 = scmp.eq.s32.totalorder %s15, 1
    %p125 = por %p123, %p124
    %p126 = scmp.ne.s32.totalorder %s115, %s116
    %p127 = scmp.eq.s32.totalorder %s15, 0
    %p128 = por %p126, %p127
    %p129 = scmp.ne.s32.totalorder %s115, %s116
    %p130 = scmp.eq.s32.totalorder %s16, 1
    %p131 = por %p129, %p130
    %p133 = scmp.ne.s32.totalorder %s116, %s132
    %p134 = scmp.eq.s32.totalorder %s16, 0
    %p135 = por %p133, %p134
    %s136 = ssub.s32 %s18, %s25
    %s137 = ssub.s32 %s17, %s29
    %s138 = sor.u32 %s136, %s137
    %p139 = scmp.eq.s32.totalorder %s138, 0
    %s141 = sadd.s32 %s140, 1
    %s142 = scalar_select %p139, %s140, %s141
    %p145 = pneg %p139
    %p146 = scmp.eq.s32.totalorder %s10, 1
    %p147 = por %p145, %p146
    %p148 = scmp.ne.s32.totalorder %s140, %s143
    %p149 = scmp.eq.s32.totalorder %s10, 0
    %p150 = por %p148, %p149
    %p151 = scmp.ne.s32.totalorder %s140, %s143
    %p152 = scmp.eq.s32.totalorder %s15, 1
    %p153 = por %p151, %p152
    %p154 = scmp.ne.s32.totalorder %s143, %s144
    %p155 = scmp.eq.s32.totalorder %s15, 0
    %p156 = por %p154, %p155
    %p157 = scmp.ne.s32.totalorder %s143, %s144
    %p158 = scmp.eq.s32.totalorder %s16, 1
    %p159 = por %p157, %p158
    %p161 = scmp.ne.s32.totalorder %s144, %s160
    %p162 = scmp.eq.s32.totalorder %s16, 0
    %p163 = por %p161, %p162
    %p164 = scmp.le.s32.totalorder 1, %s10
    %p165 = scmp.lt.s32.totalorder %s10, 3
    %p166 = pnand %p164, %p165
    %p167 = pneg %p166
    // Predicated region
    $region9: #{resnet_layer_forward.7} parent=5 // pred_check
      _
    $region10: #{resnet_layer_forward.7} parent=5 // pred_check_branch
      %169 = sbr.rel (%p166) target = $region12
    $region11: #{resnet_layer_forward.7} parent=5 // pred_region
      %s170 = ssub.s32 %s10, 1
      // Predicated region
      $region13: #{resnet_layer_forward.7} parent=11 // pred_check
        %p171 = pneg %p74
      $region14: #{resnet_layer_forward.7} parent=11 // pred_check_branch
        %173 = sbr.rel (%p171) target = $region16
      $region15: #{resnet_layer_forward.7} parent=11 // pred_region
        %p174 = scmp.lt.s32.totalorder %s19, 0
        %s175 = scalar_select %p174, %s19, 0
        %s176 = smul.addr %s175, 4
        %s177 = scalar_lea.vmem %s1, %s176
      $region16: #{resnet_layer_forward.7} parent=11 // pred_fallthru
        _
      // Predicated region
      $region17: #{resnet_layer_forward.7} parent=11 // pred_check
        %p178 = pneg %p100
      $region18: #{resnet_layer_forward.7} parent=11 // pred_check_branch
        %180 = sbr.rel (%p178) target = $region20
      $region19: #{resnet_layer_forward.7} parent=11 // pred_region
        %p181 = scmp.lt.s32.totalorder %s19, 0
        %s182 = scalar_select %p181, %s19, 0
        %s183 = scalar_lea.vmem %s2, %s182
      $region20: #{resnet_layer_forward.7} parent=11 // pred_fallthru
        _
    $region12: #{resnet_layer_forward.7} parent=5 // pred_fallthru
      _
    %p184 = scmp.lt.s32.totalorder %s10, 2
    // Predicated region
    $region21: #{resnet_layer_forward.7} parent=5 // pred_check
      %p185 = pneg %p184
    $region22: #{resnet_layer_forward.7} parent=5 // pred_check_branch
      %187 = sbr.rel (%p185) target = $region24
    $region23: #{resnet_layer_forward.7} parent=5 // pred_region
      // Predicated region
      $region25: #{resnet_layer_forward.7} parent=23 // pred_check
        %p188 = pneg %p42
      $region26: #{resnet_layer_forward.7} parent=23 // pred_check_branch
        %190 = sbr.rel (%p188) target = $region28
      $region27: #{resnet_layer_forward.7} parent=23 // pred_region
        %p191 = scmp.lt.s32.totalorder %s18, 1
        %s192 = scalar_select %p191, %s18, 1
        %s193 = smul.addr %s192, 30
        %s194 = smul.addr %s193, 4
        %s195 = scalar_lea.vmem %s0, %s194
      $region28: #{resnet_layer_forward.7} parent=23 // pred_fallthru
        _
      // Predicated region
      $region29: #{resnet_layer_forward.7} parent=23 // pred_check
        %p196 = pneg %p122
      $region30: #{resnet_layer_forward.7} parent=23 // pred_check_branch
        %198 = sbr.rel (%p196) target = $region32
      $region31: #{resnet_layer_forward.7} parent=23 // pred_region
        %p199 = scmp.lt.s32.totalorder %s18, 1
        %s200 = scalar_select %p199, %s18, 1
        %p201 = scmp.lt.s32.totalorder %s17, 0
        %s202 = scalar_select %p201, %s17, 0
        %s203 = smul.addr %s200, 8
        %s204 = sadd.s32 %s202, %s203
        %s205 = smul.addr %s204, 4
        %s206 = scalar_lea.vmem %s3, %s205
      $region32: #{resnet_layer_forward.7} parent=23 // pred_fallthru
        _
    $region24: #{resnet_layer_forward.7} parent=5 // pred_fallthru
      _
    %p207 = scmp.le.s32.totalorder 1, %s10
    %p208 = scmp.lt.s32.totalorder %s10, 3
    %p209 = pnand %p207, %p208
    %p210 = pneg %p209
    // Predicated region
    $region33: #{resnet_layer_forward.7} parent=5 // pred_check
      _
    $region34: #{resnet_layer_forward.7} parent=5 // pred_check_branch
      %212 = sbr.rel (%p209) target = $region36
    $region35: #{resnet_layer_forward.7} parent=5 // pred_region
      %s213 = ssub.s32 %s10, 1
      %p214 = scmp.lt.s32.totalorder %s20, 1
      %s215 = scalar_select %p214, %s20, 1
      %s216 = smul.addr %s215, 30
      %s217 = smul.addr %s216, 4
      %s218 = scalar_lea.vmem %s0, %s217
      %p219 = pneg %p48
      %p220 = pneg %p45
      %p221 = scmp.lt.s32.totalorder %s19, 0
      %s222 = scalar_select %p221, %s19, 0
      %s223 = smul.addr %s222, 4
      %s224 = scalar_lea.vmem %s1, %s223
      %p225 = pneg %p74
      %p226 = pneg %p71
      %p227 = scmp.lt.s32.totalorder %s19, 0
      %s228 = scalar_select %p227, %s19, 0
      %s229 = scalar_lea.vmem %s2, %s228
      %p230 = pneg %p100
      %p231 = pneg %p97
      %p232 = scmp.lt.s32.totalorder %s20, 1
      %s233 = scalar_select %p232, %s20, 1
      %p234 = scmp.lt.s32.totalorder %s19, 0
      %s235 = scalar_select %p234, %s19, 0
      %s236 = smul.addr %s233, 8
      %s237 = sadd.s32 %s235, %s236
      %s238 = smul.addr %s237, 4
      %s239 = scalar_lea.vmem %s3, %s238
      %p240 = pneg %p128
      %p241 = pneg %p125
      %p242 = pneg %p156
      %p243 = pneg %p153
      %p244 = scmp.lt.s32.totalorder %s20, 1
      %s245 = scalar_select %p244, %s20, 1
      %p246 = scmp.lt.s32.totalorder %s19, 0
      %s247 = scalar_select %p246, %s19, 0
      %s248 = smul.addr %s245, 8
      %s249 = sadd.s32 %s247, %s248
      %s250 = smul.addr %s249, 4
      %s251 = scalar_lea.vmem %s4, %s250
      %p252 = scmp.lt.s32.totalorder %s20, 1
      %s253 = scalar_select %p252, %s20, 1
      %s254 = smul.addr %s253, 30
      %s255 = smul.addr %s254, 4
      %s256 = scalar_lea.vmem %s0, %s255
      %p257 = scmp.lt.s32.totalorder %s19, 0
      %s258 = scalar_select %p257, %s19, 0
      %s259 = smul.addr %s258, 4
      %s260 = scalar_lea.vmem %s1, %s259
      %p261 = scmp.lt.s32.totalorder %s19, 0
      %s262 = scalar_select %p261, %s19, 0
      %s263 = scalar_lea.vmem %s2, %s262
      %p264 = scmp.lt.s32.totalorder %s20, 1
      %s265 = scalar_select %p264, %s20, 1
      %p266 = scmp.lt.s32.totalorder %s19, 0
      %s267 = scalar_select %p266, %s19, 0
      %s268 = smul.addr %s265, 8
      %s269 = sadd.s32 %s267, %s268
      %s270 = smul.addr %s269, 4
      %s271 = scalar_lea.vmem %s3, %s270
      %p272 = scmp.lt.s32.totalorder %s20, 1
      %s273 = scalar_select %p272, %s20, 1
      %p274 = scmp.lt.s32.totalorder %s19, 0
      %s275 = scalar_select %p274, %s19, 0
      %s276 = smul.addr %s273, 8
      %s277 = sadd.s32 %s275, %s276
      %s278 = smul.addr %s277, 4
      %s279 = scalar_lea.vmem %s4, %s278
      %v280 = vld [vmem:[%s256] sm:$0xf]
      %v281 = vld [vmem:[%s256 + $0x4] sm:$0xf]
      %v282 = vld [vmem:[%s256 + $0x8] sm:$0xf]
      %v283 = vld [vmem:[%s256 + $0xc] sm:$0xf]
      %v284 = vld [vmem:[%s256 + $0x10] sm:$0xf]
      %v285 = vld [vmem:[%s256 + $0x14] sm:$0xf]
      %v286 = vld [vmem:[%s256 + $0x18] sm:$0xf]
      %v287 = vld [vmem:[%s256 + $0x1c] sm:$0xf]
      %v288 = vld [vmem:[%s260] sm:$0xf]
      %v289 = vld [vmem:[%s260 + $0x4] sm:$0xf]
      %v290 = vld [vmem:[%s260 + $0x8] sm:$0xf]
      %v291 = vld [vmem:[%s260 + $0xc] sm:$0xf]
      %v292 = vld [vmem:[%s260 + $0x10] sm:$0xf]
      %v293 = vld [vmem:[%s260 + $0x14] sm:$0xf]
      %v294 = vld [vmem:[%s260 + $0x18] sm:$0xf]
      %v295 = vld [vmem:[%s260 + $0x1c] sm:$0xf]
      %v296 = vld [vmem:[%s260 + $0x20] sm:$0xf]
      %v297 = vld [vmem:[%s260 + $0x24] sm:$0xf]
      %v298 = vld [vmem:[%s260 + $0x28] sm:$0xf]
      %v299 = vld [vmem:[%s260 + $0x2c] sm:$0xf]
      %v300 = vld [vmem:[%s260 + $0x30] sm:$0xf]
      %v301 = vld [vmem:[%s260 + $0x34] sm:$0xf]
      %v302 = vld [vmem:[%s260 + $0x38] sm:$0xf]
      %v303 = vld [vmem:[%s260 + $0x3c] sm:$0xf]
      %s304 = scalar_lea.vmem %s256, 40
      %v305 = vld [vmem:[%s304] sm:$0xf]
      %v306 = vld [vmem:[%s304 + $0x4] sm:$0xf]
      %v307 = vld [vmem:[%s304 + $0x8] sm:$0xf]
      %v308 = vld [vmem:[%s304 + $0xc] sm:$0xf]
      %v309 = vld [vmem:[%s304 + $0x10] sm:$0xf]
      %v310 = vld [vmem:[%s304 + $0x14] sm:$0xf]
      %v311 = vld [vmem:[%s304 + $0x18] sm:$0xf]
      %v312 = vld [vmem:[%s304 + $0x1c] sm:$0xf]
      %s313 = scalar_lea.vmem %s260, 64
      %v314 = vld [vmem:[%s313] sm:$0xf]
      %v315 = vld [vmem:[%s313 + $0x4] sm:$0xf]
      %v316 = vld [vmem:[%s313 + $0x8] sm:$0xf]
      %v317 = vld [vmem:[%s313 + $0xc] sm:$0xf]
      %v318 = vld [vmem:[%s313 + $0x10] sm:$0xf]
      %v319 = vld [vmem:[%s313 + $0x14] sm:$0xf]
      %v320 = vld [vmem:[%s313 + $0x18] sm:$0xf]
      %v321 = vld [vmem:[%s313 + $0x1c] sm:$0xf]
      %v322 = vld [vmem:[%s313 + $0x20] sm:$0xf]
      %v323 = vld [vmem:[%s313 + $0x24] sm:$0xf]
      %v324 = vld [vmem:[%s313 + $0x28] sm:$0xf]
      %v325 = vld [vmem:[%s313 + $0x2c] sm:$0xf]
      %v326 = vld [vmem:[%s313 + $0x30] sm:$0xf]
      %v327 = vld [vmem:[%s313 + $0x34] sm:$0xf]
      %v328 = vld [vmem:[%s313 + $0x38] sm:$0xf]
      %v329 = vld [vmem:[%s313 + $0x3c] sm:$0xf]
      %v338 = vunpack.c.l.b16 %v305
      %v339 = vunpack.c.l.b16 %v306
      %v340 = vunpack.c.l.b16 %v307
      %v341 = vunpack.c.l.b16 %v308
      %v342 = vunpack.c.l.b16 %v309
      %v343 = vunpack.c.l.b16 %v310
      %v344 = vunpack.c.l.b16 %v311
      %v345 = vunpack.c.l.b16 %v312
      %v346 = vpack.c.b16 %v339, %v338
      %v347 = vpack.c.b16 %v341, %v340
      %v348 = vpack.c.b16 %v343, %v342
      %v349 = vpack.c.b16 %v345, %v344
      %v370 = vunpack.c.l.b16 %v314
      %v371 = vunpack.c.l.b16 %v315
      %v372 = vunpack.c.l.b16 %v316
      %v373 = vunpack.c.l.b16 %v317
      %v374 = vunpack.c.l.b16 %v318
      %v375 = vunpack.c.l.b16 %v319
      %v376 = vunpack.c.l.b16 %v320
      %v377 = vunpack.c.l.b16 %v321
      %v378 = vunpack.c.l.b16 %v322
      %v379 = vunpack.c.l.b16 %v323
      %v380 = vunpack.c.l.b16 %v324
      %v381 = vunpack.c.l.b16 %v325
      %v382 = vunpack.c.l.b16 %v326
      %v383 = vunpack.c.l.b16 %v327
      %v384 = vunpack.c.l.b16 %v328
      %v385 = vunpack.c.l.b16 %v329
      %v386 = vpack.c.b16 %v371, %v370
      %v387 = vpack.c.b16 %v373, %v372
      %v388 = vpack.c.b16 %v375, %v374
      %v389 = vpack.c.b16 %v377, %v376
      %v390 = vpack.c.b16 %v379, %v378
      %v391 = vpack.c.b16 %v381, %v380
      %v392 = vpack.c.b16 %v383, %v382
      %v393 = vpack.c.b16 %v385, %v384
      %402 = vmatpush.bf16.msra.mxu0 %v393
      %403 = vmatpush.bf16.msra.mxu0 %v392
      %404 = vmatpush.bf16.msra.mxu0 %v391
      %405 = vmatpush.bf16.msra.mxu0 %v390
      %406 = vmatpush.bf16.msra.mxu0 %v389
      %407 = vmatpush.bf16.msra.mxu0 %v388
      %408 = vmatpush.bf16.msra.mxu0 %v387
      %409 = vmatpush.bf16.msra.mxu0 %v386
      %410 = vmatmul.bf16.gmra.mxu0 %v346
      %v411 = vpop.f32.mrf.mxu0
      %v412 = vadd.f32 0.0, %v411
      %v413 = vpop.f32.mrf.mxu0
      %v414 = vadd.f32 0.0, %v413
      %415 = vmatmul.bf16.gmra.mxu0 %v347
      %v416 = vpop.f32.mrf.mxu0
      %v417 = vadd.f32 0.0, %v416
      %v418 = vpop.f32.mrf.mxu0
      %v419 = vadd.f32 0.0, %v418
      %420 = vmatmul.bf16.gmra.mxu0 %v348
      %v421 = vpop.f32.mrf.mxu0
      %v422 = vadd.f32 0.0, %v421
      %v423 = vpop.f32.mrf.mxu0
      %v424 = vadd.f32 0.0, %v423
      %425 = vmatmul.bf16.gmra.mxu0 %v349
      %v426 = vpop.f32.mrf.mxu0
      %v427 = vadd.f32 0.0, %v426
      %v428 = vpop.f32.mrf.mxu0
      %v429 = vadd.f32 0.0, %v428
      %430 = vdwg.mxu0
      %v439 = vunpack.c.l.b16 %v280
      %v440 = vunpack.c.l.b16 %v281
      %v441 = vunpack.c.l.b16 %v282
      %v442 = vunpack.c.l.b16 %v283
      %v443 = vunpack.c.l.b16 %v284
      %v444 = vunpack.c.l.b16 %v285
      %v445 = vunpack.c.l.b16 %v286
      %v446 = vunpack.c.l.b16 %v287
      %v447 = vpack.c.b16 %v440, %v439
      %v448 = vpack.c.b16 %v442, %v441
      %v449 = vpack.c.b16 %v444, %v443
      %v450 = vpack.c.b16 %v446, %v445
      %v471 = vunpack.c.l.b16 %v288
      %v472 = vunpack.c.l.b16 %v289
      %v473 = vunpack.c.l.b16 %v290
      %v474 = vunpack.c.l.b16 %v291
      %v475 = vunpack.c.l.b16 %v292
      %v476 = vunpack.c.l.b16 %v293
      %v477 = vunpack.c.l.b16 %v294
      %v478 = vunpack.c.l.b16 %v295
      %v479 = vunpack.c.l.b16 %v296
      %v480 = vunpack.c.l.b16 %v297
      %v481 = vunpack.c.l.b16 %v298
      %v482 = vunpack.c.l.b16 %v299
      %v483 = vunpack.c.l.b16 %v300
      %v484 = vunpack.c.l.b16 %v301
      %v485 = vunpack.c.l.b16 %v302
      %v486 = vunpack.c.l.b16 %v303
      %v487 = vpack.c.b16 %v472, %v471
      %v488 = vpack.c.b16 %v474, %v473
      %v489 = vpack.c.b16 %v476, %v475
      %v490 = vpack.c.b16 %v478, %v477
      %v491 = vpack.c.b16 %v480, %v479
      %v492 = vpack.c.b16 %v482, %v481
      %v493 = vpack.c.b16 %v484, %v483
      %v494 = vpack.c.b16 %v486, %v485
      %503 = vmatpush.bf16.msra.mxu0 %v494
      %504 = vmatpush.bf16.msra.mxu0 %v493
      %505 = vmatpush.bf16.msra.mxu0 %v492
      %506 = vmatpush.bf16.msra.mxu0 %v491
      %507 = vmatpush.bf16.msra.mxu0 %v490
      %508 = vmatpush.bf16.msra.mxu0 %v489
      %509 = vmatpush.bf16.msra.mxu0 %v488
      %510 = vmatpush.bf16.msra.mxu0 %v487
      %511 = vmatmul.bf16.gmra.mxu0 %v447
      %v512 = vpop.f32.mrf.mxu0
      %v513 = vadd.f32 %v412, %v512
      %v514 = vpop.f32.mrf.mxu0
      %v515 = vadd.f32 %v414, %v514
      %516 = vmatmul.bf16.gmra.mxu0 %v448
      %v517 = vpop.f32.mrf.mxu0
      %v518 = vadd.f32 %v417, %v517
      %v519 = vpop.f32.mrf.mxu0
      %v520 = vadd.f32 %v419, %v519
      %521 = vmatmul.bf16.gmra.mxu0 %v449
      %v522 = vpop.f32.mrf.mxu0
      %v523 = vadd.f32 %v422, %v522
      %v524 = vpop.f32.mrf.mxu0
      %v525 = vadd.f32 %v424, %v524
      %526 = vmatmul.bf16.gmra.mxu0 %v450
      %v527 = vpop.f32.mrf.mxu0
      %v528 = vadd.f32 %v427, %v527
      %v529 = vpop.f32.mrf.mxu0
      %v530 = vadd.f32 %v429, %v529
      %531 = vdwg.mxu0
      %s532 = scalar_lea.vmem %s256, 80
      %v533 = vld [vmem:[%s532] sm:$0xf]
      %v534 = vld [vmem:[%s532 + $0x4] sm:$0xf]
      %v535 = vld [vmem:[%s532 + $0x8] sm:$0xf]
      %v536 = vld [vmem:[%s532 + $0xc] sm:$0xf]
      %v537 = vld [vmem:[%s532 + $0x10] sm:$0xf]
      %v538 = vld [vmem:[%s532 + $0x14] sm:$0xf]
      %v539 = vld [vmem:[%s532 + $0x18] sm:$0xf]
      %v540 = vld [vmem:[%s532 + $0x1c] sm:$0xf]
      %s541 = scalar_lea.vmem %s260, 128
      %v542 = vld [vmem:[%s541] sm:$0xf]
      %v543 = vld [vmem:[%s541 + $0x4] sm:$0xf]
      %v544 = vld [vmem:[%s541 + $0x8] sm:$0xf]
      %v545 = vld [vmem:[%s541 + $0xc] sm:$0xf]
      %v546 = vld [vmem:[%s541 + $0x10] sm:$0xf]
      %v547 = vld [vmem:[%s541 + $0x14] sm:$0xf]
      %v548 = vld [vmem:[%s541 + $0x18] sm:$0xf]
      %v549 = vld [vmem:[%s541 + $0x1c] sm:$0xf]
      %v550 = vld [vmem:[%s541 + $0x20] sm:$0xf]
      %v551 = vld [vmem:[%s541 + $0x24] sm:$0xf]
      %v552 = vld [vmem:[%s541 + $0x28] sm:$0xf]
      %v553 = vld [vmem:[%s541 + $0x2c] sm:$0xf]
      %v554 = vld [vmem:[%s541 + $0x30] sm:$0xf]
      %v555 = vld [vmem:[%s541 + $0x34] sm:$0xf]
      %v556 = vld [vmem:[%s541 + $0x38] sm:$0xf]
      %v557 = vld [vmem:[%s541 + $0x3c] sm:$0xf]
      %v566 = vunpack.c.l.b16 %v533
      %v567 = vunpack.c.l.b16 %v534
      %v568 = vunpack.c.l.b16 %v535
      %v569 = vunpack.c.l.b16 %v536
      %v570 = vunpack.c.l.b16 %v537
      %v571 = vunpack.c.l.b16 %v538
      %v572 = vunpack.c.l.b16 %v539
      %v573 = vunpack.c.l.b16 %v540
      %v574 = vpack.c.b16 %v567, %v566
      %v575 = vpack.c.b16 %v569, %v568
      %v576 = vpack.c.b16 %v571, %v570
      %v577 = vpack.c.b16 %v573, %v572
      %v598 = vunpack.c.l.b16 %v542
      %v599 = vunpack.c.l.b16 %v543
      %v600 = vunpack.c.l.b16 %v544
      %v601 = vunpack.c.l.b16 %v545
      %v602 = vunpack.c.l.b16 %v546
      %v603 = vunpack.c.l.b16 %v547
      %v604 = vunpack.c.l.b16 %v548
      %v605 = vunpack.c.l.b16 %v549
      %v606 = vunpack.c.l.b16 %v550
      %v607 = vunpack.c.l.b16 %v551
      %v608 = vunpack.c.l.b16 %v552
      %v609 = vunpack.c.l.b16 %v553
      %v610 = vunpack.c.l.b16 %v554
      %v611 = vunpack.c.l.b16 %v555
      %v612 = vunpack.c.l.b16 %v556
      %v613 = vunpack.c.l.b16 %v557
      %v614 = vpack.c.b16 %v599, %v598
      %v615 = vpack.c.b16 %v601, %v600
      %v616 = vpack.c.b16 %v603, %v602
      %v617 = vpack.c.b16 %v605, %v604
      %v618 = vpack.c.b16 %v607, %v606
      %v619 = vpack.c.b16 %v609, %v608
      %v620 = vpack.c.b16 %v611, %v610
      %v621 = vpack.c.b16 %v613, %v612
      %630 = vmatpush.bf16.msra.mxu0 %v621
      %631 = vmatpush.bf16.msra.mxu0 %v620
      %632 = vmatpush.bf16.msra.mxu0 %v619
      %633 = vmatpush.bf16.msra.mxu0 %v618
      %634 = vmatpush.bf16.msra.mxu0 %v617
      %635 = vmatpush.bf16.msra.mxu0 %v616
      %636 = vmatpush.bf16.msra.mxu0 %v615
      %637 = vmatpush.bf16.msra.mxu0 %v614
      %638 = vmatmul.bf16.gmra.mxu0 %v574
      %v639 = vpop.f32.mrf.mxu0
      %v640 = vadd.f32 0.0, %v639
      %v641 = vpop.f32.mrf.mxu0
      %v642 = vadd.f32 0.0, %v641
      %643 = vmatmul.bf16.gmra.mxu0 %v575
      %v644 = vpop.f32.mrf.mxu0
      %v645 = vadd.f32 0.0, %v644
      %v646 = vpop.f32.mrf.mxu0
      %v647 = vadd.f32 0.0, %v646
      %648 = vmatmul.bf16.gmra.mxu0 %v576
      %v649 = vpop.f32.mrf.mxu0
      %v650 = vadd.f32 0.0, %v649
      %v651 = vpop.f32.mrf.mxu0
      %v652 = vadd.f32 0.0, %v651
      %653 = vmatmul.bf16.gmra.mxu0 %v577
      %v654 = vpop.f32.mrf.mxu0
      %v655 = vadd.f32 0.0, %v654
      %v656 = vpop.f32.mrf.mxu0
      %v657 = vadd.f32 0.0, %v656
      %658 = vdwg.mxu0
      %v659 = vadd.f32 %v513, %v640
      %v660 = vadd.f32 %v515, %v642
      %v661 = vadd.f32 %v518, %v645
      %v662 = vadd.f32 %v520, %v647
      %v663 = vadd.f32 %v523, %v650
      %v664 = vadd.f32 %v525, %v652
      %v665 = vadd.f32 %v528, %v655
      %v666 = vadd.f32 %v530, %v657
      %s667 = scalar_lea.vmem %s256, 4
      %v668 = vld [vmem:[%s667] sm:$0xf]
      %v669 = vld [vmem:[%s667 + $0x4] sm:$0xf]
      %v670 = vld [vmem:[%s667 + $0x8] sm:$0xf]
      %v671 = vld [vmem:[%s667 + $0xc] sm:$0xf]
      %v672 = vld [vmem:[%s667 + $0x10] sm:$0xf]
      %v673 = vld [vmem:[%s667 + $0x14] sm:$0xf]
      %v674 = vld [vmem:[%s667 + $0x18] sm:$0xf]
      %v675 = vld [vmem:[%s667 + $0x1c] sm:$0xf]
      %s676 = scalar_lea.vmem %s260, 192
      %v677 = vld [vmem:[%s676] sm:$0xf]
      %v678 = vld [vmem:[%s676 + $0x4] sm:$0xf]
      %v679 = vld [vmem:[%s676 + $0x8] sm:$0xf]
      %v680 = vld [vmem:[%s676 + $0xc] sm:$0xf]
      %v681 = vld [vmem:[%s676 + $0x10] sm:$0xf]
      %v682 = vld [vmem:[%s676 + $0x14] sm:$0xf]
      %v683 = vld [vmem:[%s676 + $0x18] sm:$0xf]
      %v684 = vld [vmem:[%s676 + $0x1c] sm:$0xf]
      %v685 = vld [vmem:[%s676 + $0x20] sm:$0xf]
      %v686 = vld [vmem:[%s676 + $0x24] sm:$0xf]
      %v687 = vld [vmem:[%s676 + $0x28] sm:$0xf]
      %v688 = vld [vmem:[%s676 + $0x2c] sm:$0xf]
      %v689 = vld [vmem:[%s676 + $0x30] sm:$0xf]
      %v690 = vld [vmem:[%s676 + $0x34] sm:$0xf]
      %v691 = vld [vmem:[%s676 + $0x38] sm:$0xf]
      %v692 = vld [vmem:[%s676 + $0x3c] sm:$0xf]
      %v701 = vunpack.c.l.b16 %v668
      %v702 = vunpack.c.l.b16 %v669
      %v703 = vunpack.c.l.b16 %v670
      %v704 = vunpack.c.l.b16 %v671
      %v705 = vunpack.c.l.b16 %v672
      %v706 = vunpack.c.l.b16 %v673
      %v707 = vunpack.c.l.b16 %v674
      %v708 = vunpack.c.l.b16 %v675
      %v709 = vpack.c.b16 %v702, %v701
      %v710 = vpack.c.b16 %v704, %v703
      %v711 = vpack.c.b16 %v706, %v705
      %v712 = vpack.c.b16 %v708, %v707
      %v733 = vunpack.c.l.b16 %v677
      %v734 = vunpack.c.l.b16 %v678
      %v735 = vunpack.c.l.b16 %v679
      %v736 = vunpack.c.l.b16 %v680
      %v737 = vunpack.c.l.b16 %v681
      %v738 = vunpack.c.l.b16 %v682
      %v739 = vunpack.c.l.b16 %v683
      %v740 = vunpack.c.l.b16 %v684
      %v741 = vunpack.c.l.b16 %v685
      %v742 = vunpack.c.l.b16 %v686
      %v743 = vunpack.c.l.b16 %v687
      %v744 = vunpack.c.l.b16 %v688
      %v745 = vunpack.c.l.b16 %v689
      %v746 = vunpack.c.l.b16 %v690
      %v747 = vunpack.c.l.b16 %v691
      %v748 = vunpack.c.l.b16 %v692
      %v749 = vpack.c.b16 %v734, %v733
      %v750 = vpack.c.b16 %v736, %v735
      %v751 = vpack.c.b16 %v738, %v737
      %v752 = vpack.c.b16 %v740, %v739
      %v753 = vpack.c.b16 %v742, %v741
      %v754 = vpack.c.b16 %v744, %v743
      %v755 = vpack.c.b16 %v746, %v745
      %v756 = vpack.c.b16 %v748, %v747
      %765 = vmatpush.bf16.msra.mxu0 %v756
      %766 = vmatpush.bf16.msra.mxu0 %v755
      %767 = vmatpush.bf16.msra.mxu0 %v754
      %768 = vmatpush.bf16.msra.mxu0 %v753
      %769 = vmatpush.bf16.msra.mxu0 %v752
      %770 = vmatpush.bf16.msra.mxu0 %v751
      %771 = vmatpush.bf16.msra.mxu0 %v750
      %772 = vmatpush.bf16.msra.mxu0 %v749
      %773 = vmatmul.bf16.gmra.mxu0 %v709
      %v774 = vpop.f32.mrf.mxu0
      %v775 = vadd.f32 0.0, %v774
      %v776 = vpop.f32.mrf.mxu0
      %v777 = vadd.f32 0.0, %v776
      %778 = vmatmul.bf16.gmra.mxu0 %v710
      %v779 = vpop.f32.mrf.mxu0
      %v780 = vadd.f32 0.0, %v779
      %v781 = vpop.f32.mrf.mxu0
      %v782 = vadd.f32 0.0, %v781
      %783 = vmatmul.bf16.gmra.mxu0 %v711
      %v784 = vpop.f32.mrf.mxu0
      %v785 = vadd.f32 0.0, %v784
      %v786 = vpop.f32.mrf.mxu0
      %v787 = vadd.f32 0.0, %v786
      %788 = vmatmul.bf16.gmra.mxu0 %v712
      %v789 = vpop.f32.mrf.mxu0
      %v790 = vadd.f32 0.0, %v789
      %v791 = vpop.f32.mrf.mxu0
      %v792 = vadd.f32 0.0, %v791
      %793 = vdwg.mxu0
      %v794 = vadd.f32 %v659, %v775
      %v795 = vadd.f32 %v660, %v777
      %v796 = vadd.f32 %v661, %v780
      %v797 = vadd.f32 %v662, %v782
      %v798 = vadd.f32 %v663, %v785
      %v799 = vadd.f32 %v664, %v787
      %v800 = vadd.f32 %v665, %v790
      %v801 = vadd.f32 %v666, %v792
      %s802 = scalar_lea.vmem %s256, 44
      %v803 = vld [vmem:[%s802] sm:$0xf]
      %v804 = vld [vmem:[%s802 + $0x4] sm:$0xf]
      %v805 = vld [vmem:[%s802 + $0x8] sm:$0xf]
      %v806 = vld [vmem:[%s802 + $0xc] sm:$0xf]
      %v807 = vld [vmem:[%s802 + $0x10] sm:$0xf]
      %v808 = vld [vmem:[%s802 + $0x14] sm:$0xf]
      %v809 = vld [vmem:[%s802 + $0x18] sm:$0xf]
      %v810 = vld [vmem:[%s802 + $0x1c] sm:$0xf]
      %s811 = scalar_lea.vmem %s260, 256
      %v812 = vld [vmem:[%s811] sm:$0xf]
      %v813 = vld [vmem:[%s811 + $0x4] sm:$0xf]
      %v814 = vld [vmem:[%s811 + $0x8] sm:$0xf]
      %v815 = vld [vmem:[%s811 + $0xc] sm:$0xf]
      %v816 = vld [vmem:[%s811 + $0x10] sm:$0xf]
      %v817 = vld [vmem:[%s811 + $0x14] sm:$0xf]
      %v818 = vld [vmem:[%s811 + $0x18] sm:$0xf]
      %v819 = vld [vmem:[%s811 + $0x1c] sm:$0xf]
      %v820 = vld [vmem:[%s811 + $0x20] sm:$0xf]
      %v821 = vld [vmem:[%s811 + $0x24] sm:$0xf]
      %v822 = vld [vmem:[%s811 + $0x28] sm:$0xf]
      %v823 = vld [vmem:[%s811 + $0x2c] sm:$0xf]
      %v824 = vld [vmem:[%s811 + $0x30] sm:$0xf]
      %v825 = vld [vmem:[%s811 + $0x34] sm:$0xf]
      %v826 = vld [vmem:[%s811 + $0x38] sm:$0xf]
      %v827 = vld [vmem:[%s811 + $0x3c] sm:$0xf]
      %v836 = vunpack.c.l.b16 %v803
      %v837 = vunpack.c.l.b16 %v804
      %v838 = vunpack.c.l.b16 %v805
      %v839 = vunpack.c.l.b16 %v806
      %v840 = vunpack.c.l.b16 %v807
      %v841 = vunpack.c.l.b16 %v808
      %v842 = vunpack.c.l.b16 %v809
      %v843 = vunpack.c.l.b16 %v810
      %v844 = vpack.c.b16 %v837, %v836
      %v845 = vpack.c.b16 %v839, %v838
      %v846 = vpack.c.b16 %v841, %v840
      %v847 = vpack.c.b16 %v843, %v842
      %v868 = vunpack.c.l.b16 %v812
      %v869 = vunpack.c.l.b16 %v813
      %v870 = vunpack.c.l.b16 %v814
      %v871 = vunpack.c.l.b16 %v815
      %v872 = vunpack.c.l.b16 %v816
      %v873 = vunpack.c.l.b16 %v817
      %v874 = vunpack.c.l.b16 %v818
      %v875 = vunpack.c.l.b16 %v819
      %v876 = vunpack.c.l.b16 %v820
      %v877 = vunpack.c.l.b16 %v821
      %v878 = vunpack.c.l.b16 %v822
      %v879 = vunpack.c.l.b16 %v823
      %v880 = vunpack.c.l.b16 %v824
      %v881 = vunpack.c.l.b16 %v825
      %v882 = vunpack.c.l.b16 %v826
      %v883 = vunpack.c.l.b16 %v827
      %v884 = vpack.c.b16 %v869, %v868
      %v885 = vpack.c.b16 %v871, %v870
      %v886 = vpack.c.b16 %v873, %v872
      %v887 = vpack.c.b16 %v875, %v874
      %v888 = vpack.c.b16 %v877, %v876
      %v889 = vpack.c.b16 %v879, %v878
      %v890 = vpack.c.b16 %v881, %v880
      %v891 = vpack.c.b16 %v883, %v882
      %900 = vmatpush.bf16.msra.mxu0 %v891
      %901 = vmatpush.bf16.msra.mxu0 %v890
      %902 = vmatpush.bf16.msra.mxu0 %v889
      %903 = vmatpush.bf16.msra.mxu0 %v888
      %904 = vmatpush.bf16.msra.mxu0 %v887
      %905 = vmatpush.bf16.msra.mxu0 %v886
      %906 = vmatpush.bf16.msra.mxu0 %v885
      %907 = vmatpush.bf16.msra.mxu0 %v884
      %908 = vmatmul.bf16.gmra.mxu0 %v844
      %v909 = vpop.f32.mrf.mxu0
      %v910 = vadd.f32 0.0, %v909
      %v911 = vpop.f32.mrf.mxu0
      %v912 = vadd.f32 0.0, %v911
      %913 = vmatmul.bf16.gmra.mxu0 %v845
      %v914 = vpop.f32.mrf.mxu0
      %v915 = vadd.f32 0.0, %v914
      %v916 = vpop.f32.mrf.mxu0
      %v917 = vadd.f32 0.0, %v916
      %918 = vmatmul.bf16.gmra.mxu0 %v846
      %v919 = vpop.f32.mrf.mxu0
      %v920 = vadd.f32 0.0, %v919
      %v921 = vpop.f32.mrf.mxu0
      %v922 = vadd.f32 0.0, %v921
      %923 = vmatmul.bf16.gmra.mxu0 %v847
      %v924 = vpop.f32.mrf.mxu0
      %v925 = vadd.f32 0.0, %v924
      %v926 = vpop.f32.mrf.mxu0
      %v927 = vadd.f32 0.0, %v926
      %928 = vdwg.mxu0
      %v929 = vadd.f32 %v794, %v910
      %v930 = vadd.f32 %v795, %v912
      %v931 = vadd.f32 %v796, %v915
      %v932 = vadd.f32 %v797, %v917
      %v933 = vadd.f32 %v798, %v920
      %v934 = vadd.f32 %v799, %v922
      %v935 = vadd.f32 %v800, %v925
      %v936 = vadd.f32 %v801, %v927
      %s937 = scalar_lea.vmem %s256, 84
      %v938 = vld [vmem:[%s937] sm:$0xf]
      %v939 = vld [vmem:[%s937 + $0x4] sm:$0xf]
      %v940 = vld [vmem:[%s937 + $0x8] sm:$0xf]
      %v941 = vld [vmem:[%s937 + $0xc] sm:$0xf]
      %v942 = vld [vmem:[%s937 + $0x10] sm:$0xf]
      %v943 = vld [vmem:[%s937 + $0x14] sm:$0xf]
      %v944 = vld [vmem:[%s937 + $0x18] sm:$0xf]
      %v945 = vld [vmem:[%s937 + $0x1c] sm:$0xf]
      %s946 = scalar_lea.vmem %s260, 320
      %v947 = vld [vmem:[%s946] sm:$0xf]
      %v948 = vld [vmem:[%s946 + $0x4] sm:$0xf]
      %v949 = vld [vmem:[%s946 + $0x8] sm:$0xf]
      %v950 = vld [vmem:[%s946 + $0xc] sm:$0xf]
      %v951 = vld [vmem:[%s946 + $0x10] sm:$0xf]
      %v952 = vld [vmem:[%s946 + $0x14] sm:$0xf]
      %v953 = vld [vmem:[%s946 + $0x18] sm:$0xf]
      %v954 = vld [vmem:[%s946 + $0x1c] sm:$0xf]
      %v955 = vld [vmem:[%s946 + $0x20] sm:$0xf]
      %v956 = vld [vmem:[%s946 + $0x24] sm:$0xf]
      %v957 = vld [vmem:[%s946 + $0x28] sm:$0xf]
      %v958 = vld [vmem:[%s946 + $0x2c] sm:$0xf]
      %v959 = vld [vmem:[%s946 + $0x30] sm:$0xf]
      %v960 = vld [vmem:[%s946 + $0x34] sm:$0xf]
      %v961 = vld [vmem:[%s946 + $0x38] sm:$0xf]
      %v962 = vld [vmem:[%s946 + $0x3c] sm:$0xf]
      %v971 = vunpack.c.l.b16 %v938
      %v972 = vunpack.c.l.b16 %v939
      %v973 = vunpack.c.l.b16 %v940
      %v974 = vunpack.c.l.b16 %v941
      %v975 = vunpack.c.l.b16 %v942
      %v976 = vunpack.c.l.b16 %v943
      %v977 = vunpack.c.l.b16 %v944
      %v978 = vunpack.c.l.b16 %v945
      %v979 = vpack.c.b16 %v972, %v971
      %v980 = vpack.c.b16 %v974, %v973
      %v981 = vpack.c.b16 %v976, %v975
      %v982 = vpack.c.b16 %v978, %v977
      %v1003 = vunpack.c.l.b16 %v947
      %v1004 = vunpack.c.l.b16 %v948
      %v1005 = vunpack.c.l.b16 %v949
      %v1006 = vunpack.c.l.b16 %v950
      %v1007 = vunpack.c.l.b16 %v951
      %v1008 = vunpack.c.l.b16 %v952
      %v1009 = vunpack.c.l.b16 %v953
      %v1010 = vunpack.c.l.b16 %v954
      %v1011 = vunpack.c.l.b16 %v955
      %v1012 = vunpack.c.l.b16 %v956
      %v1013 = vunpack.c.l.b16 %v957
      %v1014 = vunpack.c.l.b16 %v958
      %v1015 = vunpack.c.l.b16 %v959
      %v1016 = vunpack.c.l.b16 %v960
      %v1017 = vunpack.c.l.b16 %v961
      %v1018 = vunpack.c.l.b16 %v962
      %v1019 = vpack.c.b16 %v1004, %v1003
      %v1020 = vpack.c.b16 %v1006, %v1005
      %v1021 = vpack.c.b16 %v1008, %v1007
      %v1022 = vpack.c.b16 %v1010, %v1009
      %v1023 = vpack.c.b16 %v1012, %v1011
      %v1024 = vpack.c.b16 %v1014, %v1013
      %v1025 = vpack.c.b16 %v1016, %v1015
      %v1026 = vpack.c.b16 %v1018, %v1017
      %1035 = vmatpush.bf16.msra.mxu0 %v1026
      %1036 = vmatpush.bf16.msra.mxu0 %v1025
      %1037 = vmatpush.bf16.msra.mxu0 %v1024
      %1038 = vmatpush.bf16.msra.mxu0 %v1023
      %1039 = vmatpush.bf16.msra.mxu0 %v1022
      %1040 = vmatpush.bf16.msra.mxu0 %v1021
      %1041 = vmatpush.bf16.msra.mxu0 %v1020
      %1042 = vmatpush.bf16.msra.mxu0 %v1019
      %1043 = vmatmul.bf16.gmra.mxu0 %v979
      %v1044 = vpop.f32.mrf.mxu0
      %v1045 = vadd.f32 0.0, %v1044
      %v1046 = vpop.f32.mrf.mxu0
      %v1047 = vadd.f32 0.0, %v1046
      %1048 = vmatmul.bf16.gmra.mxu0 %v980
      %v1049 = vpop.f32.mrf.mxu0
      %v1050 = vadd.f32 0.0, %v1049
      %v1051 = vpop.f32.mrf.mxu0
      %v1052 = vadd.f32 0.0, %v1051
      %1053 = vmatmul.bf16.gmra.mxu0 %v981
      %v1054 = vpop.f32.mrf.mxu0
      %v1055 = vadd.f32 0.0, %v1054
      %v1056 = vpop.f32.mrf.mxu0
      %v1057 = vadd.f32 0.0, %v1056
      %1058 = vmatmul.bf16.gmra.mxu0 %v982
      %v1059 = vpop.f32.mrf.mxu0
      %v1060 = vadd.f32 0.0, %v1059
      %v1061 = vpop.f32.mrf.mxu0
      %v1062 = vadd.f32 0.0, %v1061
      %1063 = vdwg.mxu0
      %v1064 = vadd.f32 %v929, %v1045
      %v1065 = vadd.f32 %v930, %v1047
      %v1066 = vadd.f32 %v931, %v1050
      %v1067 = vadd.f32 %v932, %v1052
      %v1068 = vadd.f32 %v933, %v1055
      %v1069 = vadd.f32 %v934, %v1057
      %v1070 = vadd.f32 %v935, %v1060
      %v1071 = vadd.f32 %v936, %v1062
      %s1072 = scalar_lea.vmem %s256, 8
      %v1073 = vld [vmem:[%s1072] sm:$0xf]
      %v1074 = vld [vmem:[%s1072 + $0x4] sm:$0xf]
      %v1075 = vld [vmem:[%s1072 + $0x8] sm:$0xf]
      %v1076 = vld [vmem:[%s1072 + $0xc] sm:$0xf]
      %v1077 = vld [vmem:[%s1072 + $0x10] sm:$0xf]
      %v1078 = vld [vmem:[%s1072 + $0x14] sm:$0xf]
      %v1079 = vld [vmem:[%s1072 + $0x18] sm:$0xf]
      %v1080 = vld [vmem:[%s1072 + $0x1c] sm:$0xf]
      %s1081 = scalar_lea.vmem %s260, 384
      %v1082 = vld [vmem:[%s1081] sm:$0xf]
      %v1083 = vld [vmem:[%s1081 + $0x4] sm:$0xf]
      %v1084 = vld [vmem:[%s1081 + $0x8] sm:$0xf]
      %v1085 = vld [vmem:[%s1081 + $0xc] sm:$0xf]
      %v1086 = vld [vmem:[%s1081 + $0x10] sm:$0xf]
      %v1087 = vld [vmem:[%s1081 + $0x14] sm:$0xf]
      %v1088 = vld [vmem:[%s1081 + $0x18] sm:$0xf]
      %v1089 = vld [vmem:[%s1081 + $0x1c] sm:$0xf]
      %v1090 = vld [vmem:[%s1081 + $0x20] sm:$0xf]
      %v1091 = vld [vmem:[%s1081 + $0x24] sm:$0xf]
      %v1092 = vld [vmem:[%s1081 + $0x28] sm:$0xf]
      %v1093 = vld [vmem:[%s1081 + $0x2c] sm:$0xf]
      %v1094 = vld [vmem:[%s1081 + $0x30] sm:$0xf]
      %v1095 = vld [vmem:[%s1081 + $0x34] sm:$0xf]
      %v1096 = vld [vmem:[%s1081 + $0x38] sm:$0xf]
      %v1097 = vld [vmem:[%s1081 + $0x3c] sm:$0xf]
      %v1106 = vunpack.c.l.b16 %v1073
      %v1107 = vunpack.c.l.b16 %v1074
      %v1108 = vunpack.c.l.b16 %v1075
      %v1109 = vunpack.c.l.b16 %v1076
      %v1110 = vunpack.c.l.b16 %v1077
      %v1111 = vunpack.c.l.b16 %v1078
      %v1112 = vunpack.c.l.b16 %v1079
      %v1113 = vunpack.c.l.b16 %v1080
      %v1114 = vpack.c.b16 %v1107, %v1106
      %v1115 = vpack.c.b16 %v1109, %v1108
      %v1116 = vpack.c.b16 %v1111, %v1110
      %v1117 = vpack.c.b16 %v1113, %v1112
      %v1138 = vunpack.c.l.b16 %v1082
      %v1139 = vunpack.c.l.b16 %v1083
      %v1140 = vunpack.c.l.b16 %v1084
      %v1141 = vunpack.c.l.b16 %v1085
      %v1142 = vunpack.c.l.b16 %v1086
      %v1143 = vunpack.c.l.b16 %v1087
      %v1144 = vunpack.c.l.b16 %v1088
      %v1145 = vunpack.c.l.b16 %v1089
      %v1146 = vunpack.c.l.b16 %v1090
      %v1147 = vunpack.c.l.b16 %v1091
      %v1148 = vunpack.c.l.b16 %v1092
      %v1149 = vunpack.c.l.b16 %v1093
      %v1150 = vunpack.c.l.b16 %v1094
      %v1151 = vunpack.c.l.b16 %v1095
      %v1152 = vunpack.c.l.b16 %v1096
      %v1153 = vunpack.c.l.b16 %v1097
      %v1154 = vpack.c.b16 %v1139, %v1138
      %v1155 = vpack.c.b16 %v1141, %v1140
      %v1156 = vpack.c.b16 %v1143, %v1142
      %v1157 = vpack.c.b16 %v1145, %v1144
      %v1158 = vpack.c.b16 %v1147, %v1146
      %v1159 = vpack.c.b16 %v1149, %v1148
      %v1160 = vpack.c.b16 %v1151, %v1150
      %v1161 = vpack.c.b16 %v1153, %v1152
      %1170 = vmatpush.bf16.msra.mxu0 %v1161
      %1171 = vmatpush.bf16.msra.mxu0 %v1160
      %1172 = vmatpush.bf16.msra.mxu0 %v1159
      %1173 = vmatpush.bf16.msra.mxu0 %v1158
      %1174 = vmatpush.bf16.msra.mxu0 %v1157
      %1175 = vmatpush.bf16.msra.mxu0 %v1156
      %1176 = vmatpush.bf16.msra.mxu0 %v1155
      %1177 = vmatpush.bf16.msra.mxu0 %v1154
      %1178 = vmatmul.bf16.gmra.mxu0 %v1114
      %v1179 = vpop.f32.mrf.mxu0
      %v1180 = vadd.f32 0.0, %v1179
      %v1181 = vpop.f32.mrf.mxu0
      %v1182 = vadd.f32 0.0, %v1181
      %1183 = vmatmul.bf16.gmra.mxu0 %v1115
      %v1184 = vpop.f32.mrf.mxu0
      %v1185 = vadd.f32 0.0, %v1184
      %v1186 = vpop.f32.mrf.mxu0
      %v1187 = vadd.f32 0.0, %v1186
      %1188 = vmatmul.bf16.gmra.mxu0 %v1116
      %v1189 = vpop.f32.mrf.mxu0
      %v1190 = vadd.f32 0.0, %v1189
      %v1191 = vpop.f32.mrf.mxu0
      %v1192 = vadd.f32 0.0, %v1191
      %1193 = vmatmul.bf16.gmra.mxu0 %v1117
      %v1194 = vpop.f32.mrf.mxu0
      %v1195 = vadd.f32 0.0, %v1194
      %v1196 = vpop.f32.mrf.mxu0
      %v1197 = vadd.f32 0.0, %v1196
      %1198 = vdwg.mxu0
      %v1199 = vadd.f32 %v1064, %v1180
      %v1200 = vadd.f32 %v1065, %v1182
      %v1201 = vadd.f32 %v1066, %v1185
      %v1202 = vadd.f32 %v1067, %v1187
      %v1203 = vadd.f32 %v1068, %v1190
      %v1204 = vadd.f32 %v1069, %v1192
      %v1205 = vadd.f32 %v1070, %v1195
      %v1206 = vadd.f32 %v1071, %v1197
      %s1207 = scalar_lea.vmem %s256, 48
      %v1208 = vld [vmem:[%s1207] sm:$0xf]
      %v1209 = vld [vmem:[%s1207 + $0x4] sm:$0xf]
      %v1210 = vld [vmem:[%s1207 + $0x8] sm:$0xf]
      %v1211 = vld [vmem:[%s1207 + $0xc] sm:$0xf]
      %v1212 = vld [vmem:[%s1207 + $0x10] sm:$0xf]
      %v1213 = vld [vmem:[%s1207 + $0x14] sm:$0xf]
      %v1214 = vld [vmem:[%s1207 + $0x18] sm:$0xf]
      %v1215 = vld [vmem:[%s1207 + $0x1c] sm:$0xf]
      %s1216 = scalar_lea.vmem %s260, 448
      %v1217 = vld [vmem:[%s1216] sm:$0xf]
      %v1218 = vld [vmem:[%s1216 + $0x4] sm:$0xf]
      %v1219 = vld [vmem:[%s1216 + $0x8] sm:$0xf]
      %v1220 = vld [vmem:[%s1216 + $0xc] sm:$0xf]
      %v1221 = vld [vmem:[%s1216 + $0x10] sm:$0xf]
      %v1222 = vld [vmem:[%s1216 + $0x14] sm:$0xf]
      %v1223 = vld [vmem:[%s1216 + $0x18] sm:$0xf]
      %v1224 = vld [vmem:[%s1216 + $0x1c] sm:$0xf]
      %v1225 = vld [vmem:[%s1216 + $0x20] sm:$0xf]
      %v1226 = vld [vmem:[%s1216 + $0x24] sm:$0xf]
      %v1227 = vld [vmem:[%s1216 + $0x28] sm:$0xf]
      %v1228 = vld [vmem:[%s1216 + $0x2c] sm:$0xf]
      %v1229 = vld [vmem:[%s1216 + $0x30] sm:$0xf]
      %v1230 = vld [vmem:[%s1216 + $0x34] sm:$0xf]
      %v1231 = vld [vmem:[%s1216 + $0x38] sm:$0xf]
      %v1232 = vld [vmem:[%s1216 + $0x3c] sm:$0xf]
      %v1241 = vunpack.c.l.b16 %v1208
      %v1242 = vunpack.c.l.b16 %v1209
      %v1243 = vunpack.c.l.b16 %v1210
      %v1244 = vunpack.c.l.b16 %v1211
      %v1245 = vunpack.c.l.b16 %v1212
      %v1246 = vunpack.c.l.b16 %v1213
      %v1247 = vunpack.c.l.b16 %v1214
      %v1248 = vunpack.c.l.b16 %v1215
      %v1249 = vpack.c.b16 %v1242, %v1241
      %v1250 = vpack.c.b16 %v1244, %v1243
      %v1251 = vpack.c.b16 %v1246, %v1245
      %v1252 = vpack.c.b16 %v1248, %v1247
      %v1273 = vunpack.c.l.b16 %v1217
      %v1274 = vunpack.c.l.b16 %v1218
      %v1275 = vunpack.c.l.b16 %v1219
      %v1276 = vunpack.c.l.b16 %v1220
      %v1277 = vunpack.c.l.b16 %v1221
      %v1278 = vunpack.c.l.b16 %v1222
      %v1279 = vunpack.c.l.b16 %v1223
      %v1280 = vunpack.c.l.b16 %v1224
      %v1281 = vunpack.c.l.b16 %v1225
      %v1282 = vunpack.c.l.b16 %v1226
      %v1283 = vunpack.c.l.b16 %v1227
      %v1284 = vunpack.c.l.b16 %v1228
      %v1285 = vunpack.c.l.b16 %v1229
      %v1286 = vunpack.c.l.b16 %v1230
      %v1287 = vunpack.c.l.b16 %v1231
      %v1288 = vunpack.c.l.b16 %v1232
      %v1289 = vpack.c.b16 %v1274, %v1273
      %v1290 = vpack.c.b16 %v1276, %v1275
      %v1291 = vpack.c.b16 %v1278, %v1277
      %v1292 = vpack.c.b16 %v1280, %v1279
      %v1293 = vpack.c.b16 %v1282, %v1281
      %v1294 = vpack.c.b16 %v1284, %v1283
      %v1295 = vpack.c.b16 %v1286, %v1285
      %v1296 = vpack.c.b16 %v1288, %v1287
      %1305 = vmatpush.bf16.msra.mxu0 %v1296
      %1306 = vmatpush.bf16.msra.mxu0 %v1295
      %1307 = vmatpush.bf16.msra.mxu0 %v1294
      %1308 = vmatpush.bf16.msra.mxu0 %v1293
      %1309 = vmatpush.bf16.msra.mxu0 %v1292
      %1310 = vmatpush.bf16.msra.mxu0 %v1291
      %1311 = vmatpush.bf16.msra.mxu0 %v1290
      %1312 = vmatpush.bf16.msra.mxu0 %v1289
      %1313 = vmatmul.bf16.gmra.mxu0 %v1249
      %v1314 = vpop.f32.mrf.mxu0
      %v1315 = vadd.f32 0.0, %v1314
      %v1316 = vpop.f32.mrf.mxu0
      %v1317 = vadd.f32 0.0, %v1316
      %1318 = vmatmul.bf16.gmra.mxu0 %v1250
      %v1319 = vpop.f32.mrf.mxu0
      %v1320 = vadd.f32 0.0, %v1319
      %v1321 = vpop.f32.mrf.mxu0
      %v1322 = vadd.f32 0.0, %v1321
      %1323 = vmatmul.bf16.gmra.mxu0 %v1251
      %v1324 = vpop.f32.mrf.mxu0
      %v1325 = vadd.f32 0.0, %v1324
      %v1326 = vpop.f32.mrf.mxu0
      %v1327 = vadd.f32 0.0, %v1326
      %1328 = vmatmul.bf16.gmra.mxu0 %v1252
      %v1329 = vpop.f32.mrf.mxu0
      %v1330 = vadd.f32 0.0, %v1329
      %v1331 = vpop.f32.mrf.mxu0
      %v1332 = vadd.f32 0.0, %v1331
      %1333 = vdwg.mxu0
      %v1334 = vadd.f32 %v1199, %v1315
      %v1335 = vadd.f32 %v1200, %v1317
      %v1336 = vadd.f32 %v1201, %v1320
      %v1337 = vadd.f32 %v1202, %v1322
      %v1338 = vadd.f32 %v1203, %v1325
      %v1339 = vadd.f32 %v1204, %v1327
      %v1340 = vadd.f32 %v1205, %v1330
      %v1341 = vadd.f32 %v1206, %v1332
      %s1342 = scalar_lea.vmem %s256, 88
      %v1343 = vld [vmem:[%s1342] sm:$0xf]
      %v1344 = vld [vmem:[%s1342 + $0x4] sm:$0xf]
      %v1345 = vld [vmem:[%s1342 + $0x8] sm:$0xf]
      %v1346 = vld [vmem:[%s1342 + $0xc] sm:$0xf]
      %v1347 = vld [vmem:[%s1342 + $0x10] sm:$0xf]
      %v1348 = vld [vmem:[%s1342 + $0x14] sm:$0xf]
      %v1349 = vld [vmem:[%s1342 + $0x18] sm:$0xf]
      %v1350 = vld [vmem:[%s1342 + $0x1c] sm:$0xf]
      %s1351 = scalar_lea.vmem %s260, 512
      %v1352 = vld [vmem:[%s1351] sm:$0xf]
      %v1353 = vld [vmem:[%s1351 + $0x4] sm:$0xf]
      %v1354 = vld [vmem:[%s1351 + $0x8] sm:$0xf]
      %v1355 = vld [vmem:[%s1351 + $0xc] sm:$0xf]
      %v1356 = vld [vmem:[%s1351 + $0x10] sm:$0xf]
      %v1357 = vld [vmem:[%s1351 + $0x14] sm:$0xf]
      %v1358 = vld [vmem:[%s1351 + $0x18] sm:$0xf]
      %v1359 = vld [vmem:[%s1351 + $0x1c] sm:$0xf]
      %v1360 = vld [vmem:[%s1351 + $0x20] sm:$0xf]
      %v1361 = vld [vmem:[%s1351 + $0x24] sm:$0xf]
      %v1362 = vld [vmem:[%s1351 + $0x28] sm:$0xf]
      %v1363 = vld [vmem:[%s1351 + $0x2c] sm:$0xf]
      %v1364 = vld [vmem:[%s1351 + $0x30] sm:$0xf]
      %v1365 = vld [vmem:[%s1351 + $0x34] sm:$0xf]
      %v1366 = vld [vmem:[%s1351 + $0x38] sm:$0xf]
      %v1367 = vld [vmem:[%s1351 + $0x3c] sm:$0xf]
      %v1376 = vunpack.c.l.b16 %v1343
      %v1377 = vunpack.c.l.b16 %v1344
      %v1378 = vunpack.c.l.b16 %v1345
      %v1379 = vunpack.c.l.b16 %v1346
      %v1380 = vunpack.c.l.b16 %v1347
      %v1381 = vunpack.c.l.b16 %v1348
      %v1382 = vunpack.c.l.b16 %v1349
      %v1383 = vunpack.c.l.b16 %v1350
      %v1384 = vpack.c.b16 %v1377, %v1376
      %v1385 = vpack.c.b16 %v1379, %v1378
      %v1386 = vpack.c.b16 %v1381, %v1380
      %v1387 = vpack.c.b16 %v1383, %v1382
      %v1408 = vunpack.c.l.b16 %v1352
      %v1409 = vunpack.c.l.b16 %v1353
      %v1410 = vunpack.c.l.b16 %v1354
      %v1411 = vunpack.c.l.b16 %v1355
      %v1412 = vunpack.c.l.b16 %v1356
      %v1413 = vunpack.c.l.b16 %v1357
      %v1414 = vunpack.c.l.b16 %v1358
      %v1415 = vunpack.c.l.b16 %v1359
      %v1416 = vunpack.c.l.b16 %v1360
      %v1417 = vunpack.c.l.b16 %v1361
      %v1418 = vunpack.c.l.b16 %v1362
      %v1419 = vunpack.c.l.b16 %v1363
      %v1420 = vunpack.c.l.b16 %v1364
      %v1421 = vunpack.c.l.b16 %v1365
      %v1422 = vunpack.c.l.b16 %v1366
      %v1423 = vunpack.c.l.b16 %v1367
      %v1424 = vpack.c.b16 %v1409, %v1408
      %v1425 = vpack.c.b16 %v1411, %v1410
      %v1426 = vpack.c.b16 %v1413, %v1412
      %v1427 = vpack.c.b16 %v1415, %v1414
      %v1428 = vpack.c.b16 %v1417, %v1416
      %v1429 = vpack.c.b16 %v1419, %v1418
      %v1430 = vpack.c.b16 %v1421, %v1420
      %v1431 = vpack.c.b16 %v1423, %v1422
      %1440 = vmatpush.bf16.msra.mxu0 %v1431
      %1441 = vmatpush.bf16.msra.mxu0 %v1430
      %1442 = vmatpush.bf16.msra.mxu0 %v1429
      %1443 = vmatpush.bf16.msra.mxu0 %v1428
      %1444 = vmatpush.bf16.msra.mxu0 %v1427
      %1445 = vmatpush.bf16.msra.mxu0 %v1426
      %1446 = vmatpush.bf16.msra.mxu0 %v1425
      %1447 = vmatpush.bf16.msra.mxu0 %v1424
      %1448 = vmatmul.bf16.gmra.mxu0 %v1384
      %v1449 = vpop.f32.mrf.mxu0
      %v1450 = vadd.f32 0.0, %v1449
      %v1451 = vpop.f32.mrf.mxu0
      %v1452 = vadd.f32 0.0, %v1451
      %1453 = vmatmul.bf16.gmra.mxu0 %v1385
      %v1454 = vpop.f32.mrf.mxu0
      %v1455 = vadd.f32 0.0, %v1454
      %v1456 = vpop.f32.mrf.mxu0
      %v1457 = vadd.f32 0.0, %v1456
      %1458 = vmatmul.bf16.gmra.mxu0 %v1386
      %v1459 = vpop.f32.mrf.mxu0
      %v1460 = vadd.f32 0.0, %v1459
      %v1461 = vpop.f32.mrf.mxu0
      %v1462 = vadd.f32 0.0, %v1461
      %1463 = vmatmul.bf16.gmra.mxu0 %v1387
      %v1464 = vpop.f32.mrf.mxu0
      %v1465 = vadd.f32 0.0, %v1464
      %v1466 = vpop.f32.mrf.mxu0
      %v1467 = vadd.f32 0.0, %v1466
      %1468 = vdwg.mxu0
      %v1469 = vadd.f32 %v1334, %v1450
      %v1470 = vadd.f32 %v1335, %v1452
      %v1471 = vadd.f32 %v1336, %v1455
      %v1472 = vadd.f32 %v1337, %v1457
      %v1473 = vadd.f32 %v1338, %v1460
      %v1474 = vadd.f32 %v1339, %v1462
      %v1475 = vadd.f32 %v1340, %v1465
      %v1476 = vadd.f32 %v1341, %v1467
      %v1477 = vld [vmem:[%s263] sm:$0x1]
      %v1479 = vperm.slane %v1477, 0
      %v1481 = vadd.f32 %v1469, %v1479
      %v1482 = vadd.f32 %v1470, %v1479
      %v1483 = vadd.f32 %v1471, %v1479
      %v1484 = vadd.f32 %v1472, %v1479
      %v1485 = vadd.f32 %v1473, %v1479
      %v1486 = vadd.f32 %v1474, %v1479
      %v1487 = vadd.f32 %v1475, %v1479
      %v1488 = vadd.f32 %v1476, %v1479
      %v1489 = vmax.f32 %v1481, 0.0
      %v1490 = vmax.f32 %v1482, 0.0
      %v1491 = vmax.f32 %v1483, 0.0
      %v1492 = vmax.f32 %v1484, 0.0
      %v1493 = vmax.f32 %v1485, 0.0
      %v1494 = vmax.f32 %v1486, 0.0
      %v1495 = vmax.f32 %v1487, 0.0
      %v1496 = vmax.f32 %v1488, 0.0
      %v1497 = vld [vmem:[%s271] sm:$0xf]
      %v1498 = vld [vmem:[%s271 + $0x4] sm:$0xf]
      %v1499 = vld [vmem:[%s271 + $0x8] sm:$0xf]
      %v1500 = vld [vmem:[%s271 + $0xc] sm:$0xf]
      %v1501 = vld [vmem:[%s271 + $0x10] sm:$0xf]
      %v1502 = vld [vmem:[%s271 + $0x14] sm:$0xf]
      %v1503 = vld [vmem:[%s271 + $0x18] sm:$0xf]
      %v1504 = vld [vmem:[%s271 + $0x1c] sm:$0xf]
      %v1505 = vunpack.c.l.bf16 %v1497
      %v1506 = vunpack.c.l.bf16 %v1498
      %v1507 = vunpack.c.l.bf16 %v1499
      %v1508 = vunpack.c.l.bf16 %v1500
      %v1509 = vunpack.c.l.bf16 %v1501
      %v1510 = vunpack.c.l.bf16 %v1502
      %v1511 = vunpack.c.l.bf16 %v1503
      %v1512 = vunpack.c.l.bf16 %v1504
      %v1513 = vadd.f32 %v1489, %v1505
      %v1514 = vadd.f32 %v1490, %v1506
      %v1515 = vadd.f32 %v1491, %v1507
      %v1516 = vadd.f32 %v1492, %v1508
      %v1517 = vadd.f32 %v1493, %v1509
      %v1518 = vadd.f32 %v1494, %v1510
      %v1519 = vadd.f32 %v1495, %v1511
      %v1520 = vadd.f32 %v1496, %v1512
      %v1521 = vmax.f32 %v1513, 0.0
      %v1522 = vmax.f32 %v1514, 0.0
      %v1523 = vmax.f32 %v1515, 0.0
      %v1524 = vmax.f32 %v1516, 0.0
      %v1525 = vmax.f32 %v1517, 0.0
      %v1526 = vmax.f32 %v1518, 0.0
      %v1527 = vmax.f32 %v1519, 0.0
      %v1528 = vmax.f32 %v1520, 0.0
      %v1529 = vpack.c.bf16 %v1521, %v1521
      %v1530 = vpack.c.bf16 %v1522, %v1522
      %v1531 = vpack.c.bf16 %v1523, %v1523
      %v1532 = vpack.c.bf16 %v1524, %v1524
      %v1533 = vpack.c.bf16 %v1525, %v1525
      %v1534 = vpack.c.bf16 %v1526, %v1526
      %v1535 = vpack.c.bf16 %v1527, %v1527
      %v1536 = vpack.c.bf16 %v1528, %v1528
      %1537 = vst [vmem:[%s279] sm:$0xf] %v1529
      %1538 = vst [vmem:[%s279 + $0x4] sm:$0xf] %v1530
      %1539 = vst [vmem:[%s279 + $0x8] sm:$0xf] %v1531
      %1540 = vst [vmem:[%s279 + $0xc] sm:$0xf] %v1532
      %1541 = vst [vmem:[%s279 + $0x10] sm:$0xf] %v1533
      %1542 = vst [vmem:[%s279 + $0x14] sm:$0xf] %v1534
      %1543 = vst [vmem:[%s279 + $0x18] sm:$0xf] %v1535
      %1544 = vst [vmem:[%s279 + $0x1c] sm:$0xf] %v1536
      %p1545 = scmp.lt.s32.totalorder %s20, 1
      %s1546 = scalar_select %p1545, %s20, 1
      %p1547 = scmp.lt.s32.totalorder %s19, 0
      %s1548 = scalar_select %p1547, %s19, 0
      %s1549 = smul.addr %s1546, 8
      %s1550 = sadd.s32 %s1548, %s1549
      %s1551 = smul.addr %s1550, 4
      %s1552 = scalar_lea.vmem %s4, %s1551
      // Predicated region
      $region37: #{resnet_layer_forward.7} parent=35 // pred_check
        %p1553 = pneg %p153
      $region38: #{resnet_layer_forward.7} parent=35 // pred_check_branch
        %1555 = sbr.rel (%p1553) target = $region40
      $region39: #{resnet_layer_forward.7} parent=35 // pred_region
        _
      $region40: #{resnet_layer_forward.7} parent=35 // pred_fallthru
        _
    $region36: #{resnet_layer_forward.7} parent=5 // pred_fallthru
      _
    %p1556 = scmp.le.s32.totalorder 2, %s10
    // Predicated region
    $region41: #{resnet_layer_forward.7} parent=5 // pred_check
      %p1557 = pneg %p1556
    $region42: #{resnet_layer_forward.7} parent=5 // pred_check_branch
      %1559 = sbr.rel (%p1557) target = $region44
    $region43: #{resnet_layer_forward.7} parent=5 // pred_region
      %s1560 = ssub.s32 %s10, 2
      // Predicated region
      $region45: #{resnet_layer_forward.7} parent=43 // pred_check
        %p1561 = pneg %p159
      $region46: #{resnet_layer_forward.7} parent=43 // pred_check_branch
        %1563 = sbr.rel (%p1561) target = $region48
      $region47: #{resnet_layer_forward.7} parent=43 // pred_region
        %p1564 = scmp.lt.s32.totalorder %s22, 1
        %s1565 = scalar_select %p1564, %s22, 1
        %p1566 = scmp.lt.s32.totalorder %s21, 0
        %s1567 = scalar_select %p1566, %s21, 0
        %s1568 = smul.addr %s1565, 8
        %s1569 = sadd.s32 %s1567, %s1568
        %s1570 = smul.addr %s1569, 4
        %s1571 = scalar_lea.vmem %s4, %s1570
      $region48: #{resnet_layer_forward.7} parent=43 // pred_fallthru
        _
    $region44: #{resnet_layer_forward.7} parent=5 // pred_fallthru
      _
  $region6: #{resnet_layer_forward.7} parent=0 // loop_footer
    %s14 = sadd.s32 1, %s10
  $region7: #{resnet_layer_forward.7} parent=0 // loop_footer_branch
    %9 = sbr.rel target = $region3
  $region8: #{resnet_layer_forward.7} parent=0 // loop_exit
    _

// kernel: resnet_layer_forward.6
$region0: #{resnet_layer_forward.6}
  #allocation0 [shape = 'u32[]', space=smem, size = 0x4, offset = 0x4, fixed_abs, tag = 'smem constant byte address 0x4 - core index']
  #allocation1 [shape = 'u32[72,128]{1,0:T(1,128)}', space=vmem, size = 0x9000, scoped, tag = 'internal scratch']
  %s0 = inlined_call_operand.vmem [shape: bf16[2,3,10,8,128], index: 0, kind: input, shape index: {}]
  %s1 = inlined_call_operand.vmem [shape: bf16[9,128,128], index: 1, kind: input, shape index: {}]
  %s2 = inlined_call_operand.vmem [shape: f32[1,128], index: 2, kind: input, shape index: {}]
  %s3 = inlined_call_operand.vmem [shape: bf16[2,64,128], index: 3, kind: output, shape index: {}]
  %s4 = sld [smem:[#allocation0]]
  $region45: #{resnet_layer_forward.6} parent=0
    _
  %s6 = ssub.s32 1, %s4
  %s7 = scalar_select 0, %s6, %s4
  loop: start=0, step=1, limit=4
  $region2: #{resnet_layer_forward.6} parent=0 // loop_pre_header
    _
  $region3: #{resnet_layer_forward.6} parent=0 // loop_header
    %s9 = sphi 0, %s13
    %p10 = scmp.ge.s32.totalorder %s9, 4
    %s16 = sphi 0, %s28
    %s17 = sphi 0, %s24
    %s18 = sphi 0, %s16
    %s19 = sphi 0, %s17
    %s20 = sphi 0, %s18
    %s21 = sphi 0, %s19
    %s31 = sphi 0, %s33
    %s34 = sphi 0, %s31
    %s35 = sphi 0, %s34
    %s51 = sphi 0, %s35
    %s57 = sphi 0, %s59
    %s60 = sphi 0, %s57
    %s61 = sphi 0, %s60
    %s77 = sphi 0, %s61
    %s83 = sphi 0, %s85
    %s86 = sphi 0, %s83
    %s87 = sphi 0, %s86
    %s103 = sphi 0, %s87
    %s111 = sphi 0, %s113
    %s114 = sphi 0, %s111
    %s115 = sphi 0, %s114
    %s131 = sphi 0, %s115
  $region4: #{resnet_layer_forward.6} parent=0 // loop_header_branch
    %12 = sbr.rel (%p10) target = $region8
  $region5: #{resnet_layer_forward.6} parent=0 // loop_body
    %s14 = ssub.s32 %s9, 1
    %s15 = ssub.s32 %s9, 2
    %s22 = sadd.s32 1, %s17
    %p23 = scmp.ge.s32.totalorder %s22, 2
    %s24 = scalar_select %p23, 0, %s22
    %s25 = sadd.s32 1, %s16
    %s26 = scalar_select %p23, %s25, %s16
    %p27 = scmp.ge.s32.totalorder %s26, 1
    %s28 = scalar_select %p27, 0, %s26
    %s29 = ssub.s32 %s17, %s24
    %p30 = scmp.eq.s32.totalorder %s29, 0
    %s32 = sadd.s32 %s31, 1
    %s33 = scalar_select %p30, %s31, %s32
    %p36 = pneg %p30
    %p37 = scmp.eq.s32.totalorder %s9, 1
    %p38 = por %p36, %p37
    %p39 = scmp.ne.s32.totalorder %s31, %s34
    %p40 = scmp.eq.s32.totalorder %s9, 0
    %p41 = por %p39, %p40
    %p42 = scmp.ne.s32.totalorder %s31, %s34
    %p43 = scmp.eq.s32.totalorder %s14, 1
    %p44 = por %p42, %p43
    %p45 = scmp.ne.s32.totalorder %s34, %s35
    %p46 = scmp.eq.s32.totalorder %s14, 0
    %p47 = por %p45, %p46
    %p48 = scmp.ne.s32.totalorder %s34, %s35
    %p49 = scmp.eq.s32.totalorder %s15, 1
    %p50 = por %p48, %p49
    %p52 = scmp.ne.s32.totalorder %s35, %s51
    %p53 = scmp.eq.s32.totalorder %s15, 0
    %p54 = por %p52, %p53
    %s55 = ssub.s32 %s16, %s28
    %p56 = scmp.eq.s32.totalorder %s55, 0
    %s58 = sadd.s32 %s57, 1
    %s59 = scalar_select %p56, %s57, %s58
    %p62 = pneg %p56
    %p63 = scmp.eq.s32.totalorder %s9, 1
    %p64 = por %p62, %p63
    %p65 = scmp.ne.s32.totalorder %s57, %s60
    %p66 = scmp.eq.s32.totalorder %s9, 0
    %p67 = por %p65, %p66
    %p68 = scmp.ne.s32.totalorder %s57, %s60
    %p69 = scmp.eq.s32.totalorder %s14, 1
    %p70 = por %p68, %p69
    %p71 = scmp.ne.s32.totalorder %s60, %s61
    %p72 = scmp.eq.s32.totalorder %s14, 0
    %p73 = por %p71, %p72
    %p74 = scmp.ne.s32.totalorder %s60, %s61
    %p75 = scmp.eq.s32.totalorder %s15, 1
    %p76 = por %p74, %p75
    %p78 = scmp.ne.s32.totalorder %s61, %s77
    %p79 = scmp.eq.s32.totalorder %s15, 0
    %p80 = por %p78, %p79
    %s81 = ssub.s32 %s16, %s28
    %p82 = scmp.eq.s32.totalorder %s81, 0
    %s84 = sadd.s32 %s83, 1
    %s85 = scalar_select %p82, %s83, %s84
    %p88 = pneg %p82
    %p89 = scmp.eq.s32.totalorder %s9, 1
    %p90 = por %p88, %p89
    %p91 = scmp.ne.s32.totalorder %s83, %s86
    %p92 = scmp.eq.s32.totalorder %s9, 0
    %p93 = por %p91, %p92
    %p94 = scmp.ne.s32.totalorder %s83, %s86
    %p95 = scmp.eq.s32.totalorder %s14, 1
    %p96 = por %p94, %p95
    %p97 = scmp.ne.s32.totalorder %s86, %s87
    %p98 = scmp.eq.s32.totalorder %s14, 0
    %p99 = por %p97, %p98
    %p100 = scmp.ne.s32.totalorder %s86, %s87
    %p101 = scmp.eq.s32.totalorder %s15, 1
    %p102 = por %p100, %p101
    %p104 = scmp.ne.s32.totalorder %s87, %s103
    %p105 = scmp.eq.s32.totalorder %s15, 0
    %p106 = por %p104, %p105
    %s107 = ssub.s32 %s17, %s24
    %s108 = ssub.s32 %s16, %s28
    %s109 = sor.u32 %s107, %s108
    %p110 = scmp.eq.s32.totalorder %s109, 0
    %s112 = sadd.s32 %s111, 1
    %s113 = scalar_select %p110, %s111, %s112
    %p116 = pneg %p110
    %p117 = scmp.eq.s32.totalorder %s9, 1
    %p118 = por %p116, %p117
    %p119 = scmp.ne.s32.totalorder %s111, %s114
    %p120 = scmp.eq.s32.totalorder %s9, 0
    %p121 = por %p119, %p120
    %p122 = scmp.ne.s32.totalorder %s111, %s114
    %p123 = scmp.eq.s32.totalorder %s14, 1
    %p124 = por %p122, %p123
    %p125 = scmp.ne.s32.totalorder %s114, %s115
    %p126 = scmp.eq.s32.totalorder %s14, 0
    %p127 = por %p125, %p126
    %p128 = scmp.ne.s32.totalorder %s114, %s115
    %p129 = scmp.eq.s32.totalorder %s15, 1
    %p130 = por %p128, %p129
    %p132 = scmp.ne.s32.totalorder %s115, %s131
    %p133 = scmp.eq.s32.totalorder %s15, 0
    %p134 = por %p132, %p133
    %p135 = scmp.le.s32.totalorder 1, %s9
    %p136 = scmp.lt.s32.totalorder %s9, 3
    %p137 = pnand %p135, %p136
    %p138 = pneg %p137
    // Predicated region
    $region9: #{resnet_layer_forward.6} parent=5 // pred_check
      _
    $region10: #{resnet_layer_forward.6} parent=5 // pred_check_branch
      %140 = sbr.rel (%p137) target = $region12
    $region11: #{resnet_layer_forward.6} parent=5 // pred_region
      %s141 = ssub.s32 %s9, 1
      // Predicated region
      $region13: #{resnet_layer_forward.6} parent=11 // pred_check
        %p142 = pneg %p73
      $region14: #{resnet_layer_forward.6} parent=11 // pred_check_branch
        %144 = sbr.rel (%p142) target = $region16
      $region15: #{resnet_layer_forward.6} parent=11 // pred_region
        %p145 = scmp.lt.s32.totalorder %s18, 0
        %s146 = scalar_select %p145, %s18, 0
        %s147 = smul.addr %s146, 4
        %s148 = scalar_lea.vmem %s1, %s147
      $region16: #{resnet_layer_forward.6} parent=11 // pred_fallthru
        _
      // Predicated region
      $region17: #{resnet_layer_forward.6} parent=11 // pred_check
        %p149 = pneg %p99
      $region18: #{resnet_layer_forward.6} parent=11 // pred_check_branch
        %151 = sbr.rel (%p149) target = $region20
      $region19: #{resnet_layer_forward.6} parent=11 // pred_region
        %p152 = scmp.lt.s32.totalorder %s18, 0
        %s153 = scalar_select %p152, %s18, 0
        %s154 = scalar_lea.vmem %s2, %s153
      $region20: #{resnet_layer_forward.6} parent=11 // pred_fallthru
        _
    $region12: #{resnet_layer_forward.6} parent=5 // pred_fallthru
      _
    %p155 = scmp.lt.s32.totalorder %s9, 2
    // Predicated region
    $region21: #{resnet_layer_forward.6} parent=5 // pred_check
      %p156 = pneg %p155
    $region22: #{resnet_layer_forward.6} parent=5 // pred_check_branch
      %158 = sbr.rel (%p156) target = $region24
    $region23: #{resnet_layer_forward.6} parent=5 // pred_region
      // Predicated region
      $region25: #{resnet_layer_forward.6} parent=23 // pred_check
        %p159 = pneg %p41
      $region26: #{resnet_layer_forward.6} parent=23 // pred_check_branch
        %161 = sbr.rel (%p159) target = $region28
      $region27: #{resnet_layer_forward.6} parent=23 // pred_region
        %p162 = scmp.lt.s32.totalorder %s17, 1
        %s163 = scalar_select %p162, %s17, 1
        %s164 = smul.addr %s163, 30
        %s165 = smul.addr %s164, 4
        %s166 = scalar_lea.vmem %s0, %s165
      $region28: #{resnet_layer_forward.6} parent=23 // pred_fallthru
        _
    $region24: #{resnet_layer_forward.6} parent=5 // pred_fallthru
      _
    %p167 = scmp.le.s32.totalorder 1, %s9
    %p168 = scmp.lt.s32.totalorder %s9, 3
    %p169 = pnand %p167, %p168
    %p170 = pneg %p169
    // Predicated region
    $region29: #{resnet_layer_forward.6} parent=5 // pred_check
      _
    $region30: #{resnet_layer_forward.6} parent=5 // pred_check_branch
      %172 = sbr.rel (%p169) target = $region32
    $region31: #{resnet_layer_forward.6} parent=5 // pred_region
      %s173 = ssub.s32 %s9, 1
      %p174 = scmp.lt.s32.totalorder %s19, 1
      %s175 = scalar_select %p174, %s19, 1
      %s176 = smul.addr %s175, 30
      %s177 = smul.addr %s176, 4
      %s178 = scalar_lea.vmem %s0, %s177
      %p179 = pneg %p47
      %p180 = pneg %p44
      %p181 = scmp.lt.s32.totalorder %s18, 0
      %s182 = scalar_select %p181, %s18, 0
      %s183 = smul.addr %s182, 4
      %s184 = scalar_lea.vmem %s1, %s183
      %p185 = pneg %p73
      %p186 = pneg %p70
      %p187 = scmp.lt.s32.totalorder %s18, 0
      %s188 = scalar_select %p187, %s18, 0
      %s189 = scalar_lea.vmem %s2, %s188
      %p190 = pneg %p99
      %p191 = pneg %p96
      %p192 = pneg %p127
      %p193 = pneg %p124
      %p194 = scmp.lt.s32.totalorder %s19, 1
      %s195 = scalar_select %p194, %s19, 1
      %p196 = scmp.lt.s32.totalorder %s18, 0
      %s197 = scalar_select %p196, %s18, 0
      %s198 = smul.addr %s195, 8
      %s199 = sadd.s32 %s197, %s198
      %s200 = smul.addr %s199, 4
      %s201 = scalar_lea.vmem %s3, %s200
      %p202 = scmp.lt.s32.totalorder %s19, 1
      %s203 = scalar_select %p202, %s19, 1
      %s204 = smul.addr %s203, 30
      %s205 = smul.addr %s204, 4
      %s206 = scalar_lea.vmem %s0, %s205
      %p207 = scmp.lt.s32.totalorder %s18, 0
      %s208 = scalar_select %p207, %s18, 0
      %s209 = smul.addr %s208, 4
      %s210 = scalar_lea.vmem %s1, %s209
      %p211 = scmp.lt.s32.totalorder %s18, 0
      %s212 = scalar_select %p211, %s18, 0
      %s213 = scalar_lea.vmem %s2, %s212
      %p214 = scmp.lt.s32.totalorder %s19, 1
      %s215 = scalar_select %p214, %s19, 1
      %p216 = scmp.lt.s32.totalorder %s18, 0
      %s217 = scalar_select %p216, %s18, 0
      %s218 = smul.addr %s215, 8
      %s219 = sadd.s32 %s217, %s218
      %s220 = smul.addr %s219, 4
      %s221 = scalar_lea.vmem %s3, %s220
      %v222 = vld [vmem:[%s206] sm:$0xf]
      %v223 = vld [vmem:[%s206 + $0x4] sm:$0xf]
      %v224 = vld [vmem:[%s206 + $0x8] sm:$0xf]
      %v225 = vld [vmem:[%s206 + $0xc] sm:$0xf]
      %v226 = vld [vmem:[%s206 + $0x10] sm:$0xf]
      %v227 = vld [vmem:[%s206 + $0x14] sm:$0xf]
      %v228 = vld [vmem:[%s206 + $0x18] sm:$0xf]
      %v229 = vld [vmem:[%s206 + $0x1c] sm:$0xf]
      %v230 = vld [vmem:[%s210] sm:$0xf]
      %v231 = vld [vmem:[%s210 + $0x4] sm:$0xf]
      %v232 = vld [vmem:[%s210 + $0x8] sm:$0xf]
      %v233 = vld [vmem:[%s210 + $0xc] sm:$0xf]
      %v234 = vld [vmem:[%s210 + $0x10] sm:$0xf]
      %v235 = vld [vmem:[%s210 + $0x14] sm:$0xf]
      %v236 = vld [vmem:[%s210 + $0x18] sm:$0xf]
      %v237 = vld [vmem:[%s210 + $0x1c] sm:$0xf]
      %v238 = vld [vmem:[%s210 + $0x20] sm:$0xf]
      %v239 = vld [vmem:[%s210 + $0x24] sm:$0xf]
      %v240 = vld [vmem:[%s210 + $0x28] sm:$0xf]
      %v241 = vld [vmem:[%s210 + $0x2c] sm:$0xf]
      %v242 = vld [vmem:[%s210 + $0x30] sm:$0xf]
      %v243 = vld [vmem:[%s210 + $0x34] sm:$0xf]
      %v244 = vld [vmem:[%s210 + $0x38] sm:$0xf]
      %v245 = vld [vmem:[%s210 + $0x3c] sm:$0xf]
      %s246 = scalar_lea.vmem %s206, 40
      %v247 = vld [vmem:[%s246] sm:$0xf]
      %v248 = vld [vmem:[%s246 + $0x4] sm:$0xf]
      %v249 = vld [vmem:[%s246 + $0x8] sm:$0xf]
      %v250 = vld [vmem:[%s246 + $0xc] sm:$0xf]
      %v251 = vld [vmem:[%s246 + $0x10] sm:$0xf]
      %v252 = vld [vmem:[%s246 + $0x14] sm:$0xf]
      %v253 = vld [vmem:[%s246 + $0x18] sm:$0xf]
      %v254 = vld [vmem:[%s246 + $0x1c] sm:$0xf]
      %s255 = scalar_lea.vmem %s210, 64
      %v256 = vld [vmem:[%s255] sm:$0xf]
      %v257 = vld [vmem:[%s255 + $0x4] sm:$0xf]
      %v258 = vld [vmem:[%s255 + $0x8] sm:$0xf]
      %v259 = vld [vmem:[%s255 + $0xc] sm:$0xf]
      %v260 = vld [vmem:[%s255 + $0x10] sm:$0xf]
      %v261 = vld [vmem:[%s255 + $0x14] sm:$0xf]
      %v262 = vld [vmem:[%s255 + $0x18] sm:$0xf]
      %v263 = vld [vmem:[%s255 + $0x1c] sm:$0xf]
      %v264 = vld [vmem:[%s255 + $0x20] sm:$0xf]
      %v265 = vld [vmem:[%s255 + $0x24] sm:$0xf]
      %v266 = vld [vmem:[%s255 + $0x28] sm:$0xf]
      %v267 = vld [vmem:[%s255 + $0x2c] sm:$0xf]
      %v268 = vld [vmem:[%s255 + $0x30] sm:$0xf]
      %v269 = vld [vmem:[%s255 + $0x34] sm:$0xf]
      %v270 = vld [vmem:[%s255 + $0x38] sm:$0xf]
      %v271 = vld [vmem:[%s255 + $0x3c] sm:$0xf]
      %v280 = vunpack.c.l.b16 %v247
      %v281 = vunpack.c.l.b16 %v248
      %v282 = vunpack.c.l.b16 %v249
      %v283 = vunpack.c.l.b16 %v250
      %v284 = vunpack.c.l.b16 %v251
      %v285 = vunpack.c.l.b16 %v252
      %v286 = vunpack.c.l.b16 %v253
      %v287 = vunpack.c.l.b16 %v254
      %v288 = vpack.c.b16 %v281, %v280
      %v289 = vpack.c.b16 %v283, %v282
      %v290 = vpack.c.b16 %v285, %v284
      %v291 = vpack.c.b16 %v287, %v286
      %v312 = vunpack.c.l.b16 %v256
      %v313 = vunpack.c.l.b16 %v257
      %v314 = vunpack.c.l.b16 %v258
      %v315 = vunpack.c.l.b16 %v259
      %v316 = vunpack.c.l.b16 %v260
      %v317 = vunpack.c.l.b16 %v261
      %v318 = vunpack.c.l.b16 %v262
      %v319 = vunpack.c.l.b16 %v263
      %v320 = vunpack.c.l.b16 %v264
      %v321 = vunpack.c.l.b16 %v265
      %v322 = vunpack.c.l.b16 %v266
      %v323 = vunpack.c.l.b16 %v267
      %v324 = vunpack.c.l.b16 %v268
      %v325 = vunpack.c.l.b16 %v269
      %v326 = vunpack.c.l.b16 %v270
      %v327 = vunpack.c.l.b16 %v271
      %v328 = vpack.c.b16 %v313, %v312
      %v329 = vpack.c.b16 %v315, %v314
      %v330 = vpack.c.b16 %v317, %v316
      %v331 = vpack.c.b16 %v319, %v318
      %v332 = vpack.c.b16 %v321, %v320
      %v333 = vpack.c.b16 %v323, %v322
      %v334 = vpack.c.b16 %v325, %v324
      %v335 = vpack.c.b16 %v327, %v326
      %344 = vmatpush.bf16.msra.mxu0 %v335
      %345 = vmatpush.bf16.msra.mxu0 %v334
      %346 = vmatpush.bf16.msra.mxu0 %v333
      %347 = vmatpush.bf16.msra.mxu0 %v332
      %348 = vmatpush.bf16.msra.mxu0 %v331
      %349 = vmatpush.bf16.msra.mxu0 %v330
      %350 = vmatpush.bf16.msra.mxu0 %v329
      %351 = vmatpush.bf16.msra.mxu0 %v328
      %352 = vmatmul.bf16.gmra.mxu0 %v288
      %v353 = vpop.f32.mrf.mxu0
      %v354 = vadd.f32 0.0, %v353
      %v355 = vpop.f32.mrf.mxu0
      %v356 = vadd.f32 0.0, %v355
      %357 = vmatmul.bf16.gmra.mxu0 %v289
      %v358 = vpop.f32.mrf.mxu0
      %v359 = vadd.f32 0.0, %v358
      %v360 = vpop.f32.mrf.mxu0
      %v361 = vadd.f32 0.0, %v360
      %362 = vmatmul.bf16.gmra.mxu0 %v290
      %v363 = vpop.f32.mrf.mxu0
      %v364 = vadd.f32 0.0, %v363
      %v365 = vpop.f32.mrf.mxu0
      %v366 = vadd.f32 0.0, %v365
      %367 = vmatmul.bf16.gmra.mxu0 %v291
      %v368 = vpop.f32.mrf.mxu0
      %v369 = vadd.f32 0.0, %v368
      %v370 = vpop.f32.mrf.mxu0
      %v371 = vadd.f32 0.0, %v370
      %372 = vdwg.mxu0
      %v381 = vunpack.c.l.b16 %v222
      %v382 = vunpack.c.l.b16 %v223
      %v383 = vunpack.c.l.b16 %v224
      %v384 = vunpack.c.l.b16 %v225
      %v385 = vunpack.c.l.b16 %v226
      %v386 = vunpack.c.l.b16 %v227
      %v387 = vunpack.c.l.b16 %v228
      %v388 = vunpack.c.l.b16 %v229
      %v389 = vpack.c.b16 %v382, %v381
      %v390 = vpack.c.b16 %v384, %v383
      %v391 = vpack.c.b16 %v386, %v385
      %v392 = vpack.c.b16 %v388, %v387
      %v413 = vunpack.c.l.b16 %v230
      %v414 = vunpack.c.l.b16 %v231
      %v415 = vunpack.c.l.b16 %v232
      %v416 = vunpack.c.l.b16 %v233
      %v417 = vunpack.c.l.b16 %v234
      %v418 = vunpack.c.l.b16 %v235
      %v419 = vunpack.c.l.b16 %v236
      %v420 = vunpack.c.l.b16 %v237
      %v421 = vunpack.c.l.b16 %v238
      %v422 = vunpack.c.l.b16 %v239
      %v423 = vunpack.c.l.b16 %v240
      %v424 = vunpack.c.l.b16 %v241
      %v425 = vunpack.c.l.b16 %v242
      %v426 = vunpack.c.l.b16 %v243
      %v427 = vunpack.c.l.b16 %v244
      %v428 = vunpack.c.l.b16 %v245
      %v429 = vpack.c.b16 %v414, %v413
      %v430 = vpack.c.b16 %v416, %v415
      %v431 = vpack.c.b16 %v418, %v417
      %v432 = vpack.c.b16 %v420, %v419
      %v433 = vpack.c.b16 %v422, %v421
      %v434 = vpack.c.b16 %v424, %v423
      %v435 = vpack.c.b16 %v426, %v425
      %v436 = vpack.c.b16 %v428, %v427
      %445 = vmatpush.bf16.msra.mxu0 %v436
      %446 = vmatpush.bf16.msra.mxu0 %v435
      %447 = vmatpush.bf16.msra.mxu0 %v434
      %448 = vmatpush.bf16.msra.mxu0 %v433
      %449 = vmatpush.bf16.msra.mxu0 %v432
      %450 = vmatpush.bf16.msra.mxu0 %v431
      %451 = vmatpush.bf16.msra.mxu0 %v430
      %452 = vmatpush.bf16.msra.mxu0 %v429
      %453 = vmatmul.bf16.gmra.mxu0 %v389
      %v454 = vpop.f32.mrf.mxu0
      %v455 = vadd.f32 %v354, %v454
      %v456 = vpop.f32.mrf.mxu0
      %v457 = vadd.f32 %v356, %v456
      %458 = vmatmul.bf16.gmra.mxu0 %v390
      %v459 = vpop.f32.mrf.mxu0
      %v460 = vadd.f32 %v359, %v459
      %v461 = vpop.f32.mrf.mxu0
      %v462 = vadd.f32 %v361, %v461
      %463 = vmatmul.bf16.gmra.mxu0 %v391
      %v464 = vpop.f32.mrf.mxu0
      %v465 = vadd.f32 %v364, %v464
      %v466 = vpop.f32.mrf.mxu0
      %v467 = vadd.f32 %v366, %v466
      %468 = vmatmul.bf16.gmra.mxu0 %v392
      %v469 = vpop.f32.mrf.mxu0
      %v470 = vadd.f32 %v369, %v469
      %v471 = vpop.f32.mrf.mxu0
      %v472 = vadd.f32 %v371, %v471
      %473 = vdwg.mxu0
      %s474 = scalar_lea.vmem %s206, 80
      %v475 = vld [vmem:[%s474] sm:$0xf]
      %v476 = vld [vmem:[%s474 + $0x4] sm:$0xf]
      %v477 = vld [vmem:[%s474 + $0x8] sm:$0xf]
      %v478 = vld [vmem:[%s474 + $0xc] sm:$0xf]
      %v479 = vld [vmem:[%s474 + $0x10] sm:$0xf]
      %v480 = vld [vmem:[%s474 + $0x14] sm:$0xf]
      %v481 = vld [vmem:[%s474 + $0x18] sm:$0xf]
      %v482 = vld [vmem:[%s474 + $0x1c] sm:$0xf]
      %s483 = scalar_lea.vmem %s210, 128
      %v484 = vld [vmem:[%s483] sm:$0xf]
      %v485 = vld [vmem:[%s483 + $0x4] sm:$0xf]
      %v486 = vld [vmem:[%s483 + $0x8] sm:$0xf]
      %v487 = vld [vmem:[%s483 + $0xc] sm:$0xf]
      %v488 = vld [vmem:[%s483 + $0x10] sm:$0xf]
      %v489 = vld [vmem:[%s483 + $0x14] sm:$0xf]
      %v490 = vld [vmem:[%s483 + $0x18] sm:$0xf]
      %v491 = vld [vmem:[%s483 + $0x1c] sm:$0xf]
      %v492 = vld [vmem:[%s483 + $0x20] sm:$0xf]
      %v493 = vld [vmem:[%s483 + $0x24] sm:$0xf]
      %v494 = vld [vmem:[%s483 + $0x28] sm:$0xf]
      %v495 = vld [vmem:[%s483 + $0x2c] sm:$0xf]
      %v496 = vld [vmem:[%s483 + $0x30] sm:$0xf]
      %v497 = vld [vmem:[%s483 + $0x34] sm:$0xf]
      %v498 = vld [vmem:[%s483 + $0x38] sm:$0xf]
      %v499 = vld [vmem:[%s483 + $0x3c] sm:$0xf]
      %v508 = vunpack.c.l.b16 %v475
      %v509 = vunpack.c.l.b16 %v476
      %v510 = vunpack.c.l.b16 %v477
      %v511 = vunpack.c.l.b16 %v478
      %v512 = vunpack.c.l.b16 %v479
      %v513 = vunpack.c.l.b16 %v480
      %v514 = vunpack.c.l.b16 %v481
      %v515 = vunpack.c.l.b16 %v482
      %v516 = vpack.c.b16 %v509, %v508
      %v517 = vpack.c.b16 %v511, %v510
      %v518 = vpack.c.b16 %v513, %v512
      %v519 = vpack.c.b16 %v515, %v514
      %v540 = vunpack.c.l.b16 %v484
      %v541 = vunpack.c.l.b16 %v485
      %v542 = vunpack.c.l.b16 %v486
      %v543 = vunpack.c.l.b16 %v487
      %v544 = vunpack.c.l.b16 %v488
      %v545 = vunpack.c.l.b16 %v489
      %v546 = vunpack.c.l.b16 %v490
      %v547 = vunpack.c.l.b16 %v491
      %v548 = vunpack.c.l.b16 %v492
      %v549 = vunpack.c.l.b16 %v493
      %v550 = vunpack.c.l.b16 %v494
      %v551 = vunpack.c.l.b16 %v495
      %v552 = vunpack.c.l.b16 %v496
      %v553 = vunpack.c.l.b16 %v497
      %v554 = vunpack.c.l.b16 %v498
      %v555 = vunpack.c.l.b16 %v499
      %v556 = vpack.c.b16 %v541, %v540
      %v557 = vpack.c.b16 %v543, %v542
      %v558 = vpack.c.b16 %v545, %v544
      %v559 = vpack.c.b16 %v547, %v546
      %v560 = vpack.c.b16 %v549, %v548
      %v561 = vpack.c.b16 %v551, %v550
      %v562 = vpack.c.b16 %v553, %v552
      %v563 = vpack.c.b16 %v555, %v554
      %572 = vmatpush.bf16.msra.mxu0 %v563
      %573 = vmatpush.bf16.msra.mxu0 %v562
      %574 = vmatpush.bf16.msra.mxu0 %v561
      %575 = vmatpush.bf16.msra.mxu0 %v560
      %576 = vmatpush.bf16.msra.mxu0 %v559
      %577 = vmatpush.bf16.msra.mxu0 %v558
      %578 = vmatpush.bf16.msra.mxu0 %v557
      %579 = vmatpush.bf16.msra.mxu0 %v556
      %580 = vmatmul.bf16.gmra.mxu0 %v516
      %v581 = vpop.f32.mrf.mxu0
      %v582 = vadd.f32 0.0, %v581
      %v583 = vpop.f32.mrf.mxu0
      %v584 = vadd.f32 0.0, %v583
      %585 = vmatmul.bf16.gmra.mxu0 %v517
      %v586 = vpop.f32.mrf.mxu0
      %v587 = vadd.f32 0.0, %v586
      %v588 = vpop.f32.mrf.mxu0
      %v589 = vadd.f32 0.0, %v588
      %590 = vmatmul.bf16.gmra.mxu0 %v518
      %v591 = vpop.f32.mrf.mxu0
      %v592 = vadd.f32 0.0, %v591
      %v593 = vpop.f32.mrf.mxu0
      %v594 = vadd.f32 0.0, %v593
      %595 = vmatmul.bf16.gmra.mxu0 %v519
      %v596 = vpop.f32.mrf.mxu0
      %v597 = vadd.f32 0.0, %v596
      %v598 = vpop.f32.mrf.mxu0
      %v599 = vadd.f32 0.0, %v598
      %600 = vdwg.mxu0
      %v601 = vadd.f32 %v455, %v582
      %v602 = vadd.f32 %v457, %v584
      %v603 = vadd.f32 %v460, %v587
      %v604 = vadd.f32 %v462, %v589
      %v605 = vadd.f32 %v465, %v592
      %v606 = vadd.f32 %v467, %v594
      %v607 = vadd.f32 %v470, %v597
      %v608 = vadd.f32 %v472, %v599
      %s609 = scalar_lea.vmem %s206, 4
      %v610 = vld [vmem:[%s609] sm:$0xf]
      %v611 = vld [vmem:[%s609 + $0x4] sm:$0xf]
      %v612 = vld [vmem:[%s609 + $0x8] sm:$0xf]
      %v613 = vld [vmem:[%s609 + $0xc] sm:$0xf]
      %v614 = vld [vmem:[%s609 + $0x10] sm:$0xf]
      %v615 = vld [vmem:[%s609 + $0x14] sm:$0xf]
      %v616 = vld [vmem:[%s609 + $0x18] sm:$0xf]
      %v617 = vld [vmem:[%s609 + $0x1c] sm:$0xf]
      %s618 = scalar_lea.vmem %s210, 192
      %v619 = vld [vmem:[%s618] sm:$0xf]
      %v620 = vld [vmem:[%s618 + $0x4] sm:$0xf]
      %v621 = vld [vmem:[%s618 + $0x8] sm:$0xf]
      %v622 = vld [vmem:[%s618 + $0xc] sm:$0xf]
      %v623 = vld [vmem:[%s618 + $0x10] sm:$0xf]
      %v624 = vld [vmem:[%s618 + $0x14] sm:$0xf]
      %v625 = vld [vmem:[%s618 + $0x18] sm:$0xf]
      %v626 = vld [vmem:[%s618 + $0x1c] sm:$0xf]
      %v627 = vld [vmem:[%s618 + $0x20] sm:$0xf]
      %v628 = vld [vmem:[%s618 + $0x24] sm:$0xf]
      %v629 = vld [vmem:[%s618 + $0x28] sm:$0xf]
      %v630 = vld [vmem:[%s618 + $0x2c] sm:$0xf]
      %v631 = vld [vmem:[%s618 + $0x30] sm:$0xf]
      %v632 = vld [vmem:[%s618 + $0x34] sm:$0xf]
      %v633 = vld [vmem:[%s618 + $0x38] sm:$0xf]
      %v634 = vld [vmem:[%s618 + $0x3c] sm:$0xf]
      %v643 = vunpack.c.l.b16 %v610
      %v644 = vunpack.c.l.b16 %v611
      %v645 = vunpack.c.l.b16 %v612
      %v646 = vunpack.c.l.b16 %v613
      %v647 = vunpack.c.l.b16 %v614
      %v648 = vunpack.c.l.b16 %v615
      %v649 = vunpack.c.l.b16 %v616
      %v650 = vunpack.c.l.b16 %v617
      %v651 = vpack.c.b16 %v644, %v643
      %v652 = vpack.c.b16 %v646, %v645
      %v653 = vpack.c.b16 %v648, %v647
      %v654 = vpack.c.b16 %v650, %v649
      %v675 = vunpack.c.l.b16 %v619
      %v676 = vunpack.c.l.b16 %v620
      %v677 = vunpack.c.l.b16 %v621
      %v678 = vunpack.c.l.b16 %v622
      %v679 = vunpack.c.l.b16 %v623
      %v680 = vunpack.c.l.b16 %v624
      %v681 = vunpack.c.l.b16 %v625
      %v682 = vunpack.c.l.b16 %v626
      %v683 = vunpack.c.l.b16 %v627
      %v684 = vunpack.c.l.b16 %v628
      %v685 = vunpack.c.l.b16 %v629
      %v686 = vunpack.c.l.b16 %v630
      %v687 = vunpack.c.l.b16 %v631
      %v688 = vunpack.c.l.b16 %v632
      %v689 = vunpack.c.l.b16 %v633
      %v690 = vunpack.c.l.b16 %v634
      %v691 = vpack.c.b16 %v676, %v675
      %v692 = vpack.c.b16 %v678, %v677
      %v693 = vpack.c.b16 %v680, %v679
      %v694 = vpack.c.b16 %v682, %v681
      %v695 = vpack.c.b16 %v684, %v683
      %v696 = vpack.c.b16 %v686, %v685
      %v697 = vpack.c.b16 %v688, %v687
      %v698 = vpack.c.b16 %v690, %v689
      %707 = vmatpush.bf16.msra.mxu0 %v698
      %708 = vmatpush.bf16.msra.mxu0 %v697
      %709 = vmatpush.bf16.msra.mxu0 %v696
      %710 = vmatpush.bf16.msra.mxu0 %v695
      %711 = vmatpush.bf16.msra.mxu0 %v694
      %712 = vmatpush.bf16.msra.mxu0 %v693
      %713 = vmatpush.bf16.msra.mxu0 %v692
      %714 = vmatpush.bf16.msra.mxu0 %v691
      %715 = vmatmul.bf16.gmra.mxu0 %v651
      %v716 = vpop.f32.mrf.mxu0
      %v717 = vadd.f32 0.0, %v716
      %v718 = vpop.f32.mrf.mxu0
      %v719 = vadd.f32 0.0, %v718
      %720 = vmatmul.bf16.gmra.mxu0 %v652
      %v721 = vpop.f32.mrf.mxu0
      %v722 = vadd.f32 0.0, %v721
      %v723 = vpop.f32.mrf.mxu0
      %v724 = vadd.f32 0.0, %v723
      %725 = vmatmul.bf16.gmra.mxu0 %v653
      %v726 = vpop.f32.mrf.mxu0
      %v727 = vadd.f32 0.0, %v726
      %v728 = vpop.f32.mrf.mxu0
      %v729 = vadd.f32 0.0, %v728
      %730 = vmatmul.bf16.gmra.mxu0 %v654
      %v731 = vpop.f32.mrf.mxu0
      %v732 = vadd.f32 0.0, %v731
      %v733 = vpop.f32.mrf.mxu0
      %v734 = vadd.f32 0.0, %v733
      %735 = vdwg.mxu0
      %v736 = vadd.f32 %v601, %v717
      %v737 = vadd.f32 %v602, %v719
      %v738 = vadd.f32 %v603, %v722
      %v739 = vadd.f32 %v604, %v724
      %v740 = vadd.f32 %v605, %v727
      %v741 = vadd.f32 %v606, %v729
      %v742 = vadd.f32 %v607, %v732
      %v743 = vadd.f32 %v608, %v734
      %s744 = scalar_lea.vmem %s206, 44
      %v745 = vld [vmem:[%s744] sm:$0xf]
      %v746 = vld [vmem:[%s744 + $0x4] sm:$0xf]
      %v747 = vld [vmem:[%s744 + $0x8] sm:$0xf]
      %v748 = vld [vmem:[%s744 + $0xc] sm:$0xf]
      %v749 = vld [vmem:[%s744 + $0x10] sm:$0xf]
      %v750 = vld [vmem:[%s744 + $0x14] sm:$0xf]
      %v751 = vld [vmem:[%s744 + $0x18] sm:$0xf]
      %v752 = vld [vmem:[%s744 + $0x1c] sm:$0xf]
      %s753 = scalar_lea.vmem %s210, 256
      %v754 = vld [vmem:[%s753] sm:$0xf]
      %v755 = vld [vmem:[%s753 + $0x4] sm:$0xf]
      %v756 = vld [vmem:[%s753 + $0x8] sm:$0xf]
      %v757 = vld [vmem:[%s753 + $0xc] sm:$0xf]
      %v758 = vld [vmem:[%s753 + $0x10] sm:$0xf]
      %v759 = vld [vmem:[%s753 + $0x14] sm:$0xf]
      %v760 = vld [vmem:[%s753 + $0x18] sm:$0xf]
      %v761 = vld [vmem:[%s753 + $0x1c] sm:$0xf]
      %v762 = vld [vmem:[%s753 + $0x20] sm:$0xf]
      %v763 = vld [vmem:[%s753 + $0x24] sm:$0xf]
      %v764 = vld [vmem:[%s753 + $0x28] sm:$0xf]
      %v765 = vld [vmem:[%s753 + $0x2c] sm:$0xf]
      %v766 = vld [vmem:[%s753 + $0x30] sm:$0xf]
      %v767 = vld [vmem:[%s753 + $0x34] sm:$0xf]
      %v768 = vld [vmem:[%s753 + $0x38] sm:$0xf]
      %v769 = vld [vmem:[%s753 + $0x3c] sm:$0xf]
      %v778 = vunpack.c.l.b16 %v745
      %v779 = vunpack.c.l.b16 %v746
      %v780 = vunpack.c.l.b16 %v747
      %v781 = vunpack.c.l.b16 %v748
      %v782 = vunpack.c.l.b16 %v749
      %v783 = vunpack.c.l.b16 %v750
      %v784 = vunpack.c.l.b16 %v751
      %v785 = vunpack.c.l.b16 %v752
      %v786 = vpack.c.b16 %v779, %v778
      %v787 = vpack.c.b16 %v781, %v780
      %v788 = vpack.c.b16 %v783, %v782
      %v789 = vpack.c.b16 %v785, %v784
      %v810 = vunpack.c.l.b16 %v754
      %v811 = vunpack.c.l.b16 %v755
      %v812 = vunpack.c.l.b16 %v756
      %v813 = vunpack.c.l.b16 %v757
      %v814 = vunpack.c.l.b16 %v758
      %v815 = vunpack.c.l.b16 %v759
      %v816 = vunpack.c.l.b16 %v760
      %v817 = vunpack.c.l.b16 %v761
      %v818 = vunpack.c.l.b16 %v762
      %v819 = vunpack.c.l.b16 %v763
      %v820 = vunpack.c.l.b16 %v764
      %v821 = vunpack.c.l.b16 %v765
      %v822 = vunpack.c.l.b16 %v766
      %v823 = vunpack.c.l.b16 %v767
      %v824 = vunpack.c.l.b16 %v768
      %v825 = vunpack.c.l.b16 %v769
      %v826 = vpack.c.b16 %v811, %v810
      %v827 = vpack.c.b16 %v813, %v812
      %v828 = vpack.c.b16 %v815, %v814
      %v829 = vpack.c.b16 %v817, %v816
      %v830 = vpack.c.b16 %v819, %v818
      %v831 = vpack.c.b16 %v821, %v820
      %v832 = vpack.c.b16 %v823, %v822
      %v833 = vpack.c.b16 %v825, %v824
      %842 = vmatpush.bf16.msra.mxu0 %v833
      %843 = vmatpush.bf16.msra.mxu0 %v832
      %844 = vmatpush.bf16.msra.mxu0 %v831
      %845 = vmatpush.bf16.msra.mxu0 %v830
      %846 = vmatpush.bf16.msra.mxu0 %v829
      %847 = vmatpush.bf16.msra.mxu0 %v828
      %848 = vmatpush.bf16.msra.mxu0 %v827
      %849 = vmatpush.bf16.msra.mxu0 %v826
      %850 = vmatmul.bf16.gmra.mxu0 %v786
      %v851 = vpop.f32.mrf.mxu0
      %v852 = vadd.f32 0.0, %v851
      %v853 = vpop.f32.mrf.mxu0
      %v854 = vadd.f32 0.0, %v853
      %855 = vmatmul.bf16.gmra.mxu0 %v787
      %v856 = vpop.f32.mrf.mxu0
      %v857 = vadd.f32 0.0, %v856
      %v858 = vpop.f32.mrf.mxu0
      %v859 = vadd.f32 0.0, %v858
      %860 = vmatmul.bf16.gmra.mxu0 %v788
      %v861 = vpop.f32.mrf.mxu0
      %v862 = vadd.f32 0.0, %v861
      %v863 = vpop.f32.mrf.mxu0
      %v864 = vadd.f32 0.0, %v863
      %865 = vmatmul.bf16.gmra.mxu0 %v789
      %v866 = vpop.f32.mrf.mxu0
      %v867 = vadd.f32 0.0, %v866
      %v868 = vpop.f32.mrf.mxu0
      %v869 = vadd.f32 0.0, %v868
      %870 = vdwg.mxu0
      %v871 = vadd.f32 %v736, %v852
      %v872 = vadd.f32 %v737, %v854
      %v873 = vadd.f32 %v738, %v857
      %v874 = vadd.f32 %v739, %v859
      %v875 = vadd.f32 %v740, %v862
      %v876 = vadd.f32 %v741, %v864
      %v877 = vadd.f32 %v742, %v867
      %v878 = vadd.f32 %v743, %v869
      %s879 = scalar_lea.vmem %s206, 84
      %v880 = vld [vmem:[%s879] sm:$0xf]
      %v881 = vld [vmem:[%s879 + $0x4] sm:$0xf]
      %v882 = vld [vmem:[%s879 + $0x8] sm:$0xf]
      %v883 = vld [vmem:[%s879 + $0xc] sm:$0xf]
      %v884 = vld [vmem:[%s879 + $0x10] sm:$0xf]
      %v885 = vld [vmem:[%s879 + $0x14] sm:$0xf]
      %v886 = vld [vmem:[%s879 + $0x18] sm:$0xf]
      %v887 = vld [vmem:[%s879 + $0x1c] sm:$0xf]
      %s888 = scalar_lea.vmem %s210, 320
      %v889 = vld [vmem:[%s888] sm:$0xf]
      %v890 = vld [vmem:[%s888 + $0x4] sm:$0xf]
      %v891 = vld [vmem:[%s888 + $0x8] sm:$0xf]
      %v892 = vld [vmem:[%s888 + $0xc] sm:$0xf]
      %v893 = vld [vmem:[%s888 + $0x10] sm:$0xf]
      %v894 = vld [vmem:[%s888 + $0x14] sm:$0xf]
      %v895 = vld [vmem:[%s888 + $0x18] sm:$0xf]
      %v896 = vld [vmem:[%s888 + $0x1c] sm:$0xf]
      %v897 = vld [vmem:[%s888 + $0x20] sm:$0xf]
      %v898 = vld [vmem:[%s888 + $0x24] sm:$0xf]
      %v899 = vld [vmem:[%s888 + $0x28] sm:$0xf]
      %v900 = vld [vmem:[%s888 + $0x2c] sm:$0xf]
      %v901 = vld [vmem:[%s888 + $0x30] sm:$0xf]
      %v902 = vld [vmem:[%s888 + $0x34] sm:$0xf]
      %v903 = vld [vmem:[%s888 + $0x38] sm:$0xf]
      %v904 = vld [vmem:[%s888 + $0x3c] sm:$0xf]
      %v913 = vunpack.c.l.b16 %v880
      %v914 = vunpack.c.l.b16 %v881
      %v915 = vunpack.c.l.b16 %v882
      %v916 = vunpack.c.l.b16 %v883
      %v917 = vunpack.c.l.b16 %v884
      %v918 = vunpack.c.l.b16 %v885
      %v919 = vunpack.c.l.b16 %v886
      %v920 = vunpack.c.l.b16 %v887
      %v921 = vpack.c.b16 %v914, %v913
      %v922 = vpack.c.b16 %v916, %v915
      %v923 = vpack.c.b16 %v918, %v917
      %v924 = vpack.c.b16 %v920, %v919
      %v945 = vunpack.c.l.b16 %v889
      %v946 = vunpack.c.l.b16 %v890
      %v947 = vunpack.c.l.b16 %v891
      %v948 = vunpack.c.l.b16 %v892
      %v949 = vunpack.c.l.b16 %v893
      %v950 = vunpack.c.l.b16 %v894
      %v951 = vunpack.c.l.b16 %v895
      %v952 = vunpack.c.l.b16 %v896
      %v953 = vunpack.c.l.b16 %v897
      %v954 = vunpack.c.l.b16 %v898
      %v955 = vunpack.c.l.b16 %v899
      %v956 = vunpack.c.l.b16 %v900
      %v957 = vunpack.c.l.b16 %v901
      %v958 = vunpack.c.l.b16 %v902
      %v959 = vunpack.c.l.b16 %v903
      %v960 = vunpack.c.l.b16 %v904
      %v961 = vpack.c.b16 %v946, %v945
      %v962 = vpack.c.b16 %v948, %v947
      %v963 = vpack.c.b16 %v950, %v949
      %v964 = vpack.c.b16 %v952, %v951
      %v965 = vpack.c.b16 %v954, %v953
      %v966 = vpack.c.b16 %v956, %v955
      %v967 = vpack.c.b16 %v958, %v957
      %v968 = vpack.c.b16 %v960, %v959
      %977 = vmatpush.bf16.msra.mxu0 %v968
      %978 = vmatpush.bf16.msra.mxu0 %v967
      %979 = vmatpush.bf16.msra.mxu0 %v966
      %980 = vmatpush.bf16.msra.mxu0 %v965
      %981 = vmatpush.bf16.msra.mxu0 %v964
      %982 = vmatpush.bf16.msra.mxu0 %v963
      %983 = vmatpush.bf16.msra.mxu0 %v962
      %984 = vmatpush.bf16.msra.mxu0 %v961
      %985 = vmatmul.bf16.gmra.mxu0 %v921
      %v986 = vpop.f32.mrf.mxu0
      %v987 = vadd.f32 0.0, %v986
      %v988 = vpop.f32.mrf.mxu0
      %v989 = vadd.f32 0.0, %v988
      %990 = vmatmul.bf16.gmra.mxu0 %v922
      %v991 = vpop.f32.mrf.mxu0
      %v992 = vadd.f32 0.0, %v991
      %v993 = vpop.f32.mrf.mxu0
      %v994 = vadd.f32 0.0, %v993
      %995 = vmatmul.bf16.gmra.mxu0 %v923
      %v996 = vpop.f32.mrf.mxu0
      %v997 = vadd.f32 0.0, %v996
      %v998 = vpop.f32.mrf.mxu0
      %v999 = vadd.f32 0.0, %v998
      %1000 = vmatmul.bf16.gmra.mxu0 %v924
      %v1001 = vpop.f32.mrf.mxu0
      %v1002 = vadd.f32 0.0, %v1001
      %v1003 = vpop.f32.mrf.mxu0
      %v1004 = vadd.f32 0.0, %v1003
      %1005 = vdwg.mxu0
      %v1006 = vadd.f32 %v871, %v987
      %v1007 = vadd.f32 %v872, %v989
      %v1008 = vadd.f32 %v873, %v992
      %v1009 = vadd.f32 %v874, %v994
      %v1010 = vadd.f32 %v875, %v997
      %v1011 = vadd.f32 %v876, %v999
      %v1012 = vadd.f32 %v877, %v1002
      %v1013 = vadd.f32 %v878, %v1004
      %s1014 = scalar_lea.vmem %s206, 8
      %v1015 = vld [vmem:[%s1014] sm:$0xf]
      %v1016 = vld [vmem:[%s1014 + $0x4] sm:$0xf]
      %v1017 = vld [vmem:[%s1014 + $0x8] sm:$0xf]
      %v1018 = vld [vmem:[%s1014 + $0xc] sm:$0xf]
      %v1019 = vld [vmem:[%s1014 + $0x10] sm:$0xf]
      %v1020 = vld [vmem:[%s1014 + $0x14] sm:$0xf]
      %v1021 = vld [vmem:[%s1014 + $0x18] sm:$0xf]
      %v1022 = vld [vmem:[%s1014 + $0x1c] sm:$0xf]
      %s1023 = scalar_lea.vmem %s210, 384
      %v1024 = vld [vmem:[%s1023] sm:$0xf]
      %v1025 = vld [vmem:[%s1023 + $0x4] sm:$0xf]
      %v1026 = vld [vmem:[%s1023 + $0x8] sm:$0xf]
      %v1027 = vld [vmem:[%s1023 + $0xc] sm:$0xf]
      %v1028 = vld [vmem:[%s1023 + $0x10] sm:$0xf]
      %v1029 = vld [vmem:[%s1023 + $0x14] sm:$0xf]
      %v1030 = vld [vmem:[%s1023 + $0x18] sm:$0xf]
      %v1031 = vld [vmem:[%s1023 + $0x1c] sm:$0xf]
      %v1032 = vld [vmem:[%s1023 + $0x20] sm:$0xf]
      %v1033 = vld [vmem:[%s1023 + $0x24] sm:$0xf]
      %v1034 = vld [vmem:[%s1023 + $0x28] sm:$0xf]
      %v1035 = vld [vmem:[%s1023 + $0x2c] sm:$0xf]
      %v1036 = vld [vmem:[%s1023 + $0x30] sm:$0xf]
      %v1037 = vld [vmem:[%s1023 + $0x34] sm:$0xf]
      %v1038 = vld [vmem:[%s1023 + $0x38] sm:$0xf]
      %v1039 = vld [vmem:[%s1023 + $0x3c] sm:$0xf]
      %v1048 = vunpack.c.l.b16 %v1015
      %v1049 = vunpack.c.l.b16 %v1016
      %v1050 = vunpack.c.l.b16 %v1017
      %v1051 = vunpack.c.l.b16 %v1018
      %v1052 = vunpack.c.l.b16 %v1019
      %v1053 = vunpack.c.l.b16 %v1020
      %v1054 = vunpack.c.l.b16 %v1021
      %v1055 = vunpack.c.l.b16 %v1022
      %v1056 = vpack.c.b16 %v1049, %v1048
      %v1057 = vpack.c.b16 %v1051, %v1050
      %v1058 = vpack.c.b16 %v1053, %v1052
      %v1059 = vpack.c.b16 %v1055, %v1054
      %v1080 = vunpack.c.l.b16 %v1024
      %v1081 = vunpack.c.l.b16 %v1025
      %v1082 = vunpack.c.l.b16 %v1026
      %v1083 = vunpack.c.l.b16 %v1027
      %v1084 = vunpack.c.l.b16 %v1028
      %v1085 = vunpack.c.l.b16 %v1029
      %v1086 = vunpack.c.l.b16 %v1030
      %v1087 = vunpack.c.l.b16 %v1031
      %v1088 = vunpack.c.l.b16 %v1032
      %v1089 = vunpack.c.l.b16 %v1033
      %v1090 = vunpack.c.l.b16 %v1034
      %v1091 = vunpack.c.l.b16 %v1035
      %v1092 = vunpack.c.l.b16 %v1036
      %v1093 = vunpack.c.l.b16 %v1037
      %v1094 = vunpack.c.l.b16 %v1038
      %v1095 = vunpack.c.l.b16 %v1039
      %v1096 = vpack.c.b16 %v1081, %v1080
      %v1097 = vpack.c.b16 %v1083, %v1082
      %v1098 = vpack.c.b16 %v1085, %v1084
      %v1099 = vpack.c.b16 %v1087, %v1086
      %v1100 = vpack.c.b16 %v1089, %v1088
      %v1101 = vpack.c.b16 %v1091, %v1090
      %v1102 = vpack.c.b16 %v1093, %v1092
      %v1103 = vpack.c.b16 %v1095, %v1094
      %1112 = vmatpush.bf16.msra.mxu0 %v1103
      %1113 = vmatpush.bf16.msra.mxu0 %v1102
      %1114 = vmatpush.bf16.msra.mxu0 %v1101
      %1115 = vmatpush.bf16.msra.mxu0 %v1100
      %1116 = vmatpush.bf16.msra.mxu0 %v1099
      %1117 = vmatpush.bf16.msra.mxu0 %v1098
      %1118 = vmatpush.bf16.msra.mxu0 %v1097
      %1119 = vmatpush.bf16.msra.mxu0 %v1096
      %1120 = vmatmul.bf16.gmra.mxu0 %v1056
      %v1121 = vpop.f32.mrf.mxu0
      %v1122 = vadd.f32 0.0, %v1121
      %v1123 = vpop.f32.mrf.mxu0
      %v1124 = vadd.f32 0.0, %v1123
      %1125 = vmatmul.bf16.gmra.mxu0 %v1057
      %v1126 = vpop.f32.mrf.mxu0
      %v1127 = vadd.f32 0.0, %v1126
      %v1128 = vpop.f32.mrf.mxu0
      %v1129 = vadd.f32 0.0, %v1128
      %1130 = vmatmul.bf16.gmra.mxu0 %v1058
      %v1131 = vpop.f32.mrf.mxu0
      %v1132 = vadd.f32 0.0, %v1131
      %v1133 = vpop.f32.mrf.mxu0
      %v1134 = vadd.f32 0.0, %v1133
      %1135 = vmatmul.bf16.gmra.mxu0 %v1059
      %v1136 = vpop.f32.mrf.mxu0
      %v1137 = vadd.f32 0.0, %v1136
      %v1138 = vpop.f32.mrf.mxu0
      %v1139 = vadd.f32 0.0, %v1138
      %1140 = vdwg.mxu0
      %v1141 = vadd.f32 %v1006, %v1122
      %v1142 = vadd.f32 %v1007, %v1124
      %v1143 = vadd.f32 %v1008, %v1127
      %v1144 = vadd.f32 %v1009, %v1129
      %v1145 = vadd.f32 %v1010, %v1132
      %v1146 = vadd.f32 %v1011, %v1134
      %v1147 = vadd.f32 %v1012, %v1137
      %v1148 = vadd.f32 %v1013, %v1139
      %s1149 = scalar_lea.vmem %s206, 48
      %v1150 = vld [vmem:[%s1149] sm:$0xf]
      %v1151 = vld [vmem:[%s1149 + $0x4] sm:$0xf]
      %v1152 = vld [vmem:[%s1149 + $0x8] sm:$0xf]
      %v1153 = vld [vmem:[%s1149 + $0xc] sm:$0xf]
      %v1154 = vld [vmem:[%s1149 + $0x10] sm:$0xf]
      %v1155 = vld [vmem:[%s1149 + $0x14] sm:$0xf]
      %v1156 = vld [vmem:[%s1149 + $0x18] sm:$0xf]
      %v1157 = vld [vmem:[%s1149 + $0x1c] sm:$0xf]
      %s1158 = scalar_lea.vmem %s210, 448
      %v1159 = vld [vmem:[%s1158] sm:$0xf]
      %v1160 = vld [vmem:[%s1158 + $0x4] sm:$0xf]
      %v1161 = vld [vmem:[%s1158 + $0x8] sm:$0xf]
      %v1162 = vld [vmem:[%s1158 + $0xc] sm:$0xf]
      %v1163 = vld [vmem:[%s1158 + $0x10] sm:$0xf]
      %v1164 = vld [vmem:[%s1158 + $0x14] sm:$0xf]
      %v1165 = vld [vmem:[%s1158 + $0x18] sm:$0xf]
      %v1166 = vld [vmem:[%s1158 + $0x1c] sm:$0xf]
      %v1167 = vld [vmem:[%s1158 + $0x20] sm:$0xf]
      %v1168 = vld [vmem:[%s1158 + $0x24] sm:$0xf]
      %v1169 = vld [vmem:[%s1158 + $0x28] sm:$0xf]
      %v1170 = vld [vmem:[%s1158 + $0x2c] sm:$0xf]
      %v1171 = vld [vmem:[%s1158 + $0x30] sm:$0xf]
      %v1172 = vld [vmem:[%s1158 + $0x34] sm:$0xf]
      %v1173 = vld [vmem:[%s1158 + $0x38] sm:$0xf]
      %v1174 = vld [vmem:[%s1158 + $0x3c] sm:$0xf]
      %v1183 = vunpack.c.l.b16 %v1150
      %v1184 = vunpack.c.l.b16 %v1151
      %v1185 = vunpack.c.l.b16 %v1152
      %v1186 = vunpack.c.l.b16 %v1153
      %v1187 = vunpack.c.l.b16 %v1154
      %v1188 = vunpack.c.l.b16 %v1155
      %v1189 = vunpack.c.l.b16 %v1156
      %v1190 = vunpack.c.l.b16 %v1157
      %v1191 = vpack.c.b16 %v1184, %v1183
      %v1192 = vpack.c.b16 %v1186, %v1185
      %v1193 = vpack.c.b16 %v1188, %v1187
      %v1194 = vpack.c.b16 %v1190, %v1189
      %v1215 = vunpack.c.l.b16 %v1159
      %v1216 = vunpack.c.l.b16 %v1160
      %v1217 = vunpack.c.l.b16 %v1161
      %v1218 = vunpack.c.l.b16 %v1162
      %v1219 = vunpack.c.l.b16 %v1163
      %v1220 = vunpack.c.l.b16 %v1164
      %v1221 = vunpack.c.l.b16 %v1165
      %v1222 = vunpack.c.l.b16 %v1166
      %v1223 = vunpack.c.l.b16 %v1167
      %v1224 = vunpack.c.l.b16 %v1168
      %v1225 = vunpack.c.l.b16 %v1169
      %v1226 = vunpack.c.l.b16 %v1170
      %v1227 = vunpack.c.l.b16 %v1171
      %v1228 = vunpack.c.l.b16 %v1172
      %v1229 = vunpack.c.l.b16 %v1173
      %v1230 = vunpack.c.l.b16 %v1174
      %v1231 = vpack.c.b16 %v1216, %v1215
      %v1232 = vpack.c.b16 %v1218, %v1217
      %v1233 = vpack.c.b16 %v1220, %v1219
      %v1234 = vpack.c.b16 %v1222, %v1221
      %v1235 = vpack.c.b16 %v1224, %v1223
      %v1236 = vpack.c.b16 %v1226, %v1225
      %v1237 = vpack.c.b16 %v1228, %v1227
      %v1238 = vpack.c.b16 %v1230, %v1229
      %1247 = vmatpush.bf16.msra.mxu0 %v1238
      %1248 = vmatpush.bf16.msra.mxu0 %v1237
      %1249 = vmatpush.bf16.msra.mxu0 %v1236
      %1250 = vmatpush.bf16.msra.mxu0 %v1235
      %1251 = vmatpush.bf16.msra.mxu0 %v1234
      %1252 = vmatpush.bf16.msra.mxu0 %v1233
      %1253 = vmatpush.bf16.msra.mxu0 %v1232
      %1254 = vmatpush.bf16.msra.mxu0 %v1231
      %1255 = vmatmul.bf16.gmra.mxu0 %v1191
      %v1256 = vpop.f32.mrf.mxu0
      %v1257 = vadd.f32 0.0, %v1256
      %v1258 = vpop.f32.mrf.mxu0
      %v1259 = vadd.f32 0.0, %v1258
      %1260 = vmatmul.bf16.gmra.mxu0 %v1192
      %v1261 = vpop.f32.mrf.mxu0
      %v1262 = vadd.f32 0.0, %v1261
      %v1263 = vpop.f32.mrf.mxu0
      %v1264 = vadd.f32 0.0, %v1263
      %1265 = vmatmul.bf16.gmra.mxu0 %v1193
      %v1266 = vpop.f32.mrf.mxu0
      %v1267 = vadd.f32 0.0, %v1266
      %v1268 = vpop.f32.mrf.mxu0
      %v1269 = vadd.f32 0.0, %v1268
      %1270 = vmatmul.bf16.gmra.mxu0 %v1194
      %v1271 = vpop.f32.mrf.mxu0
      %v1272 = vadd.f32 0.0, %v1271
      %v1273 = vpop.f32.mrf.mxu0
      %v1274 = vadd.f32 0.0, %v1273
      %1275 = vdwg.mxu0
      %v1276 = vadd.f32 %v1141, %v1257
      %v1277 = vadd.f32 %v1142, %v1259
      %v1278 = vadd.f32 %v1143, %v1262
      %v1279 = vadd.f32 %v1144, %v1264
      %v1280 = vadd.f32 %v1145, %v1267
      %v1281 = vadd.f32 %v1146, %v1269
      %v1282 = vadd.f32 %v1147, %v1272
      %v1283 = vadd.f32 %v1148, %v1274
      %s1284 = scalar_lea.vmem %s206, 88
      %v1285 = vld [vmem:[%s1284] sm:$0xf]
      %v1286 = vld [vmem:[%s1284 + $0x4] sm:$0xf]
      %v1287 = vld [vmem:[%s1284 + $0x8] sm:$0xf]
      %v1288 = vld [vmem:[%s1284 + $0xc] sm:$0xf]
      %v1289 = vld [vmem:[%s1284 + $0x10] sm:$0xf]
      %v1290 = vld [vmem:[%s1284 + $0x14] sm:$0xf]
      %v1291 = vld [vmem:[%s1284 + $0x18] sm:$0xf]
      %v1292 = vld [vmem:[%s1284 + $0x1c] sm:$0xf]
      %s1293 = scalar_lea.vmem %s210, 512
      %v1294 = vld [vmem:[%s1293] sm:$0xf]
      %v1295 = vld [vmem:[%s1293 + $0x4] sm:$0xf]
      %v1296 = vld [vmem:[%s1293 + $0x8] sm:$0xf]
      %v1297 = vld [vmem:[%s1293 + $0xc] sm:$0xf]
      %v1298 = vld [vmem:[%s1293 + $0x10] sm:$0xf]
      %v1299 = vld [vmem:[%s1293 + $0x14] sm:$0xf]
      %v1300 = vld [vmem:[%s1293 + $0x18] sm:$0xf]
      %v1301 = vld [vmem:[%s1293 + $0x1c] sm:$0xf]
      %v1302 = vld [vmem:[%s1293 + $0x20] sm:$0xf]
      %v1303 = vld [vmem:[%s1293 + $0x24] sm:$0xf]
      %v1304 = vld [vmem:[%s1293 + $0x28] sm:$0xf]
      %v1305 = vld [vmem:[%s1293 + $0x2c] sm:$0xf]
      %v1306 = vld [vmem:[%s1293 + $0x30] sm:$0xf]
      %v1307 = vld [vmem:[%s1293 + $0x34] sm:$0xf]
      %v1308 = vld [vmem:[%s1293 + $0x38] sm:$0xf]
      %v1309 = vld [vmem:[%s1293 + $0x3c] sm:$0xf]
      %v1318 = vunpack.c.l.b16 %v1285
      %v1319 = vunpack.c.l.b16 %v1286
      %v1320 = vunpack.c.l.b16 %v1287
      %v1321 = vunpack.c.l.b16 %v1288
      %v1322 = vunpack.c.l.b16 %v1289
      %v1323 = vunpack.c.l.b16 %v1290
      %v1324 = vunpack.c.l.b16 %v1291
      %v1325 = vunpack.c.l.b16 %v1292
      %v1326 = vpack.c.b16 %v1319, %v1318
      %v1327 = vpack.c.b16 %v1321, %v1320
      %v1328 = vpack.c.b16 %v1323, %v1322
      %v1329 = vpack.c.b16 %v1325, %v1324
      %v1350 = vunpack.c.l.b16 %v1294
      %v1351 = vunpack.c.l.b16 %v1295
      %v1352 = vunpack.c.l.b16 %v1296
      %v1353 = vunpack.c.l.b16 %v1297
      %v1354 = vunpack.c.l.b16 %v1298
      %v1355 = vunpack.c.l.b16 %v1299
      %v1356 = vunpack.c.l.b16 %v1300
      %v1357 = vunpack.c.l.b16 %v1301
      %v1358 = vunpack.c.l.b16 %v1302
      %v1359 = vunpack.c.l.b16 %v1303
      %v1360 = vunpack.c.l.b16 %v1304
      %v1361 = vunpack.c.l.b16 %v1305
      %v1362 = vunpack.c.l.b16 %v1306
      %v1363 = vunpack.c.l.b16 %v1307
      %v1364 = vunpack.c.l.b16 %v1308
      %v1365 = vunpack.c.l.b16 %v1309
      %v1366 = vpack.c.b16 %v1351, %v1350
      %v1367 = vpack.c.b16 %v1353, %v1352
      %v1368 = vpack.c.b16 %v1355, %v1354
      %v1369 = vpack.c.b16 %v1357, %v1356
      %v1370 = vpack.c.b16 %v1359, %v1358
      %v1371 = vpack.c.b16 %v1361, %v1360
      %v1372 = vpack.c.b16 %v1363, %v1362
      %v1373 = vpack.c.b16 %v1365, %v1364
      %1382 = vmatpush.bf16.msra.mxu0 %v1373
      %1383 = vmatpush.bf16.msra.mxu0 %v1372
      %1384 = vmatpush.bf16.msra.mxu0 %v1371
      %1385 = vmatpush.bf16.msra.mxu0 %v1370
      %1386 = vmatpush.bf16.msra.mxu0 %v1369
      %1387 = vmatpush.bf16.msra.mxu0 %v1368
      %1388 = vmatpush.bf16.msra.mxu0 %v1367
      %1389 = vmatpush.bf16.msra.mxu0 %v1366
      %1390 = vmatmul.bf16.gmra.mxu0 %v1326
      %v1391 = vpop.f32.mrf.mxu0
      %v1392 = vadd.f32 0.0, %v1391
      %v1393 = vpop.f32.mrf.mxu0
      %v1394 = vadd.f32 0.0, %v1393
      %1395 = vmatmul.bf16.gmra.mxu0 %v1327
      %v1396 = vpop.f32.mrf.mxu0
      %v1397 = vadd.f32 0.0, %v1396
      %v1398 = vpop.f32.mrf.mxu0
      %v1399 = vadd.f32 0.0, %v1398
      %1400 = vmatmul.bf16.gmra.mxu0 %v1328
      %v1401 = vpop.f32.mrf.mxu0
      %v1402 = vadd.f32 0.0, %v1401
      %v1403 = vpop.f32.mrf.mxu0
      %v1404 = vadd.f32 0.0, %v1403
      %1405 = vmatmul.bf16.gmra.mxu0 %v1329
      %v1406 = vpop.f32.mrf.mxu0
      %v1407 = vadd.f32 0.0, %v1406
      %v1408 = vpop.f32.mrf.mxu0
      %v1409 = vadd.f32 0.0, %v1408
      %1410 = vdwg.mxu0
      %v1411 = vadd.f32 %v1276, %v1392
      %v1412 = vadd.f32 %v1277, %v1394
      %v1413 = vadd.f32 %v1278, %v1397
      %v1414 = vadd.f32 %v1279, %v1399
      %v1415 = vadd.f32 %v1280, %v1402
      %v1416 = vadd.f32 %v1281, %v1404
      %v1417 = vadd.f32 %v1282, %v1407
      %v1418 = vadd.f32 %v1283, %v1409
      %v1419 = vld [vmem:[%s213] sm:$0x1]
      %v1421 = vperm.slane %v1419, 0
      %v1423 = vadd.f32 %v1411, %v1421
      %v1424 = vadd.f32 %v1412, %v1421
      %v1425 = vadd.f32 %v1413, %v1421
      %v1426 = vadd.f32 %v1414, %v1421
      %v1427 = vadd.f32 %v1415, %v1421
      %v1428 = vadd.f32 %v1416, %v1421
      %v1429 = vadd.f32 %v1417, %v1421
      %v1430 = vadd.f32 %v1418, %v1421
      %v1431 = vmax.f32 %v1423, 0.0
      %v1432 = vmax.f32 %v1424, 0.0
      %v1433 = vmax.f32 %v1425, 0.0
      %v1434 = vmax.f32 %v1426, 0.0
      %v1435 = vmax.f32 %v1427, 0.0
      %v1436 = vmax.f32 %v1428, 0.0
      %v1437 = vmax.f32 %v1429, 0.0
      %v1438 = vmax.f32 %v1430, 0.0
      %v1439 = vpack.c.bf16 %v1431, %v1431
      %v1440 = vpack.c.bf16 %v1432, %v1432
      %v1441 = vpack.c.bf16 %v1433, %v1433
      %v1442 = vpack.c.bf16 %v1434, %v1434
      %v1443 = vpack.c.bf16 %v1435, %v1435
      %v1444 = vpack.c.bf16 %v1436, %v1436
      %v1445 = vpack.c.bf16 %v1437, %v1437
      %v1446 = vpack.c.bf16 %v1438, %v1438
      %1447 = vst [vmem:[%s221] sm:$0xf] %v1439
      %1448 = vst [vmem:[%s221 + $0x4] sm:$0xf] %v1440
      %1449 = vst [vmem:[%s221 + $0x8] sm:$0xf] %v1441
      %1450 = vst [vmem:[%s221 + $0xc] sm:$0xf] %v1442
      %1451 = vst [vmem:[%s221 + $0x10] sm:$0xf] %v1443
      %1452 = vst [vmem:[%s221 + $0x14] sm:$0xf] %v1444
      %1453 = vst [vmem:[%s221 + $0x18] sm:$0xf] %v1445
      %1454 = vst [vmem:[%s221 + $0x1c] sm:$0xf] %v1446
      %p1455 = scmp.lt.s32.totalorder %s19, 1
      %s1456 = scalar_select %p1455, %s19, 1
      %p1457 = scmp.lt.s32.totalorder %s18, 0
      %s1458 = scalar_select %p1457, %s18, 0
      %s1459 = smul.addr %s1456, 8
      %s1460 = sadd.s32 %s1458, %s1459
      %s1461 = smul.addr %s1460, 4
      %s1462 = scalar_lea.vmem %s3, %s1461
      // Predicated region
      $region33: #{resnet_layer_forward.6} parent=31 // pred_check
        %p1463 = pneg %p124
      $region34: #{resnet_layer_forward.6} parent=31 // pred_check_branch
        %1465 = sbr.rel (%p1463) target = $region36
      $region35: #{resnet_layer_forward.6} parent=31 // pred_region
        _
      $region36: #{resnet_layer_forward.6} parent=31 // pred_fallthru
        _
    $region32: #{resnet_layer_forward.6} parent=5 // pred_fallthru
      _
    %p1466 = scmp.le.s32.totalorder 2, %s9
    // Predicated region
    $region37: #{resnet_layer_forward.6} parent=5 // pred_check
      %p1467 = pneg %p1466
    $region38: #{resnet_layer_forward.6} parent=5 // pred_check_branch
      %1469 = sbr.rel (%p1467) target = $region40
    $region39: #{resnet_layer_forward.6} parent=5 // pred_region
      %s1470 = ssub.s32 %s9, 2
      // Predicated region
      $region41: #{resnet_layer_forward.6} parent=39 // pred_check
        %p1471 = pneg %p130
      $region42: #{resnet_layer_forward.6} parent=39 // pred_check_branch
        %1473 = sbr.rel (%p1471) target = $region44
      $region43: #{resnet_layer_forward.6} parent=39 // pred_region
        %p1474 = scmp.lt.s32.totalorder %s21, 1
        %s1475 = scalar_select %p1474, %s21, 1
        %p1476 = scmp.lt.s32.totalorder %s20, 0
        %s1477 = scalar_select %p1476, %s20, 0
        %s1478 = smul.addr %s1475, 8
        %s1479 = sadd.s32 %s1477, %s1478
        %s1480 = smul.addr %s1479, 4
        %s1481 = scalar_lea.vmem %s3, %s1480
      $region44: #{resnet_layer_forward.6} parent=39 // pred_fallthru
        _
    $region40: #{resnet_layer_forward.6} parent=5 // pred_fallthru
      _
  $region6: #{resnet_layer_forward.6} parent=0 // loop_footer
    %s13 = sadd.s32 1, %s9
  $region7: #{resnet_layer_forward.6} parent=0 // loop_footer_branch
    %8 = sbr.rel target = $region3
  $region8: #{resnet_layer_forward.6} parent=0 // loop_exit
    _

// kernel: resnet_layer_forward.5
$region0: #{resnet_layer_forward.5}
  #allocation0 [shape = 'u32[]', space=smem, size = 0x4, offset = 0x4, fixed_abs, tag = 'smem constant byte address 0x4 - core index']
  #allocation1 [shape = 'u32[72,128]{1,0:T(1,128)}', space=vmem, size = 0x9000, scoped, tag = 'internal scratch']
  %s0 = inlined_call_operand.vmem [shape: bf16[2,3,10,8,128], index: 0, kind: input, shape index: {}]
  %s1 = inlined_call_operand.vmem [shape: bf16[9,128,128], index: 1, kind: input, shape index: {}]
  %s2 = inlined_call_operand.vmem [shape: f32[1,128], index: 2, kind: input, shape index: {}]
  %s3 = inlined_call_operand.vmem [shape: bf16[2,64,128], index: 3, kind: input, shape index: {}]
  %s4 = inlined_call_operand.vmem [shape: bf16[128,128], index: 4, kind: input, shape index: {}]
  %s5 = inlined_call_operand.vmem [shape: bf16[2,64,128], index: 5, kind: output, shape index: {}]
  %s6 = sld [smem:[#allocation0]]
  $region53: #{resnet_layer_forward.5} parent=0
    _
  %s8 = ssub.s32 1, %s6
  %s9 = scalar_select 0, %s8, %s6
  loop: start=0, step=1, limit=4
  $region2: #{resnet_layer_forward.5} parent=0 // loop_pre_header
    _
  $region3: #{resnet_layer_forward.5} parent=0 // loop_header
    %s11 = sphi 0, %s15
    %p12 = scmp.ge.s32.totalorder %s11, 4
    %s18 = sphi 0, %s30
    %s19 = sphi 0, %s26
    %s20 = sphi 0, %s18
    %s21 = sphi 0, %s19
    %s22 = sphi 0, %s20
    %s23 = sphi 0, %s21
    %s33 = sphi 0, %s35
    %s36 = sphi 0, %s33
    %s37 = sphi 0, %s36
    %s53 = sphi 0, %s37
    %s59 = sphi 0, %s61
    %s62 = sphi 0, %s59
    %s63 = sphi 0, %s62
    %s79 = sphi 0, %s63
    %s85 = sphi 0, %s87
    %s88 = sphi 0, %s85
    %s89 = sphi 0, %s88
    %s105 = sphi 0, %s89
    %s111 = sphi 0, %s113
    %s114 = sphi 0, %s111
    %s115 = sphi 0, %s114
    %s131 = sphi 0, %s115
    %s137 = sphi 0, %s139
    %s140 = sphi 0, %s137
    %s141 = sphi 0, %s140
    %s157 = sphi 0, %s141
    %s165 = sphi 0, %s167
    %s168 = sphi 0, %s165
    %s169 = sphi 0, %s168
    %s185 = sphi 0, %s169
  $region4: #{resnet_layer_forward.5} parent=0 // loop_header_branch
    %14 = sbr.rel (%p12) target = $region8
  $region5: #{resnet_layer_forward.5} parent=0 // loop_body
    %s16 = ssub.s32 %s11, 1
    %s17 = ssub.s32 %s11, 2
    %s24 = sadd.s32 1, %s19
    %p25 = scmp.ge.s32.totalorder %s24, 2
    %s26 = scalar_select %p25, 0, %s24
    %s27 = sadd.s32 1, %s18
    %s28 = scalar_select %p25, %s27, %s18
    %p29 = scmp.ge.s32.totalorder %s28, 1
    %s30 = scalar_select %p29, 0, %s28
    %s31 = ssub.s32 %s19, %s26
    %p32 = scmp.eq.s32.totalorder %s31, 0
    %s34 = sadd.s32 %s33, 1
    %s35 = scalar_select %p32, %s33, %s34
    %p38 = pneg %p32
    %p39 = scmp.eq.s32.totalorder %s11, 1
    %p40 = por %p38, %p39
    %p41 = scmp.ne.s32.totalorder %s33, %s36
    %p42 = scmp.eq.s32.totalorder %s11, 0
    %p43 = por %p41, %p42
    %p44 = scmp.ne.s32.totalorder %s33, %s36
    %p45 = scmp.eq.s32.totalorder %s16, 1
    %p46 = por %p44, %p45
    %p47 = scmp.ne.s32.totalorder %s36, %s37
    %p48 = scmp.eq.s32.totalorder %s16, 0
    %p49 = por %p47, %p48
    %p50 = scmp.ne.s32.totalorder %s36, %s37
    %p51 = scmp.eq.s32.totalorder %s17, 1
    %p52 = por %p50, %p51
    %p54 = scmp.ne.s32.totalorder %s37, %s53
    %p55 = scmp.eq.s32.totalorder %s17, 0
    %p56 = por %p54, %p55
    %s57 = ssub.s32 %s18, %s30
    %p58 = scmp.eq.s32.totalorder %s57, 0
    %s60 = sadd.s32 %s59, 1
    %s61 = scalar_select %p58, %s59, %s60
    %p64 = pneg %p58
    %p65 = scmp.eq.s32.totalorder %s11, 1
    %p66 = por %p64, %p65
    %p67 = scmp.ne.s32.totalorder %s59, %s62
    %p68 = scmp.eq.s32.totalorder %s11, 0
    %p69 = por %p67, %p68
    %p70 = scmp.ne.s32.totalorder %s59, %s62
    %p71 = scmp.eq.s32.totalorder %s16, 1
    %p72 = por %p70, %p71
    %p73 = scmp.ne.s32.totalorder %s62, %s63
    %p74 = scmp.eq.s32.totalorder %s16, 0
    %p75 = por %p73, %p74
    %p76 = scmp.ne.s32.totalorder %s62, %s63
    %p77 = scmp.eq.s32.totalorder %s17, 1
    %p78 = por %p76, %p77
    %p80 = scmp.ne.s32.totalorder %s63, %s79
    %p81 = scmp.eq.s32.totalorder %s17, 0
    %p82 = por %p80, %p81
    %s83 = ssub.s32 %s18, %s30
    %p84 = scmp.eq.s32.totalorder %s83, 0
    %s86 = sadd.s32 %s85, 1
    %s87 = scalar_select %p84, %s85, %s86
    %p90 = pneg %p84
    %p91 = scmp.eq.s32.totalorder %s11, 1
    %p92 = por %p90, %p91
    %p93 = scmp.ne.s32.totalorder %s85, %s88
    %p94 = scmp.eq.s32.totalorder %s11, 0
    %p95 = por %p93, %p94
    %p96 = scmp.ne.s32.totalorder %s85, %s88
    %p97 = scmp.eq.s32.totalorder %s16, 1
    %p98 = por %p96, %p97
    %p99 = scmp.ne.s32.totalorder %s88, %s89
    %p100 = scmp.eq.s32.totalorder %s16, 0
    %p101 = por %p99, %p100
    %p102 = scmp.ne.s32.totalorder %s88, %s89
    %p103 = scmp.eq.s32.totalorder %s17, 1
    %p104 = por %p102, %p103
    %p106 = scmp.ne.s32.totalorder %s89, %s105
    %p107 = scmp.eq.s32.totalorder %s17, 0
    %p108 = por %p106, %p107
    %s109 = ssub.s32 %s19, %s26
    %p110 = scmp.eq.s32.totalorder %s109, 0
    %s112 = sadd.s32 %s111, 1
    %s113 = scalar_select %p110, %s111, %s112
    %p116 = pneg %p110
    %p117 = scmp.eq.s32.totalorder %s11, 1
    %p118 = por %p116, %p117
    %p119 = scmp.ne.s32.totalorder %s111, %s114
    %p120 = scmp.eq.s32.totalorder %s11, 0
    %p121 = por %p119, %p120
    %p122 = scmp.ne.s32.totalorder %s111, %s114
    %p123 = scmp.eq.s32.totalorder %s16, 1
    %p124 = por %p122, %p123
    %p125 = scmp.ne.s32.totalorder %s114, %s115
    %p126 = scmp.eq.s32.totalorder %s16, 0
    %p127 = por %p125, %p126
    %p128 = scmp.ne.s32.totalorder %s114, %s115
    %p129 = scmp.eq.s32.totalorder %s17, 1
    %p130 = por %p128, %p129
    %p132 = scmp.ne.s32.totalorder %s115, %s131
    %p133 = scmp.eq.s32.totalorder %s17, 0
    %p134 = por %p132, %p133
    %s135 = ssub.s32 %s18, %s30
    %p136 = scmp.eq.s32.totalorder %s135, 0
    %s138 = sadd.s32 %s137, 1
    %s139 = scalar_select %p136, %s137, %s138
    %p142 = pneg %p136
    %p143 = scmp.eq.s32.totalorder %s11, 1
    %p144 = por %p142, %p143
    %p145 = scmp.ne.s32.totalorder %s137, %s140
    %p146 = scmp.eq.s32.totalorder %s11, 0
    %p147 = por %p145, %p146
    %p148 = scmp.ne.s32.totalorder %s137, %s140
    %p149 = scmp.eq.s32.totalorder %s16, 1
    %p150 = por %p148, %p149
    %p151 = scmp.ne.s32.totalorder %s140, %s141
    %p152 = scmp.eq.s32.totalorder %s16, 0
    %p153 = por %p151, %p152
    %p154 = scmp.ne.s32.totalorder %s140, %s141
    %p155 = scmp.eq.s32.totalorder %s17, 1
    %p156 = por %p154, %p155
    %p158 = scmp.ne.s32.totalorder %s141, %s157
    %p159 = scmp.eq.s32.totalorder %s17, 0
    %p160 = por %p158, %p159
    %s161 = ssub.s32 %s19, %s26
    %s162 = ssub.s32 %s18, %s30
    %s163 = sor.u32 %s161, %s162
    %p164 = scmp.eq.s32.totalorder %s163, 0
    %s166 = sadd.s32 %s165, 1
    %s167 = scalar_select %p164, %s165, %s166
    %p170 = pneg %p164
    %p171 = scmp.eq.s32.totalorder %s11, 1
    %p172 = por %p170, %p171
    %p173 = scmp.ne.s32.totalorder %s165, %s168
    %p174 = scmp.eq.s32.totalorder %s11, 0
    %p175 = por %p173, %p174
    %p176 = scmp.ne.s32.totalorder %s165, %s168
    %p177 = scmp.eq.s32.totalorder %s16, 1
    %p178 = por %p176, %p177
    %p179 = scmp.ne.s32.totalorder %s168, %s169
    %p180 = scmp.eq.s32.totalorder %s16, 0
    %p181 = por %p179, %p180
    %p182 = scmp.ne.s32.totalorder %s168, %s169
    %p183 = scmp.eq.s32.totalorder %s17, 1
    %p184 = por %p182, %p183
    %p186 = scmp.ne.s32.totalorder %s169, %s185
    %p187 = scmp.eq.s32.totalorder %s17, 0
    %p188 = por %p186, %p187
    %p189 = scmp.le.s32.totalorder 1, %s11
    %p190 = scmp.lt.s32.totalorder %s11, 3
    %p191 = pnand %p189, %p190
    %p192 = pneg %p191
    // Predicated region
    $region9: #{resnet_layer_forward.5} parent=5 // pred_check
      _
    $region10: #{resnet_layer_forward.5} parent=5 // pred_check_branch
      %194 = sbr.rel (%p191) target = $region12
    $region11: #{resnet_layer_forward.5} parent=5 // pred_region
      %s195 = ssub.s32 %s11, 1
      // Predicated region
      $region13: #{resnet_layer_forward.5} parent=11 // pred_check
        %p196 = pneg %p75
      $region14: #{resnet_layer_forward.5} parent=11 // pred_check_branch
        %198 = sbr.rel (%p196) target = $region16
      $region15: #{resnet_layer_forward.5} parent=11 // pred_region
        %p199 = scmp.lt.s32.totalorder %s20, 0
        %s200 = scalar_select %p199, %s20, 0
        %s201 = smul.addr %s200, 4
        %s202 = scalar_lea.vmem %s1, %s201
      $region16: #{resnet_layer_forward.5} parent=11 // pred_fallthru
        _
      // Predicated region
      $region17: #{resnet_layer_forward.5} parent=11 // pred_check
        %p203 = pneg %p101
      $region18: #{resnet_layer_forward.5} parent=11 // pred_check_branch
        %205 = sbr.rel (%p203) target = $region20
      $region19: #{resnet_layer_forward.5} parent=11 // pred_region
        %p206 = scmp.lt.s32.totalorder %s20, 0
        %s207 = scalar_select %p206, %s20, 0
        %s208 = scalar_lea.vmem %s2, %s207
      $region20: #{resnet_layer_forward.5} parent=11 // pred_fallthru
        _
      // Predicated region
      $region21: #{resnet_layer_forward.5} parent=11 // pred_check
        %p209 = pneg %p153
      $region22: #{resnet_layer_forward.5} parent=11 // pred_check_branch
        %211 = sbr.rel (%p209) target = $region24
      $region23: #{resnet_layer_forward.5} parent=11 // pred_region
        %p212 = scmp.lt.s32.totalorder %s20, 0
        %s213 = scalar_select %p212, %s20, 0
        %s214 = smul.addr %s213, 4
        %s215 = scalar_lea.vmem %s4, %s214
      $region24: #{resnet_layer_forward.5} parent=11 // pred_fallthru
        _
    $region12: #{resnet_layer_forward.5} parent=5 // pred_fallthru
      _
    %p216 = scmp.lt.s32.totalorder %s11, 2
    // Predicated region
    $region25: #{resnet_layer_forward.5} parent=5 // pred_check
      %p217 = pneg %p216
    $region26: #{resnet_layer_forward.5} parent=5 // pred_check_branch
      %219 = sbr.rel (%p217) target = $region28
    $region27: #{resnet_layer_forward.5} parent=5 // pred_region
      // Predicated region
      $region29: #{resnet_layer_forward.5} parent=27 // pred_check
        %p220 = pneg %p43
      $region30: #{resnet_layer_forward.5} parent=27 // pred_check_branch
        %222 = sbr.rel (%p220) target = $region32
      $region31: #{resnet_layer_forward.5} parent=27 // pred_region
        %p223 = scmp.lt.s32.totalorder %s19, 1
        %s224 = scalar_select %p223, %s19, 1
        %s225 = smul.addr %s224, 30
        %s226 = smul.addr %s225, 4
        %s227 = scalar_lea.vmem %s0, %s226
      $region32: #{resnet_layer_forward.5} parent=27 // pred_fallthru
        _
      // Predicated region
      $region33: #{resnet_layer_forward.5} parent=27 // pred_check
        %p228 = pneg %p121
      $region34: #{resnet_layer_forward.5} parent=27 // pred_check_branch
        %230 = sbr.rel (%p228) target = $region36
      $region35: #{resnet_layer_forward.5} parent=27 // pred_region
        %p231 = scmp.lt.s32.totalorder %s19, 1
        %s232 = scalar_select %p231, %s19, 1
        %s233 = smul.addr %s232, 8
        %s234 = smul.addr %s233, 4
        %s235 = scalar_lea.vmem %s3, %s234
      $region36: #{resnet_layer_forward.5} parent=27 // pred_fallthru
        _
    $region28: #{resnet_layer_forward.5} parent=5 // pred_fallthru
      _
    %p236 = scmp.le.s32.totalorder 1, %s11
    %p237 = scmp.lt.s32.totalorder %s11, 3
    %p238 = pnand %p236, %p237
    %p239 = pneg %p238
    // Predicated region
    $region37: #{resnet_layer_forward.5} parent=5 // pred_check
      _
    $region38: #{resnet_layer_forward.5} parent=5 // pred_check_branch
      %241 = sbr.rel (%p238) target = $region40
    $region39: #{resnet_layer_forward.5} parent=5 // pred_region
      %s242 = ssub.s32 %s11, 1
      %p243 = scmp.lt.s32.totalorder %s21, 1
      %s244 = scalar_select %p243, %s21, 1
      %s245 = smul.addr %s244, 30
      %s246 = smul.addr %s245, 4
      %s247 = scalar_lea.vmem %s0, %s246
      %p248 = pneg %p49
      %p249 = pneg %p46
      %p250 = scmp.lt.s32.totalorder %s20, 0
      %s251 = scalar_select %p250, %s20, 0
      %s252 = smul.addr %s251, 4
      %s253 = scalar_lea.vmem %s1, %s252
      %p254 = pneg %p75
      %p255 = pneg %p72
      %p256 = scmp.lt.s32.totalorder %s20, 0
      %s257 = scalar_select %p256, %s20, 0
      %s258 = scalar_lea.vmem %s2, %s257
      %p259 = pneg %p101
      %p260 = pneg %p98
      %p261 = scmp.lt.s32.totalorder %s21, 1
      %s262 = scalar_select %p261, %s21, 1
      %s263 = smul.addr %s262, 8
      %s264 = smul.addr %s263, 4
      %s265 = scalar_lea.vmem %s3, %s264
      %p266 = pneg %p127
      %p267 = pneg %p124
      %p268 = scmp.lt.s32.totalorder %s20, 0
      %s269 = scalar_select %p268, %s20, 0
      %s270 = smul.addr %s269, 4
      %s271 = scalar_lea.vmem %s4, %s270
      %p272 = pneg %p153
      %p273 = pneg %p150
      %p274 = pneg %p181
      %p275 = pneg %p178
      %p276 = scmp.lt.s32.totalorder %s21, 1
      %s277 = scalar_select %p276, %s21, 1
      %p278 = scmp.lt.s32.totalorder %s20, 0
      %s279 = scalar_select %p278, %s20, 0
      %s280 = smul.addr %s277, 8
      %s281 = sadd.s32 %s279, %s280
      %s282 = smul.addr %s281, 4
      %s283 = scalar_lea.vmem %s5, %s282
      %p284 = scmp.lt.s32.totalorder %s21, 1
      %s285 = scalar_select %p284, %s21, 1
      %s286 = smul.addr %s285, 30
      %s287 = smul.addr %s286, 4
      %s288 = scalar_lea.vmem %s0, %s287
      %p289 = scmp.lt.s32.totalorder %s20, 0
      %s290 = scalar_select %p289, %s20, 0
      %s291 = smul.addr %s290, 4
      %s292 = scalar_lea.vmem %s1, %s291
      %p293 = scmp.lt.s32.totalorder %s20, 0
      %s294 = scalar_select %p293, %s20, 0
      %s295 = scalar_lea.vmem %s2, %s294
      %p296 = scmp.lt.s32.totalorder %s21, 1
      %s297 = scalar_select %p296, %s21, 1
      %s298 = smul.addr %s297, 8
      %s299 = smul.addr %s298, 4
      %s300 = scalar_lea.vmem %s3, %s299
      %p301 = scmp.lt.s32.totalorder %s20, 0
      %s302 = scalar_select %p301, %s20, 0
      %s303 = smul.addr %s302, 4
      %s304 = scalar_lea.vmem %s4, %s303
      %p305 = scmp.lt.s32.totalorder %s21, 1
      %s306 = scalar_select %p305, %s21, 1
      %p307 = scmp.lt.s32.totalorder %s20, 0
      %s308 = scalar_select %p307, %s20, 0
      %s309 = smul.addr %s306, 8
      %s310 = sadd.s32 %s308, %s309
      %s311 = smul.addr %s310, 4
      %s312 = scalar_lea.vmem %s5, %s311
      %v313 = vld [vmem:[%s288] sm:$0xf]
      %v314 = vld [vmem:[%s288 + $0x4] sm:$0xf]
      %v315 = vld [vmem:[%s288 + $0x8] sm:$0xf]
      %v316 = vld [vmem:[%s288 + $0xc] sm:$0xf]
      %v317 = vld [vmem:[%s288 + $0x10] sm:$0xf]
      %v318 = vld [vmem:[%s288 + $0x14] sm:$0xf]
      %v319 = vld [vmem:[%s288 + $0x18] sm:$0xf]
      %v320 = vld [vmem:[%s288 + $0x1c] sm:$0xf]
      %v321 = vld [vmem:[%s292] sm:$0xf]
      %v322 = vld [vmem:[%s292 + $0x4] sm:$0xf]
      %v323 = vld [vmem:[%s292 + $0x8] sm:$0xf]
      %v324 = vld [vmem:[%s292 + $0xc] sm:$0xf]
      %v325 = vld [vmem:[%s292 + $0x10] sm:$0xf]
      %v326 = vld [vmem:[%s292 + $0x14] sm:$0xf]
      %v327 = vld [vmem:[%s292 + $0x18] sm:$0xf]
      %v328 = vld [vmem:[%s292 + $0x1c] sm:$0xf]
      %v329 = vld [vmem:[%s292 + $0x20] sm:$0xf]
      %v330 = vld [vmem:[%s292 + $0x24] sm:$0xf]
      %v331 = vld [vmem:[%s292 + $0x28] sm:$0xf]
      %v332 = vld [vmem:[%s292 + $0x2c] sm:$0xf]
      %v333 = vld [vmem:[%s292 + $0x30] sm:$0xf]
      %v334 = vld [vmem:[%s292 + $0x34] sm:$0xf]
      %v335 = vld [vmem:[%s292 + $0x38] sm:$0xf]
      %v336 = vld [vmem:[%s292 + $0x3c] sm:$0xf]
      %s337 = scalar_lea.vmem %s288, 40
      %v338 = vld [vmem:[%s337] sm:$0xf]
      %v339 = vld [vmem:[%s337 + $0x4] sm:$0xf]
      %v340 = vld [vmem:[%s337 + $0x8] sm:$0xf]
      %v341 = vld [vmem:[%s337 + $0xc] sm:$0xf]
      %v342 = vld [vmem:[%s337 + $0x10] sm:$0xf]
      %v343 = vld [vmem:[%s337 + $0x14] sm:$0xf]
      %v344 = vld [vmem:[%s337 + $0x18] sm:$0xf]
      %v345 = vld [vmem:[%s337 + $0x1c] sm:$0xf]
      %s346 = scalar_lea.vmem %s292, 64
      %v347 = vld [vmem:[%s346] sm:$0xf]
      %v348 = vld [vmem:[%s346 + $0x4] sm:$0xf]
      %v349 = vld [vmem:[%s346 + $0x8] sm:$0xf]
      %v350 = vld [vmem:[%s346 + $0xc] sm:$0xf]
      %v351 = vld [vmem:[%s346 + $0x10] sm:$0xf]
      %v352 = vld [vmem:[%s346 + $0x14] sm:$0xf]
      %v353 = vld [vmem:[%s346 + $0x18] sm:$0xf]
      %v354 = vld [vmem:[%s346 + $0x1c] sm:$0xf]
      %v355 = vld [vmem:[%s346 + $0x20] sm:$0xf]
      %v356 = vld [vmem:[%s346 + $0x24] sm:$0xf]
      %v357 = vld [vmem:[%s346 + $0x28] sm:$0xf]
      %v358 = vld [vmem:[%s346 + $0x2c] sm:$0xf]
      %v359 = vld [vmem:[%s346 + $0x30] sm:$0xf]
      %v360 = vld [vmem:[%s346 + $0x34] sm:$0xf]
      %v361 = vld [vmem:[%s346 + $0x38] sm:$0xf]
      %v362 = vld [vmem:[%s346 + $0x3c] sm:$0xf]
      %v371 = vunpack.c.l.b16 %v338
      %v372 = vunpack.c.l.b16 %v339
      %v373 = vunpack.c.l.b16 %v340
      %v374 = vunpack.c.l.b16 %v341
      %v375 = vunpack.c.l.b16 %v342
      %v376 = vunpack.c.l.b16 %v343
      %v377 = vunpack.c.l.b16 %v344
      %v378 = vunpack.c.l.b16 %v345
      %v379 = vpack.c.b16 %v372, %v371
      %v380 = vpack.c.b16 %v374, %v373
      %v381 = vpack.c.b16 %v376, %v375
      %v382 = vpack.c.b16 %v378, %v377
      %v403 = vunpack.c.l.b16 %v347
      %v404 = vunpack.c.l.b16 %v348
      %v405 = vunpack.c.l.b16 %v349
      %v406 = vunpack.c.l.b16 %v350
      %v407 = vunpack.c.l.b16 %v351
      %v408 = vunpack.c.l.b16 %v352
      %v409 = vunpack.c.l.b16 %v353
      %v410 = vunpack.c.l.b16 %v354
      %v411 = vunpack.c.l.b16 %v355
      %v412 = vunpack.c.l.b16 %v356
      %v413 = vunpack.c.l.b16 %v357
      %v414 = vunpack.c.l.b16 %v358
      %v415 = vunpack.c.l.b16 %v359
      %v416 = vunpack.c.l.b16 %v360
      %v417 = vunpack.c.l.b16 %v361
      %v418 = vunpack.c.l.b16 %v362
      %v419 = vpack.c.b16 %v404, %v403
      %v420 = vpack.c.b16 %v406, %v405
      %v421 = vpack.c.b16 %v408, %v407
      %v422 = vpack.c.b16 %v410, %v409
      %v423 = vpack.c.b16 %v412, %v411
      %v424 = vpack.c.b16 %v414, %v413
      %v425 = vpack.c.b16 %v416, %v415
      %v426 = vpack.c.b16 %v418, %v417
      %435 = vmatpush.bf16.msra.mxu0 %v426
      %436 = vmatpush.bf16.msra.mxu0 %v425
      %437 = vmatpush.bf16.msra.mxu0 %v424
      %438 = vmatpush.bf16.msra.mxu0 %v423
      %439 = vmatpush.bf16.msra.mxu0 %v422
      %440 = vmatpush.bf16.msra.mxu0 %v421
      %441 = vmatpush.bf16.msra.mxu0 %v420
      %442 = vmatpush.bf16.msra.mxu0 %v419
      %443 = vmatmul.bf16.gmra.mxu0 %v379
      %v444 = vpop.f32.mrf.mxu0
      %v445 = vadd.f32 0.0, %v444
      %v446 = vpop.f32.mrf.mxu0
      %v447 = vadd.f32 0.0, %v446
      %448 = vmatmul.bf16.gmra.mxu0 %v380
      %v449 = vpop.f32.mrf.mxu0
      %v450 = vadd.f32 0.0, %v449
      %v451 = vpop.f32.mrf.mxu0
      %v452 = vadd.f32 0.0, %v451
      %453 = vmatmul.bf16.gmra.mxu0 %v381
      %v454 = vpop.f32.mrf.mxu0
      %v455 = vadd.f32 0.0, %v454
      %v456 = vpop.f32.mrf.mxu0
      %v457 = vadd.f32 0.0, %v456
      %458 = vmatmul.bf16.gmra.mxu0 %v382
      %v459 = vpop.f32.mrf.mxu0
      %v460 = vadd.f32 0.0, %v459
      %v461 = vpop.f32.mrf.mxu0
      %v462 = vadd.f32 0.0, %v461
      %463 = vdwg.mxu0
      %v472 = vunpack.c.l.b16 %v313
      %v473 = vunpack.c.l.b16 %v314
      %v474 = vunpack.c.l.b16 %v315
      %v475 = vunpack.c.l.b16 %v316
      %v476 = vunpack.c.l.b16 %v317
      %v477 = vunpack.c.l.b16 %v318
      %v478 = vunpack.c.l.b16 %v319
      %v479 = vunpack.c.l.b16 %v320
      %v480 = vpack.c.b16 %v473, %v472
      %v481 = vpack.c.b16 %v475, %v474
      %v482 = vpack.c.b16 %v477, %v476
      %v483 = vpack.c.b16 %v479, %v478
      %v504 = vunpack.c.l.b16 %v321
      %v505 = vunpack.c.l.b16 %v322
      %v506 = vunpack.c.l.b16 %v323
      %v507 = vunpack.c.l.b16 %v324
      %v508 = vunpack.c.l.b16 %v325
      %v509 = vunpack.c.l.b16 %v326
      %v510 = vunpack.c.l.b16 %v327
      %v511 = vunpack.c.l.b16 %v328
      %v512 = vunpack.c.l.b16 %v329
      %v513 = vunpack.c.l.b16 %v330
      %v514 = vunpack.c.l.b16 %v331
      %v515 = vunpack.c.l.b16 %v332
      %v516 = vunpack.c.l.b16 %v333
      %v517 = vunpack.c.l.b16 %v334
      %v518 = vunpack.c.l.b16 %v335
      %v519 = vunpack.c.l.b16 %v336
      %v520 = vpack.c.b16 %v505, %v504
      %v521 = vpack.c.b16 %v507, %v506
      %v522 = vpack.c.b16 %v509, %v508
      %v523 = vpack.c.b16 %v511, %v510
      %v524 = vpack.c.b16 %v513, %v512
      %v525 = vpack.c.b16 %v515, %v514
      %v526 = vpack.c.b16 %v517, %v516
      %v527 = vpack.c.b16 %v519, %v518
      %536 = vmatpush.bf16.msra.mxu0 %v527
      %537 = vmatpush.bf16.msra.mxu0 %v526
      %538 = vmatpush.bf16.msra.mxu0 %v525
      %539 = vmatpush.bf16.msra.mxu0 %v524
      %540 = vmatpush.bf16.msra.mxu0 %v523
      %541 = vmatpush.bf16.msra.mxu0 %v522
      %542 = vmatpush.bf16.msra.mxu0 %v521
      %543 = vmatpush.bf16.msra.mxu0 %v520
      %544 = vmatmul.bf16.gmra.mxu0 %v480
      %v545 = vpop.f32.mrf.mxu0
      %v546 = vadd.f32 %v445, %v545
      %v547 = vpop.f32.mrf.mxu0
      %v548 = vadd.f32 %v447, %v547
      %549 = vmatmul.bf16.gmra.mxu0 %v481
      %v550 = vpop.f32.mrf.mxu0
      %v551 = vadd.f32 %v450, %v550
      %v552 = vpop.f32.mrf.mxu0
      %v553 = vadd.f32 %v452, %v552
      %554 = vmatmul.bf16.gmra.mxu0 %v482
      %v555 = vpop.f32.mrf.mxu0
      %v556 = vadd.f32 %v455, %v555
      %v557 = vpop.f32.mrf.mxu0
      %v558 = vadd.f32 %v457, %v557
      %559 = vmatmul.bf16.gmra.mxu0 %v483
      %v560 = vpop.f32.mrf.mxu0
      %v561 = vadd.f32 %v460, %v560
      %v562 = vpop.f32.mrf.mxu0
      %v563 = vadd.f32 %v462, %v562
      %564 = vdwg.mxu0
      %s565 = scalar_lea.vmem %s288, 80
      %v566 = vld [vmem:[%s565] sm:$0xf]
      %v567 = vld [vmem:[%s565 + $0x4] sm:$0xf]
      %v568 = vld [vmem:[%s565 + $0x8] sm:$0xf]
      %v569 = vld [vmem:[%s565 + $0xc] sm:$0xf]
      %v570 = vld [vmem:[%s565 + $0x10] sm:$0xf]
      %v571 = vld [vmem:[%s565 + $0x14] sm:$0xf]
      %v572 = vld [vmem:[%s565 + $0x18] sm:$0xf]
      %v573 = vld [vmem:[%s565 + $0x1c] sm:$0xf]
      %s574 = scalar_lea.vmem %s292, 128
      %v575 = vld [vmem:[%s574] sm:$0xf]
      %v576 = vld [vmem:[%s574 + $0x4] sm:$0xf]
      %v577 = vld [vmem:[%s574 + $0x8] sm:$0xf]
      %v578 = vld [vmem:[%s574 + $0xc] sm:$0xf]
      %v579 = vld [vmem:[%s574 + $0x10] sm:$0xf]
      %v580 = vld [vmem:[%s574 + $0x14] sm:$0xf]
      %v581 = vld [vmem:[%s574 + $0x18] sm:$0xf]
      %v582 = vld [vmem:[%s574 + $0x1c] sm:$0xf]
      %v583 = vld [vmem:[%s574 + $0x20] sm:$0xf]
      %v584 = vld [vmem:[%s574 + $0x24] sm:$0xf]
      %v585 = vld [vmem:[%s574 + $0x28] sm:$0xf]
      %v586 = vld [vmem:[%s574 + $0x2c] sm:$0xf]
      %v587 = vld [vmem:[%s574 + $0x30] sm:$0xf]
      %v588 = vld [vmem:[%s574 + $0x34] sm:$0xf]
      %v589 = vld [vmem:[%s574 + $0x38] sm:$0xf]
      %v590 = vld [vmem:[%s574 + $0x3c] sm:$0xf]
      %v599 = vunpack.c.l.b16 %v566
      %v600 = vunpack.c.l.b16 %v567
      %v601 = vunpack.c.l.b16 %v568
      %v602 = vunpack.c.l.b16 %v569
      %v603 = vunpack.c.l.b16 %v570
      %v604 = vunpack.c.l.b16 %v571
      %v605 = vunpack.c.l.b16 %v572
      %v606 = vunpack.c.l.b16 %v573
      %v607 = vpack.c.b16 %v600, %v599
      %v608 = vpack.c.b16 %v602, %v601
      %v609 = vpack.c.b16 %v604, %v603
      %v610 = vpack.c.b16 %v606, %v605
      %v631 = vunpack.c.l.b16 %v575
      %v632 = vunpack.c.l.b16 %v576
      %v633 = vunpack.c.l.b16 %v577
      %v634 = vunpack.c.l.b16 %v578
      %v635 = vunpack.c.l.b16 %v579
      %v636 = vunpack.c.l.b16 %v580
      %v637 = vunpack.c.l.b16 %v581
      %v638 = vunpack.c.l.b16 %v582
      %v639 = vunpack.c.l.b16 %v583
      %v640 = vunpack.c.l.b16 %v584
      %v641 = vunpack.c.l.b16 %v585
      %v642 = vunpack.c.l.b16 %v586
      %v643 = vunpack.c.l.b16 %v587
      %v644 = vunpack.c.l.b16 %v588
      %v645 = vunpack.c.l.b16 %v589
      %v646 = vunpack.c.l.b16 %v590
      %v647 = vpack.c.b16 %v632, %v631
      %v648 = vpack.c.b16 %v634, %v633
      %v649 = vpack.c.b16 %v636, %v635
      %v650 = vpack.c.b16 %v638, %v637
      %v651 = vpack.c.b16 %v640, %v639
      %v652 = vpack.c.b16 %v642, %v641
      %v653 = vpack.c.b16 %v644, %v643
      %v654 = vpack.c.b16 %v646, %v645
      %663 = vmatpush.bf16.msra.mxu0 %v654
      %664 = vmatpush.bf16.msra.mxu0 %v653
      %665 = vmatpush.bf16.msra.mxu0 %v652
      %666 = vmatpush.bf16.msra.mxu0 %v651
      %667 = vmatpush.bf16.msra.mxu0 %v650
      %668 = vmatpush.bf16.msra.mxu0 %v649
      %669 = vmatpush.bf16.msra.mxu0 %v648
      %670 = vmatpush.bf16.msra.mxu0 %v647
      %671 = vmatmul.bf16.gmra.mxu0 %v607
      %v672 = vpop.f32.mrf.mxu0
      %v673 = vadd.f32 0.0, %v672
      %v674 = vpop.f32.mrf.mxu0
      %v675 = vadd.f32 0.0, %v674
      %676 = vmatmul.bf16.gmra.mxu0 %v608
      %v677 = vpop.f32.mrf.mxu0
      %v678 = vadd.f32 0.0, %v677
      %v679 = vpop.f32.mrf.mxu0
      %v680 = vadd.f32 0.0, %v679
      %681 = vmatmul.bf16.gmra.mxu0 %v609
      %v682 = vpop.f32.mrf.mxu0
      %v683 = vadd.f32 0.0, %v682
      %v684 = vpop.f32.mrf.mxu0
      %v685 = vadd.f32 0.0, %v684
      %686 = vmatmul.bf16.gmra.mxu0 %v610
      %v687 = vpop.f32.mrf.mxu0
      %v688 = vadd.f32 0.0, %v687
      %v689 = vpop.f32.mrf.mxu0
      %v690 = vadd.f32 0.0, %v689
      %691 = vdwg.mxu0
      %v692 = vadd.f32 %v546, %v673
      %v693 = vadd.f32 %v548, %v675
      %v694 = vadd.f32 %v551, %v678
      %v695 = vadd.f32 %v553, %v680
      %v696 = vadd.f32 %v556, %v683
      %v697 = vadd.f32 %v558, %v685
      %v698 = vadd.f32 %v561, %v688
      %v699 = vadd.f32 %v563, %v690
      %s700 = scalar_lea.vmem %s288, 4
      %v701 = vld [vmem:[%s700] sm:$0xf]
      %v702 = vld [vmem:[%s700 + $0x4] sm:$0xf]
      %v703 = vld [vmem:[%s700 + $0x8] sm:$0xf]
      %v704 = vld [vmem:[%s700 + $0xc] sm:$0xf]
      %v705 = vld [vmem:[%s700 + $0x10] sm:$0xf]
      %v706 = vld [vmem:[%s700 + $0x14] sm:$0xf]
      %v707 = vld [vmem:[%s700 + $0x18] sm:$0xf]
      %v708 = vld [vmem:[%s700 + $0x1c] sm:$0xf]
      %s709 = scalar_lea.vmem %s292, 192
      %v710 = vld [vmem:[%s709] sm:$0xf]
      %v711 = vld [vmem:[%s709 + $0x4] sm:$0xf]
      %v712 = vld [vmem:[%s709 + $0x8] sm:$0xf]
      %v713 = vld [vmem:[%s709 + $0xc] sm:$0xf]
      %v714 = vld [vmem:[%s709 + $0x10] sm:$0xf]
      %v715 = vld [vmem:[%s709 + $0x14] sm:$0xf]
      %v716 = vld [vmem:[%s709 + $0x18] sm:$0xf]
      %v717 = vld [vmem:[%s709 + $0x1c] sm:$0xf]
      %v718 = vld [vmem:[%s709 + $0x20] sm:$0xf]
      %v719 = vld [vmem:[%s709 + $0x24] sm:$0xf]
      %v720 = vld [vmem:[%s709 + $0x28] sm:$0xf]
      %v721 = vld [vmem:[%s709 + $0x2c] sm:$0xf]
      %v722 = vld [vmem:[%s709 + $0x30] sm:$0xf]
      %v723 = vld [vmem:[%s709 + $0x34] sm:$0xf]
      %v724 = vld [vmem:[%s709 + $0x38] sm:$0xf]
      %v725 = vld [vmem:[%s709 + $0x3c] sm:$0xf]
      %v734 = vunpack.c.l.b16 %v701
      %v735 = vunpack.c.l.b16 %v702
      %v736 = vunpack.c.l.b16 %v703
      %v737 = vunpack.c.l.b16 %v704
      %v738 = vunpack.c.l.b16 %v705
      %v739 = vunpack.c.l.b16 %v706
      %v740 = vunpack.c.l.b16 %v707
      %v741 = vunpack.c.l.b16 %v708
      %v742 = vpack.c.b16 %v735, %v734
      %v743 = vpack.c.b16 %v737, %v736
      %v744 = vpack.c.b16 %v739, %v738
      %v745 = vpack.c.b16 %v741, %v740
      %v766 = vunpack.c.l.b16 %v710
      %v767 = vunpack.c.l.b16 %v711
      %v768 = vunpack.c.l.b16 %v712
      %v769 = vunpack.c.l.b16 %v713
      %v770 = vunpack.c.l.b16 %v714
      %v771 = vunpack.c.l.b16 %v715
      %v772 = vunpack.c.l.b16 %v716
      %v773 = vunpack.c.l.b16 %v717
      %v774 = vunpack.c.l.b16 %v718
      %v775 = vunpack.c.l.b16 %v719
      %v776 = vunpack.c.l.b16 %v720
      %v777 = vunpack.c.l.b16 %v721
      %v778 = vunpack.c.l.b16 %v722
      %v779 = vunpack.c.l.b16 %v723
      %v780 = vunpack.c.l.b16 %v724
      %v781 = vunpack.c.l.b16 %v725
      %v782 = vpack.c.b16 %v767, %v766
      %v783 = vpack.c.b16 %v769, %v768
      %v784 = vpack.c.b16 %v771, %v770
      %v785 = vpack.c.b16 %v773, %v772
      %v786 = vpack.c.b16 %v775, %v774
      %v787 = vpack.c.b16 %v777, %v776
      %v788 = vpack.c.b16 %v779, %v778
      %v789 = vpack.c.b16 %v781, %v780
      %798 = vmatpush.bf16.msra.mxu0 %v789
      %799 = vmatpush.bf16.msra.mxu0 %v788
      %800 = vmatpush.bf16.msra.mxu0 %v787
      %801 = vmatpush.bf16.msra.mxu0 %v786
      %802 = vmatpush.bf16.msra.mxu0 %v785
      %803 = vmatpush.bf16.msra.mxu0 %v784
      %804 = vmatpush.bf16.msra.mxu0 %v783
      %805 = vmatpush.bf16.msra.mxu0 %v782
      %806 = vmatmul.bf16.gmra.mxu0 %v742
      %v807 = vpop.f32.mrf.mxu0
      %v808 = vadd.f32 0.0, %v807
      %v809 = vpop.f32.mrf.mxu0
      %v810 = vadd.f32 0.0, %v809
      %811 = vmatmul.bf16.gmra.mxu0 %v743
      %v812 = vpop.f32.mrf.mxu0
      %v813 = vadd.f32 0.0, %v812
      %v814 = vpop.f32.mrf.mxu0
      %v815 = vadd.f32 0.0, %v814
      %816 = vmatmul.bf16.gmra.mxu0 %v744
      %v817 = vpop.f32.mrf.mxu0
      %v818 = vadd.f32 0.0, %v817
      %v819 = vpop.f32.mrf.mxu0
      %v820 = vadd.f32 0.0, %v819
      %821 = vmatmul.bf16.gmra.mxu0 %v745
      %v822 = vpop.f32.mrf.mxu0
      %v823 = vadd.f32 0.0, %v822
      %v824 = vpop.f32.mrf.mxu0
      %v825 = vadd.f32 0.0, %v824
      %826 = vdwg.mxu0
      %v827 = vadd.f32 %v692, %v808
      %v828 = vadd.f32 %v693, %v810
      %v829 = vadd.f32 %v694, %v813
      %v830 = vadd.f32 %v695, %v815
      %v831 = vadd.f32 %v696, %v818
      %v832 = vadd.f32 %v697, %v820
      %v833 = vadd.f32 %v698, %v823
      %v834 = vadd.f32 %v699, %v825
      %s835 = scalar_lea.vmem %s288, 44
      %v836 = vld [vmem:[%s835] sm:$0xf]
      %v837 = vld [vmem:[%s835 + $0x4] sm:$0xf]
      %v838 = vld [vmem:[%s835 + $0x8] sm:$0xf]
      %v839 = vld [vmem:[%s835 + $0xc] sm:$0xf]
      %v840 = vld [vmem:[%s835 + $0x10] sm:$0xf]
      %v841 = vld [vmem:[%s835 + $0x14] sm:$0xf]
      %v842 = vld [vmem:[%s835 + $0x18] sm:$0xf]
      %v843 = vld [vmem:[%s835 + $0x1c] sm:$0xf]
      %s844 = scalar_lea.vmem %s292, 256
      %v845 = vld [vmem:[%s844] sm:$0xf]
      %v846 = vld [vmem:[%s844 + $0x4] sm:$0xf]
      %v847 = vld [vmem:[%s844 + $0x8] sm:$0xf]
      %v848 = vld [vmem:[%s844 + $0xc] sm:$0xf]
      %v849 = vld [vmem:[%s844 + $0x10] sm:$0xf]
      %v850 = vld [vmem:[%s844 + $0x14] sm:$0xf]
      %v851 = vld [vmem:[%s844 + $0x18] sm:$0xf]
      %v852 = vld [vmem:[%s844 + $0x1c] sm:$0xf]
      %v853 = vld [vmem:[%s844 + $0x20] sm:$0xf]
      %v854 = vld [vmem:[%s844 + $0x24] sm:$0xf]
      %v855 = vld [vmem:[%s844 + $0x28] sm:$0xf]
      %v856 = vld [vmem:[%s844 + $0x2c] sm:$0xf]
      %v857 = vld [vmem:[%s844 + $0x30] sm:$0xf]
      %v858 = vld [vmem:[%s844 + $0x34] sm:$0xf]
      %v859 = vld [vmem:[%s844 + $0x38] sm:$0xf]
      %v860 = vld [vmem:[%s844 + $0x3c] sm:$0xf]
      %v869 = vunpack.c.l.b16 %v836
      %v870 = vunpack.c.l.b16 %v837
      %v871 = vunpack.c.l.b16 %v838
      %v872 = vunpack.c.l.b16 %v839
      %v873 = vunpack.c.l.b16 %v840
      %v874 = vunpack.c.l.b16 %v841
      %v875 = vunpack.c.l.b16 %v842
      %v876 = vunpack.c.l.b16 %v843
      %v877 = vpack.c.b16 %v870, %v869
      %v878 = vpack.c.b16 %v872, %v871
      %v879 = vpack.c.b16 %v874, %v873
      %v880 = vpack.c.b16 %v876, %v875
      %v901 = vunpack.c.l.b16 %v845
      %v902 = vunpack.c.l.b16 %v846
      %v903 = vunpack.c.l.b16 %v847
      %v904 = vunpack.c.l.b16 %v848
      %v905 = vunpack.c.l.b16 %v849
      %v906 = vunpack.c.l.b16 %v850
      %v907 = vunpack.c.l.b16 %v851
      %v908 = vunpack.c.l.b16 %v852
      %v909 = vunpack.c.l.b16 %v853
      %v910 = vunpack.c.l.b16 %v854
      %v911 = vunpack.c.l.b16 %v855
      %v912 = vunpack.c.l.b16 %v856
      %v913 = vunpack.c.l.b16 %v857
      %v914 = vunpack.c.l.b16 %v858
      %v915 = vunpack.c.l.b16 %v859
      %v916 = vunpack.c.l.b16 %v860
      %v917 = vpack.c.b16 %v902, %v901
      %v918 = vpack.c.b16 %v904, %v903
      %v919 = vpack.c.b16 %v906, %v905
      %v920 = vpack.c.b16 %v908, %v907
      %v921 = vpack.c.b16 %v910, %v909
      %v922 = vpack.c.b16 %v912, %v911
      %v923 = vpack.c.b16 %v914, %v913
      %v924 = vpack.c.b16 %v916, %v915
      %933 = vmatpush.bf16.msra.mxu0 %v924
      %934 = vmatpush.bf16.msra.mxu0 %v923
      %935 = vmatpush.bf16.msra.mxu0 %v922
      %936 = vmatpush.bf16.msra.mxu0 %v921
      %937 = vmatpush.bf16.msra.mxu0 %v920
      %938 = vmatpush.bf16.msra.mxu0 %v919
      %939 = vmatpush.bf16.msra.mxu0 %v918
      %940 = vmatpush.bf16.msra.mxu0 %v917
      %941 = vmatmul.bf16.gmra.mxu0 %v877
      %v942 = vpop.f32.mrf.mxu0
      %v943 = vadd.f32 0.0, %v942
      %v944 = vpop.f32.mrf.mxu0
      %v945 = vadd.f32 0.0, %v944
      %946 = vmatmul.bf16.gmra.mxu0 %v878
      %v947 = vpop.f32.mrf.mxu0
      %v948 = vadd.f32 0.0, %v947
      %v949 = vpop.f32.mrf.mxu0
      %v950 = vadd.f32 0.0, %v949
      %951 = vmatmul.bf16.gmra.mxu0 %v879
      %v952 = vpop.f32.mrf.mxu0
      %v953 = vadd.f32 0.0, %v952
      %v954 = vpop.f32.mrf.mxu0
      %v955 = vadd.f32 0.0, %v954
      %956 = vmatmul.bf16.gmra.mxu0 %v880
      %v957 = vpop.f32.mrf.mxu0
      %v958 = vadd.f32 0.0, %v957
      %v959 = vpop.f32.mrf.mxu0
      %v960 = vadd.f32 0.0, %v959
      %961 = vdwg.mxu0
      %v962 = vadd.f32 %v827, %v943
      %v963 = vadd.f32 %v828, %v945
      %v964 = vadd.f32 %v829, %v948
      %v965 = vadd.f32 %v830, %v950
      %v966 = vadd.f32 %v831, %v953
      %v967 = vadd.f32 %v832, %v955
      %v968 = vadd.f32 %v833, %v958
      %v969 = vadd.f32 %v834, %v960
      %s970 = scalar_lea.vmem %s288, 84
      %v971 = vld [vmem:[%s970] sm:$0xf]
      %v972 = vld [vmem:[%s970 + $0x4] sm:$0xf]
      %v973 = vld [vmem:[%s970 + $0x8] sm:$0xf]
      %v974 = vld [vmem:[%s970 + $0xc] sm:$0xf]
      %v975 = vld [vmem:[%s970 + $0x10] sm:$0xf]
      %v976 = vld [vmem:[%s970 + $0x14] sm:$0xf]
      %v977 = vld [vmem:[%s970 + $0x18] sm:$0xf]
      %v978 = vld [vmem:[%s970 + $0x1c] sm:$0xf]
      %s979 = scalar_lea.vmem %s292, 320
      %v980 = vld [vmem:[%s979] sm:$0xf]
      %v981 = vld [vmem:[%s979 + $0x4] sm:$0xf]
      %v982 = vld [vmem:[%s979 + $0x8] sm:$0xf]
      %v983 = vld [vmem:[%s979 + $0xc] sm:$0xf]
      %v984 = vld [vmem:[%s979 + $0x10] sm:$0xf]
      %v985 = vld [vmem:[%s979 + $0x14] sm:$0xf]
      %v986 = vld [vmem:[%s979 + $0x18] sm:$0xf]
      %v987 = vld [vmem:[%s979 + $0x1c] sm:$0xf]
      %v988 = vld [vmem:[%s979 + $0x20] sm:$0xf]
      %v989 = vld [vmem:[%s979 + $0x24] sm:$0xf]
      %v990 = vld [vmem:[%s979 + $0x28] sm:$0xf]
      %v991 = vld [vmem:[%s979 + $0x2c] sm:$0xf]
      %v992 = vld [vmem:[%s979 + $0x30] sm:$0xf]
      %v993 = vld [vmem:[%s979 + $0x34] sm:$0xf]
      %v994 = vld [vmem:[%s979 + $0x38] sm:$0xf]
      %v995 = vld [vmem:[%s979 + $0x3c] sm:$0xf]
      %v1004 = vunpack.c.l.b16 %v971
      %v1005 = vunpack.c.l.b16 %v972
      %v1006 = vunpack.c.l.b16 %v973
      %v1007 = vunpack.c.l.b16 %v974
      %v1008 = vunpack.c.l.b16 %v975
      %v1009 = vunpack.c.l.b16 %v976
      %v1010 = vunpack.c.l.b16 %v977
      %v1011 = vunpack.c.l.b16 %v978
      %v1012 = vpack.c.b16 %v1005, %v1004
      %v1013 = vpack.c.b16 %v1007, %v1006
      %v1014 = vpack.c.b16 %v1009, %v1008
      %v1015 = vpack.c.b16 %v1011, %v1010
      %v1036 = vunpack.c.l.b16 %v980
      %v1037 = vunpack.c.l.b16 %v981
      %v1038 = vunpack.c.l.b16 %v982
      %v1039 = vunpack.c.l.b16 %v983
      %v1040 = vunpack.c.l.b16 %v984
      %v1041 = vunpack.c.l.b16 %v985
      %v1042 = vunpack.c.l.b16 %v986
      %v1043 = vunpack.c.l.b16 %v987
      %v1044 = vunpack.c.l.b16 %v988
      %v1045 = vunpack.c.l.b16 %v989
      %v1046 = vunpack.c.l.b16 %v990
      %v1047 = vunpack.c.l.b16 %v991
      %v1048 = vunpack.c.l.b16 %v992
      %v1049 = vunpack.c.l.b16 %v993
      %v1050 = vunpack.c.l.b16 %v994
      %v1051 = vunpack.c.l.b16 %v995
      %v1052 = vpack.c.b16 %v1037, %v1036
      %v1053 = vpack.c.b16 %v1039, %v1038
      %v1054 = vpack.c.b16 %v1041, %v1040
      %v1055 = vpack.c.b16 %v1043, %v1042
      %v1056 = vpack.c.b16 %v1045, %v1044
      %v1057 = vpack.c.b16 %v1047, %v1046
      %v1058 = vpack.c.b16 %v1049, %v1048
      %v1059 = vpack.c.b16 %v1051, %v1050
      %1068 = vmatpush.bf16.msra.mxu0 %v1059
      %1069 = vmatpush.bf16.msra.mxu0 %v1058
      %1070 = vmatpush.bf16.msra.mxu0 %v1057
      %1071 = vmatpush.bf16.msra.mxu0 %v1056
      %1072 = vmatpush.bf16.msra.mxu0 %v1055
      %1073 = vmatpush.bf16.msra.mxu0 %v1054
      %1074 = vmatpush.bf16.msra.mxu0 %v1053
      %1075 = vmatpush.bf16.msra.mxu0 %v1052
      %1076 = vmatmul.bf16.gmra.mxu0 %v1012
      %v1077 = vpop.f32.mrf.mxu0
      %v1078 = vadd.f32 0.0, %v1077
      %v1079 = vpop.f32.mrf.mxu0
      %v1080 = vadd.f32 0.0, %v1079
      %1081 = vmatmul.bf16.gmra.mxu0 %v1013
      %v1082 = vpop.f32.mrf.mxu0
      %v1083 = vadd.f32 0.0, %v1082
      %v1084 = vpop.f32.mrf.mxu0
      %v1085 = vadd.f32 0.0, %v1084
      %1086 = vmatmul.bf16.gmra.mxu0 %v1014
      %v1087 = vpop.f32.mrf.mxu0
      %v1088 = vadd.f32 0.0, %v1087
      %v1089 = vpop.f32.mrf.mxu0
      %v1090 = vadd.f32 0.0, %v1089
      %1091 = vmatmul.bf16.gmra.mxu0 %v1015
      %v1092 = vpop.f32.mrf.mxu0
      %v1093 = vadd.f32 0.0, %v1092
      %v1094 = vpop.f32.mrf.mxu0
      %v1095 = vadd.f32 0.0, %v1094
      %1096 = vdwg.mxu0
      %v1097 = vadd.f32 %v962, %v1078
      %v1098 = vadd.f32 %v963, %v1080
      %v1099 = vadd.f32 %v964, %v1083
      %v1100 = vadd.f32 %v965, %v1085
      %v1101 = vadd.f32 %v966, %v1088
      %v1102 = vadd.f32 %v967, %v1090
      %v1103 = vadd.f32 %v968, %v1093
      %v1104 = vadd.f32 %v969, %v1095
      %s1105 = scalar_lea.vmem %s288, 8
      %v1106 = vld [vmem:[%s1105] sm:$0xf]
      %v1107 = vld [vmem:[%s1105 + $0x4] sm:$0xf]
      %v1108 = vld [vmem:[%s1105 + $0x8] sm:$0xf]
      %v1109 = vld [vmem:[%s1105 + $0xc] sm:$0xf]
      %v1110 = vld [vmem:[%s1105 + $0x10] sm:$0xf]
      %v1111 = vld [vmem:[%s1105 + $0x14] sm:$0xf]
      %v1112 = vld [vmem:[%s1105 + $0x18] sm:$0xf]
      %v1113 = vld [vmem:[%s1105 + $0x1c] sm:$0xf]
      %s1114 = scalar_lea.vmem %s292, 384
      %v1115 = vld [vmem:[%s1114] sm:$0xf]
      %v1116 = vld [vmem:[%s1114 + $0x4] sm:$0xf]
      %v1117 = vld [vmem:[%s1114 + $0x8] sm:$0xf]
      %v1118 = vld [vmem:[%s1114 + $0xc] sm:$0xf]
      %v1119 = vld [vmem:[%s1114 + $0x10] sm:$0xf]
      %v1120 = vld [vmem:[%s1114 + $0x14] sm:$0xf]
      %v1121 = vld [vmem:[%s1114 + $0x18] sm:$0xf]
      %v1122 = vld [vmem:[%s1114 + $0x1c] sm:$0xf]
      %v1123 = vld [vmem:[%s1114 + $0x20] sm:$0xf]
      %v1124 = vld [vmem:[%s1114 + $0x24] sm:$0xf]
      %v1125 = vld [vmem:[%s1114 + $0x28] sm:$0xf]
      %v1126 = vld [vmem:[%s1114 + $0x2c] sm:$0xf]
      %v1127 = vld [vmem:[%s1114 + $0x30] sm:$0xf]
      %v1128 = vld [vmem:[%s1114 + $0x34] sm:$0xf]
      %v1129 = vld [vmem:[%s1114 + $0x38] sm:$0xf]
      %v1130 = vld [vmem:[%s1114 + $0x3c] sm:$0xf]
      %v1139 = vunpack.c.l.b16 %v1106
      %v1140 = vunpack.c.l.b16 %v1107
      %v1141 = vunpack.c.l.b16 %v1108
      %v1142 = vunpack.c.l.b16 %v1109
      %v1143 = vunpack.c.l.b16 %v1110
      %v1144 = vunpack.c.l.b16 %v1111
      %v1145 = vunpack.c.l.b16 %v1112
      %v1146 = vunpack.c.l.b16 %v1113
      %v1147 = vpack.c.b16 %v1140, %v1139
      %v1148 = vpack.c.b16 %v1142, %v1141
      %v1149 = vpack.c.b16 %v1144, %v1143
      %v1150 = vpack.c.b16 %v1146, %v1145
      %v1171 = vunpack.c.l.b16 %v1115
      %v1172 = vunpack.c.l.b16 %v1116
      %v1173 = vunpack.c.l.b16 %v1117
      %v1174 = vunpack.c.l.b16 %v1118
      %v1175 = vunpack.c.l.b16 %v1119
      %v1176 = vunpack.c.l.b16 %v1120
      %v1177 = vunpack.c.l.b16 %v1121
      %v1178 = vunpack.c.l.b16 %v1122
      %v1179 = vunpack.c.l.b16 %v1123
      %v1180 = vunpack.c.l.b16 %v1124
      %v1181 = vunpack.c.l.b16 %v1125
      %v1182 = vunpack.c.l.b16 %v1126
      %v1183 = vunpack.c.l.b16 %v1127
      %v1184 = vunpack.c.l.b16 %v1128
      %v1185 = vunpack.c.l.b16 %v1129
      %v1186 = vunpack.c.l.b16 %v1130
      %v1187 = vpack.c.b16 %v1172, %v1171
      %v1188 = vpack.c.b16 %v1174, %v1173
      %v1189 = vpack.c.b16 %v1176, %v1175
      %v1190 = vpack.c.b16 %v1178, %v1177
      %v1191 = vpack.c.b16 %v1180, %v1179
      %v1192 = vpack.c.b16 %v1182, %v1181
      %v1193 = vpack.c.b16 %v1184, %v1183
      %v1194 = vpack.c.b16 %v1186, %v1185
      %1203 = vmatpush.bf16.msra.mxu0 %v1194
      %1204 = vmatpush.bf16.msra.mxu0 %v1193
      %1205 = vmatpush.bf16.msra.mxu0 %v1192
      %1206 = vmatpush.bf16.msra.mxu0 %v1191
      %1207 = vmatpush.bf16.msra.mxu0 %v1190
      %1208 = vmatpush.bf16.msra.mxu0 %v1189
      %1209 = vmatpush.bf16.msra.mxu0 %v1188
      %1210 = vmatpush.bf16.msra.mxu0 %v1187
      %1211 = vmatmul.bf16.gmra.mxu0 %v1147
      %v1212 = vpop.f32.mrf.mxu0
      %v1213 = vadd.f32 0.0, %v1212
      %v1214 = vpop.f32.mrf.mxu0
      %v1215 = vadd.f32 0.0, %v1214
      %1216 = vmatmul.bf16.gmra.mxu0 %v1148
      %v1217 = vpop.f32.mrf.mxu0
      %v1218 = vadd.f32 0.0, %v1217
      %v1219 = vpop.f32.mrf.mxu0
      %v1220 = vadd.f32 0.0, %v1219
      %1221 = vmatmul.bf16.gmra.mxu0 %v1149
      %v1222 = vpop.f32.mrf.mxu0
      %v1223 = vadd.f32 0.0, %v1222
      %v1224 = vpop.f32.mrf.mxu0
      %v1225 = vadd.f32 0.0, %v1224
      %1226 = vmatmul.bf16.gmra.mxu0 %v1150
      %v1227 = vpop.f32.mrf.mxu0
      %v1228 = vadd.f32 0.0, %v1227
      %v1229 = vpop.f32.mrf.mxu0
      %v1230 = vadd.f32 0.0, %v1229
      %1231 = vdwg.mxu0
      %v1232 = vadd.f32 %v1097, %v1213
      %v1233 = vadd.f32 %v1098, %v1215
      %v1234 = vadd.f32 %v1099, %v1218
      %v1235 = vadd.f32 %v1100, %v1220
      %v1236 = vadd.f32 %v1101, %v1223
      %v1237 = vadd.f32 %v1102, %v1225
      %v1238 = vadd.f32 %v1103, %v1228
      %v1239 = vadd.f32 %v1104, %v1230
      %s1240 = scalar_lea.vmem %s288, 48
      %v1241 = vld [vmem:[%s1240] sm:$0xf]
      %v1242 = vld [vmem:[%s1240 + $0x4] sm:$0xf]
      %v1243 = vld [vmem:[%s1240 + $0x8] sm:$0xf]
      %v1244 = vld [vmem:[%s1240 + $0xc] sm:$0xf]
      %v1245 = vld [vmem:[%s1240 + $0x10] sm:$0xf]
      %v1246 = vld [vmem:[%s1240 + $0x14] sm:$0xf]
      %v1247 = vld [vmem:[%s1240 + $0x18] sm:$0xf]
      %v1248 = vld [vmem:[%s1240 + $0x1c] sm:$0xf]
      %s1249 = scalar_lea.vmem %s292, 448
      %v1250 = vld [vmem:[%s1249] sm:$0xf]
      %v1251 = vld [vmem:[%s1249 + $0x4] sm:$0xf]
      %v1252 = vld [vmem:[%s1249 + $0x8] sm:$0xf]
      %v1253 = vld [vmem:[%s1249 + $0xc] sm:$0xf]
      %v1254 = vld [vmem:[%s1249 + $0x10] sm:$0xf]
      %v1255 = vld [vmem:[%s1249 + $0x14] sm:$0xf]
      %v1256 = vld [vmem:[%s1249 + $0x18] sm:$0xf]
      %v1257 = vld [vmem:[%s1249 + $0x1c] sm:$0xf]
      %v1258 = vld [vmem:[%s1249 + $0x20] sm:$0xf]
      %v1259 = vld [vmem:[%s1249 + $0x24] sm:$0xf]
      %v1260 = vld [vmem:[%s1249 + $0x28] sm:$0xf]
      %v1261 = vld [vmem:[%s1249 + $0x2c] sm:$0xf]
      %v1262 = vld [vmem:[%s1249 + $0x30] sm:$0xf]
      %v1263 = vld [vmem:[%s1249 + $0x34] sm:$0xf]
      %v1264 = vld [vmem:[%s1249 + $0x38] sm:$0xf]
      %v1265 = vld [vmem:[%s1249 + $0x3c] sm:$0xf]
      %v1274 = vunpack.c.l.b16 %v1241
      %v1275 = vunpack.c.l.b16 %v1242
      %v1276 = vunpack.c.l.b16 %v1243
      %v1277 = vunpack.c.l.b16 %v1244
      %v1278 = vunpack.c.l.b16 %v1245
      %v1279 = vunpack.c.l.b16 %v1246
      %v1280 = vunpack.c.l.b16 %v1247
      %v1281 = vunpack.c.l.b16 %v1248
      %v1282 = vpack.c.b16 %v1275, %v1274
      %v1283 = vpack.c.b16 %v1277, %v1276
      %v1284 = vpack.c.b16 %v1279, %v1278
      %v1285 = vpack.c.b16 %v1281, %v1280
      %v1306 = vunpack.c.l.b16 %v1250
      %v1307 = vunpack.c.l.b16 %v1251
      %v1308 = vunpack.c.l.b16 %v1252
      %v1309 = vunpack.c.l.b16 %v1253
      %v1310 = vunpack.c.l.b16 %v1254
      %v1311 = vunpack.c.l.b16 %v1255
      %v1312 = vunpack.c.l.b16 %v1256
      %v1313 = vunpack.c.l.b16 %v1257
      %v1314 = vunpack.c.l.b16 %v1258
      %v1315 = vunpack.c.l.b16 %v1259
      %v1316 = vunpack.c.l.b16 %v1260
      %v1317 = vunpack.c.l.b16 %v1261
      %v1318 = vunpack.c.l.b16 %v1262
      %v1319 = vunpack.c.l.b16 %v1263
      %v1320 = vunpack.c.l.b16 %v1264
      %v1321 = vunpack.c.l.b16 %v1265
      %v1322 = vpack.c.b16 %v1307, %v1306
      %v1323 = vpack.c.b16 %v1309, %v1308
      %v1324 = vpack.c.b16 %v1311, %v1310
      %v1325 = vpack.c.b16 %v1313, %v1312
      %v1326 = vpack.c.b16 %v1315, %v1314
      %v1327 = vpack.c.b16 %v1317, %v1316
      %v1328 = vpack.c.b16 %v1319, %v1318
      %v1329 = vpack.c.b16 %v1321, %v1320
      %1338 = vmatpush.bf16.msra.mxu0 %v1329
      %1339 = vmatpush.bf16.msra.mxu0 %v1328
      %1340 = vmatpush.bf16.msra.mxu0 %v1327
      %1341 = vmatpush.bf16.msra.mxu0 %v1326
      %1342 = vmatpush.bf16.msra.mxu0 %v1325
      %1343 = vmatpush.bf16.msra.mxu0 %v1324
      %1344 = vmatpush.bf16.msra.mxu0 %v1323
      %1345 = vmatpush.bf16.msra.mxu0 %v1322
      %1346 = vmatmul.bf16.gmra.mxu0 %v1282
      %v1347 = vpop.f32.mrf.mxu0
      %v1348 = vadd.f32 0.0, %v1347
      %v1349 = vpop.f32.mrf.mxu0
      %v1350 = vadd.f32 0.0, %v1349
      %1351 = vmatmul.bf16.gmra.mxu0 %v1283
      %v1352 = vpop.f32.mrf.mxu0
      %v1353 = vadd.f32 0.0, %v1352
      %v1354 = vpop.f32.mrf.mxu0
      %v1355 = vadd.f32 0.0, %v1354
      %1356 = vmatmul.bf16.gmra.mxu0 %v1284
      %v1357 = vpop.f32.mrf.mxu0
      %v1358 = vadd.f32 0.0, %v1357
      %v1359 = vpop.f32.mrf.mxu0
      %v1360 = vadd.f32 0.0, %v1359
      %1361 = vmatmul.bf16.gmra.mxu0 %v1285
      %v1362 = vpop.f32.mrf.mxu0
      %v1363 = vadd.f32 0.0, %v1362
      %v1364 = vpop.f32.mrf.mxu0
      %v1365 = vadd.f32 0.0, %v1364
      %1366 = vdwg.mxu0
      %v1367 = vadd.f32 %v1232, %v1348
      %v1368 = vadd.f32 %v1233, %v1350
      %v1369 = vadd.f32 %v1234, %v1353
      %v1370 = vadd.f32 %v1235, %v1355
      %v1371 = vadd.f32 %v1236, %v1358
      %v1372 = vadd.f32 %v1237, %v1360
      %v1373 = vadd.f32 %v1238, %v1363
      %v1374 = vadd.f32 %v1239, %v1365
      %s1375 = scalar_lea.vmem %s288, 88
      %v1376 = vld [vmem:[%s1375] sm:$0xf]
      %v1377 = vld [vmem:[%s1375 + $0x4] sm:$0xf]
      %v1378 = vld [vmem:[%s1375 + $0x8] sm:$0xf]
      %v1379 = vld [vmem:[%s1375 + $0xc] sm:$0xf]
      %v1380 = vld [vmem:[%s1375 + $0x10] sm:$0xf]
      %v1381 = vld [vmem:[%s1375 + $0x14] sm:$0xf]
      %v1382 = vld [vmem:[%s1375 + $0x18] sm:$0xf]
      %v1383 = vld [vmem:[%s1375 + $0x1c] sm:$0xf]
      %s1384 = scalar_lea.vmem %s292, 512
      %v1385 = vld [vmem:[%s1384] sm:$0xf]
      %v1386 = vld [vmem:[%s1384 + $0x4] sm:$0xf]
      %v1387 = vld [vmem:[%s1384 + $0x8] sm:$0xf]
      %v1388 = vld [vmem:[%s1384 + $0xc] sm:$0xf]
      %v1389 = vld [vmem:[%s1384 + $0x10] sm:$0xf]
      %v1390 = vld [vmem:[%s1384 + $0x14] sm:$0xf]
      %v1391 = vld [vmem:[%s1384 + $0x18] sm:$0xf]
      %v1392 = vld [vmem:[%s1384 + $0x1c] sm:$0xf]
      %v1393 = vld [vmem:[%s1384 + $0x20] sm:$0xf]
      %v1394 = vld [vmem:[%s1384 + $0x24] sm:$0xf]
      %v1395 = vld [vmem:[%s1384 + $0x28] sm:$0xf]
      %v1396 = vld [vmem:[%s1384 + $0x2c] sm:$0xf]
      %v1397 = vld [vmem:[%s1384 + $0x30] sm:$0xf]
      %v1398 = vld [vmem:[%s1384 + $0x34] sm:$0xf]
      %v1399 = vld [vmem:[%s1384 + $0x38] sm:$0xf]
      %v1400 = vld [vmem:[%s1384 + $0x3c] sm:$0xf]
      %v1409 = vunpack.c.l.b16 %v1376
      %v1410 = vunpack.c.l.b16 %v1377
      %v1411 = vunpack.c.l.b16 %v1378
      %v1412 = vunpack.c.l.b16 %v1379
      %v1413 = vunpack.c.l.b16 %v1380
      %v1414 = vunpack.c.l.b16 %v1381
      %v1415 = vunpack.c.l.b16 %v1382
      %v1416 = vunpack.c.l.b16 %v1383
      %v1417 = vpack.c.b16 %v1410, %v1409
      %v1418 = vpack.c.b16 %v1412, %v1411
      %v1419 = vpack.c.b16 %v1414, %v1413
      %v1420 = vpack.c.b16 %v1416, %v1415
      %v1441 = vunpack.c.l.b16 %v1385
      %v1442 = vunpack.c.l.b16 %v1386
      %v1443 = vunpack.c.l.b16 %v1387
      %v1444 = vunpack.c.l.b16 %v1388
      %v1445 = vunpack.c.l.b16 %v1389
      %v1446 = vunpack.c.l.b16 %v1390
      %v1447 = vunpack.c.l.b16 %v1391
      %v1448 = vunpack.c.l.b16 %v1392
      %v1449 = vunpack.c.l.b16 %v1393
      %v1450 = vunpack.c.l.b16 %v1394
      %v1451 = vunpack.c.l.b16 %v1395
      %v1452 = vunpack.c.l.b16 %v1396
      %v1453 = vunpack.c.l.b16 %v1397
      %v1454 = vunpack.c.l.b16 %v1398
      %v1455 = vunpack.c.l.b16 %v1399
      %v1456 = vunpack.c.l.b16 %v1400
      %v1457 = vpack.c.b16 %v1442, %v1441
      %v1458 = vpack.c.b16 %v1444, %v1443
      %v1459 = vpack.c.b16 %v1446, %v1445
      %v1460 = vpack.c.b16 %v1448, %v1447
      %v1461 = vpack.c.b16 %v1450, %v1449
      %v1462 = vpack.c.b16 %v1452, %v1451
      %v1463 = vpack.c.b16 %v1454, %v1453
      %v1464 = vpack.c.b16 %v1456, %v1455
      %1473 = vmatpush.bf16.msra.mxu0 %v1464
      %1474 = vmatpush.bf16.msra.mxu0 %v1463
      %1475 = vmatpush.bf16.msra.mxu0 %v1462
      %1476 = vmatpush.bf16.msra.mxu0 %v1461
      %1477 = vmatpush.bf16.msra.mxu0 %v1460
      %1478 = vmatpush.bf16.msra.mxu0 %v1459
      %1479 = vmatpush.bf16.msra.mxu0 %v1458
      %1480 = vmatpush.bf16.msra.mxu0 %v1457
      %1481 = vmatmul.bf16.gmra.mxu0 %v1417
      %v1482 = vpop.f32.mrf.mxu0
      %v1483 = vadd.f32 0.0, %v1482
      %v1484 = vpop.f32.mrf.mxu0
      %v1485 = vadd.f32 0.0, %v1484
      %1486 = vmatmul.bf16.gmra.mxu0 %v1418
      %v1487 = vpop.f32.mrf.mxu0
      %v1488 = vadd.f32 0.0, %v1487
      %v1489 = vpop.f32.mrf.mxu0
      %v1490 = vadd.f32 0.0, %v1489
      %1491 = vmatmul.bf16.gmra.mxu0 %v1419
      %v1492 = vpop.f32.mrf.mxu0
      %v1493 = vadd.f32 0.0, %v1492
      %v1494 = vpop.f32.mrf.mxu0
      %v1495 = vadd.f32 0.0, %v1494
      %1496 = vmatmul.bf16.gmra.mxu0 %v1420
      %v1497 = vpop.f32.mrf.mxu0
      %v1498 = vadd.f32 0.0, %v1497
      %v1499 = vpop.f32.mrf.mxu0
      %v1500 = vadd.f32 0.0, %v1499
      %1501 = vdwg.mxu0
      %v1502 = vadd.f32 %v1367, %v1483
      %v1503 = vadd.f32 %v1368, %v1485
      %v1504 = vadd.f32 %v1369, %v1488
      %v1505 = vadd.f32 %v1370, %v1490
      %v1506 = vadd.f32 %v1371, %v1493
      %v1507 = vadd.f32 %v1372, %v1495
      %v1508 = vadd.f32 %v1373, %v1498
      %v1509 = vadd.f32 %v1374, %v1500
      %v1510 = vld [vmem:[%s295] sm:$0x1]
      %v1512 = vperm.slane %v1510, 0
      %v1514 = vadd.f32 %v1502, %v1512
      %v1515 = vadd.f32 %v1503, %v1512
      %v1516 = vadd.f32 %v1504, %v1512
      %v1517 = vadd.f32 %v1505, %v1512
      %v1518 = vadd.f32 %v1506, %v1512
      %v1519 = vadd.f32 %v1507, %v1512
      %v1520 = vadd.f32 %v1508, %v1512
      %v1521 = vadd.f32 %v1509, %v1512
      %v1522 = vmax.f32 %v1514, 0.0
      %v1523 = vmax.f32 %v1515, 0.0
      %v1524 = vmax.f32 %v1516, 0.0
      %v1525 = vmax.f32 %v1517, 0.0
      %v1526 = vmax.f32 %v1518, 0.0
      %v1527 = vmax.f32 %v1519, 0.0
      %v1528 = vmax.f32 %v1520, 0.0
      %v1529 = vmax.f32 %v1521, 0.0
      %v1530 = vld [vmem:[%s300] sm:$0xf]
      %v1531 = vld [vmem:[%s300 + $0x4] sm:$0xf]
      %v1532 = vld [vmem:[%s300 + $0x8] sm:$0xf]
      %v1533 = vld [vmem:[%s300 + $0xc] sm:$0xf]
      %v1534 = vld [vmem:[%s300 + $0x10] sm:$0xf]
      %v1535 = vld [vmem:[%s300 + $0x14] sm:$0xf]
      %v1536 = vld [vmem:[%s300 + $0x18] sm:$0xf]
      %v1537 = vld [vmem:[%s300 + $0x1c] sm:$0xf]
      %v1538 = vld [vmem:[%s304] sm:$0xf]
      %v1539 = vld [vmem:[%s304 + $0x4] sm:$0xf]
      %v1540 = vld [vmem:[%s304 + $0x8] sm:$0xf]
      %v1541 = vld [vmem:[%s304 + $0xc] sm:$0xf]
      %v1542 = vld [vmem:[%s304 + $0x10] sm:$0xf]
      %v1543 = vld [vmem:[%s304 + $0x14] sm:$0xf]
      %v1544 = vld [vmem:[%s304 + $0x18] sm:$0xf]
      %v1545 = vld [vmem:[%s304 + $0x1c] sm:$0xf]
      %v1546 = vld [vmem:[%s304 + $0x20] sm:$0xf]
      %v1547 = vld [vmem:[%s304 + $0x24] sm:$0xf]
      %v1548 = vld [vmem:[%s304 + $0x28] sm:$0xf]
      %v1549 = vld [vmem:[%s304 + $0x2c] sm:$0xf]
      %v1550 = vld [vmem:[%s304 + $0x30] sm:$0xf]
      %v1551 = vld [vmem:[%s304 + $0x34] sm:$0xf]
      %v1552 = vld [vmem:[%s304 + $0x38] sm:$0xf]
      %v1553 = vld [vmem:[%s304 + $0x3c] sm:$0xf]
      %v1562 = vunpack.c.l.b16 %v1530
      %v1563 = vunpack.c.l.b16 %v1531
      %v1564 = vunpack.c.l.b16 %v1532
      %v1565 = vunpack.c.l.b16 %v1533
      %v1566 = vunpack.c.l.b16 %v1534
      %v1567 = vunpack.c.l.b16 %v1535
      %v1568 = vunpack.c.l.b16 %v1536
      %v1569 = vunpack.c.l.b16 %v1537
      %v1570 = vpack.c.b16 %v1563, %v1562
      %v1571 = vpack.c.b16 %v1565, %v1564
      %v1572 = vpack.c.b16 %v1567, %v1566
      %v1573 = vpack.c.b16 %v1569, %v1568
      %v1594 = vunpack.c.l.b16 %v1538
      %v1595 = vunpack.c.l.b16 %v1539
      %v1596 = vunpack.c.l.b16 %v1540
      %v1597 = vunpack.c.l.b16 %v1541
      %v1598 = vunpack.c.l.b16 %v1542
      %v1599 = vunpack.c.l.b16 %v1543
      %v1600 = vunpack.c.l.b16 %v1544
      %v1601 = vunpack.c.l.b16 %v1545
      %v1602 = vunpack.c.l.b16 %v1546
      %v1603 = vunpack.c.l.b16 %v1547
      %v1604 = vunpack.c.l.b16 %v1548
      %v1605 = vunpack.c.l.b16 %v1549
      %v1606 = vunpack.c.l.b16 %v1550
      %v1607 = vunpack.c.l.b16 %v1551
      %v1608 = vunpack.c.l.b16 %v1552
      %v1609 = vunpack.c.l.b16 %v1553
      %v1610 = vpack.c.b16 %v1595, %v1594
      %v1611 = vpack.c.b16 %v1597, %v1596
      %v1612 = vpack.c.b16 %v1599, %v1598
      %v1613 = vpack.c.b16 %v1601, %v1600
      %v1614 = vpack.c.b16 %v1603, %v1602
      %v1615 = vpack.c.b16 %v1605, %v1604
      %v1616 = vpack.c.b16 %v1607, %v1606
      %v1617 = vpack.c.b16 %v1609, %v1608
      %1626 = vmatpush.bf16.msra.mxu0 %v1617
      %1627 = vmatpush.bf16.msra.mxu0 %v1616
      %1628 = vmatpush.bf16.msra.mxu0 %v1615
      %1629 = vmatpush.bf16.msra.mxu0 %v1614
      %1630 = vmatpush.bf16.msra.mxu0 %v1613
      %1631 = vmatpush.bf16.msra.mxu0 %v1612
      %1632 = vmatpush.bf16.msra.mxu0 %v1611
      %1633 = vmatpush.bf16.msra.mxu0 %v1610
      %1634 = vmatmul.bf16.gmra.mxu0 %v1570
      %v1635 = vpop.f32.mrf.mxu0
      %v1636 = vadd.f32 0.0, %v1635
      %v1637 = vpop.f32.mrf.mxu0
      %v1638 = vadd.f32 0.0, %v1637
      %1639 = vmatmul.bf16.gmra.mxu0 %v1571
      %v1640 = vpop.f32.mrf.mxu0
      %v1641 = vadd.f32 0.0, %v1640
      %v1642 = vpop.f32.mrf.mxu0
      %v1643 = vadd.f32 0.0, %v1642
      %1644 = vmatmul.bf16.gmra.mxu0 %v1572
      %v1645 = vpop.f32.mrf.mxu0
      %v1646 = vadd.f32 0.0, %v1645
      %v1647 = vpop.f32.mrf.mxu0
      %v1648 = vadd.f32 0.0, %v1647
      %1649 = vmatmul.bf16.gmra.mxu0 %v1573
      %v1650 = vpop.f32.mrf.mxu0
      %v1651 = vadd.f32 0.0, %v1650
      %v1652 = vpop.f32.mrf.mxu0
      %v1653 = vadd.f32 0.0, %v1652
      %1654 = vdwg.mxu0
      %v1655 = vadd.f32 %v1522, %v1636
      %v1656 = vadd.f32 %v1523, %v1638
      %v1657 = vadd.f32 %v1524, %v1641
      %v1658 = vadd.f32 %v1525, %v1643
      %v1659 = vadd.f32 %v1526, %v1646
      %v1660 = vadd.f32 %v1527, %v1648
      %v1661 = vadd.f32 %v1528, %v1651
      %v1662 = vadd.f32 %v1529, %v1653
      %v1663 = vmax.f32 %v1655, 0.0
      %v1664 = vmax.f32 %v1656, 0.0
      %v1665 = vmax.f32 %v1657, 0.0
      %v1666 = vmax.f32 %v1658, 0.0
      %v1667 = vmax.f32 %v1659, 0.0
      %v1668 = vmax.f32 %v1660, 0.0
      %v1669 = vmax.f32 %v1661, 0.0
      %v1670 = vmax.f32 %v1662, 0.0
      %v1671 = vpack.c.bf16 %v1663, %v1663
      %v1672 = vpack.c.bf16 %v1664, %v1664
      %v1673 = vpack.c.bf16 %v1665, %v1665
      %v1674 = vpack.c.bf16 %v1666, %v1666
      %v1675 = vpack.c.bf16 %v1667, %v1667
      %v1676 = vpack.c.bf16 %v1668, %v1668
      %v1677 = vpack.c.bf16 %v1669, %v1669
      %v1678 = vpack.c.bf16 %v1670, %v1670
      %1679 = vst [vmem:[%s312] sm:$0xf] %v1671
      %1680 = vst [vmem:[%s312 + $0x4] sm:$0xf] %v1672
      %1681 = vst [vmem:[%s312 + $0x8] sm:$0xf] %v1673
      %1682 = vst [vmem:[%s312 + $0xc] sm:$0xf] %v1674
      %1683 = vst [vmem:[%s312 + $0x10] sm:$0xf] %v1675
      %1684 = vst [vmem:[%s312 + $0x14] sm:$0xf] %v1676
      %1685 = vst [vmem:[%s312 + $0x18] sm:$0xf] %v1677
      %1686 = vst [vmem:[%s312 + $0x1c] sm:$0xf] %v1678
      %p1687 = scmp.lt.s32.totalorder %s21, 1
      %s1688 = scalar_select %p1687, %s21, 1
      %p1689 = scmp.lt.s32.totalorder %s20, 0
      %s1690 = scalar_select %p1689, %s20, 0
      %s1691 = smul.addr %s1688, 8
      %s1692 = sadd.s32 %s1690, %s1691
      %s1693 = smul.addr %s1692, 4
      %s1694 = scalar_lea.vmem %s5, %s1693
      // Predicated region
      $region41: #{resnet_layer_forward.5} parent=39 // pred_check
        %p1695 = pneg %p178
      $region42: #{resnet_layer_forward.5} parent=39 // pred_check_branch
        %1697 = sbr.rel (%p1695) target = $region44
      $region43: #{resnet_layer_forward.5} parent=39 // pred_region
        _
      $region44: #{resnet_layer_forward.5} parent=39 // pred_fallthru
        _
    $region40: #{resnet_layer_forward.5} parent=5 // pred_fallthru
      _
    %p1698 = scmp.le.s32.totalorder 2, %s11
    // Predicated region
    $region45: #{resnet_layer_forward.5} parent=5 // pred_check
      %p1699 = pneg %p1698
    $region46: #{resnet_layer_forward.5} parent=5 // pred_check_branch
      %1701 = sbr.rel (%p1699) target = $region48
    $region47: #{resnet_layer_forward.5} parent=5 // pred_region
      %s1702 = ssub.s32 %s11, 2
      // Predicated region
      $region49: #{resnet_layer_forward.5} parent=47 // pred_check
        %p1703 = pneg %p184
      $region50: #{resnet_layer_forward.5} parent=47 // pred_check_branch
        %1705 = sbr.rel (%p1703) target = $region52
      $region51: #{resnet_layer_forward.5} parent=47 // pred_region
        %p1706 = scmp.lt.s32.totalorder %s23, 1
        %s1707 = scalar_select %p1706, %s23, 1
        %p1708 = scmp.lt.s32.totalorder %s22, 0
        %s1709 = scalar_select %p1708, %s22, 0
        %s1710 = smul.addr %s1707, 8
        %s1711 = sadd.s32 %s1709, %s1710
        %s1712 = smul.addr %s1711, 4
        %s1713 = scalar_lea.vmem %s5, %s1712
      $region52: #{resnet_layer_forward.5} parent=47 // pred_fallthru
        _
    $region48: #{resnet_layer_forward.5} parent=5 // pred_fallthru
      _
  $region6: #{resnet_layer_forward.5} parent=0 // loop_footer
    %s15 = sadd.s32 1, %s11
  $region7: #{resnet_layer_forward.5} parent=0 // loop_footer_branch
    %10 = sbr.rel target = $region3
  $region8: #{resnet_layer_forward.5} parent=0 // loop_exit
    _

</llo_original>
